<compile_context>
chip_gen: v6e
topology: v6e:2x2x1
jax: 0.10.0
libtpu: 0.0.40
codegen_flags: <defaults>
</compile_context>

<pallas_src>
import math
import functools

import jax
import jax.numpy as jnp
from jax import lax
from jax.experimental import pallas as pl
from jax.experimental.pallas import tpu as pltpu


# --------------------------------------------------------------------------
# Kernel
# --------------------------------------------------------------------------
def _mha_kernel(q_ref, k_ref, v_ref,
                wq_ref, bq_ref, wk_ref, bk_ref, wv_ref, bv_ref, wo_ref, bo_ref,
                o_ref,
                kp_ref, vp_ref, acc_ref,
                *, heads_per_group, d_k, compute_dtype, approx_recip):
    n_g = wq_ref.shape[0]
    TQ = q_ref.shape[1]
    S = k_ref.shape[1]
    cd = compute_dtype

    # ---- K/V projections: once per batch element (qi == 0), cached in VMEM
    #      scratch that persists across the inner ("arbitrary") query axis. ---
    @pl.when(pl.program_id(1) == 0)
    def _project_kv():
        def proj_group(g, _=None):
            kp_ref[g] = (jnp.dot(k_ref[0], wk_ref[g],
                                 preferred_element_type=jnp.float32)
                         + bk_ref[g]).astype(cd)
            vp_ref[g] = (jnp.dot(v_ref[0], wv_ref[g],
                                 preferred_element_type=jnp.float32)
                         + bv_ref[g]).astype(cd)
            return 0
        if n_g == 1:
            proj_group(0)
        else:
            lax.fori_loop(0, n_g, proj_group, 0, unroll=2)

    # f32 VMEM accumulator for the W_o-projected output (no big vreg carry).
    acc_ref[...] = jnp.zeros_like(acc_ref)

    xq = q_ref[0]                                   # (TQ, D), compute dtype

    def attend_group(g, _=None):
        # Group-wide Q projection: (TQ, D) @ (D, G*d_k); 1/sqrt(d_k) is
        # pre-folded into wq/bq in the wrapper.
        qg = (jnp.dot(xq, wq_ref[g], preferred_element_type=jnp.float32)
              + bq_ref[g]).astype(cd)               # (TQ, G*d_k)
        kg = kp_ref.at[g]                           # Ref view (S, G*d_k)
        vg = vp_ref.at[g]

        ctx_parts = []
        for hi in range(heads_per_group):           # tiny static loop
            sl = slice(hi * d_k, (hi + 1) * d_k)
            # Q @ K^T without materializing a transpose (contract last dims).
            scores = lax.dot_general(
                qg[:, sl], kg[:, sl],
                dimension_numbers=(((1,), (1,)), ((), ())),
                preferred_element_type=jnp.float32)  # (TQ, S) f32
            m = jnp.max(scores, axis=-1, keepdims=True)
            e = jnp.exp(scores - m)
            inv = pl.reciprocal(jnp.sum(e, axis=-1, keepdims=True),
                                approx=approx_recip)
            ctx = jnp.dot(e.astype(cd), vg[:, sl],
                          preferred_element_type=jnp.float32) * inv
            ctx_parts.append(ctx.astype(cd))         # (TQ, d_k)

        ctx_g = (ctx_parts[0] if heads_per_group == 1
                 else jnp.concatenate(ctx_parts, axis=-1))   # (TQ, G*d_k)
        # W_o applied per group: K = G*d_k wide, accumulated in VMEM scratch.
        acc_ref[...] += jnp.dot(ctx_g, wo_ref[g],
                                preferred_element_type=jnp.float32)
        return 0

    if n_g == 1:
        attend_group(0)
    else:
        lax.fori_loop(0, n_g, attend_group, 0, unroll=2)

    o_ref[0] = (acc_ref[...] + bo_ref[...]).astype(o_ref.dtype)


# --------------------------------------------------------------------------
# Wrapper
# --------------------------------------------------------------------------
def _vmem_capacity_bytes():
    try:
        info = pltpu.get_tpu_info()
        cap = int(getattr(info, "vmem_capacity_bytes", 0) or 0)
        if cap > 0:
            return cap
    except Exception:
        pass
    return 64 * 1024 * 1024   # conservative default (v7x per-TensorCore VMEM)


def multi_head_attention(Q, K, V, params, num_heads, *, mask=None,
                         use_bf16_matmul=False, approx_reciprocal=False,
                         q_tile=256, group_width=256,
                         single_buffer_weights=True):
    """Forward pass of the PyTorch MultiHeadAttention module.

    Q, K, V: [B, S, D].  params: PyTorch-layout weights (out, in) / biases.
    """
    assert mask is None, "TODO(synk): attention mask path not implemented"
    B, S, D = Q.shape
    assert K.shape == (B, S, D) and V.shape == (B, S, D)
    assert D % num_heads == 0, "d_model must be divisible by num_heads"
    d_k = D // num_heads
    out_dtype = Q.dtype
    cd = jnp.bfloat16 if use_bf16_matmul else jnp.float32
    cd_bytes = jnp.dtype(cd).itemsize
    out_bytes = jnp.dtype(out_dtype).itemsize

    # ---- Head grouping: largest divisor G of H with G*d_k <= group_width. ----
    G = 1
    for cand in range(1, num_heads + 1):
        if num_heads % cand == 0 and cand * d_k <= max(group_width, d_k):
            G = cand
    n_g = num_heads // G
    GW = G * d_k

    # ---- Weight prep: PyTorch (out, in), y = x @ W.T + b.  Group-major
    #      layout (n_g, D, G*d_k); 1/sqrt(d_k) folded into wq / bq. ----
    scale = 1.0 / math.sqrt(d_k)

    def grouped_in(w):                    # (D_out, D_in) -> (n_g, D_in, GW)
        return jnp.asarray(w).T.reshape(D, n_g, GW).transpose(1, 0, 2)

    wq = (grouped_in(params["wq"]) * scale).astype(cd)
    wk = grouped_in(params["wk"]).astype(cd)
    wv = grouped_in(params["wv"]).astype(cd)
    wo = jnp.asarray(params["wo"]).T.reshape(n_g, GW, D).astype(cd)

    bq = (jnp.asarray(params["bq"]).reshape(n_g, 1, GW) * scale).astype(jnp.float32)
    bk = jnp.asarray(params["bk"]).reshape(n_g, 1, GW).astype(jnp.float32)
    bv = jnp.asarray(params["bv"]).reshape(n_g, 1, GW).astype(jnp.float32)
    bo = jnp.asarray(params["bo"]).reshape(1, D).astype(jnp.float32)

    # bf16 DMA: cast Q/K/V in the wrapper (halves K/V HBM->VMEM bytes).
    Qc = Q.astype(cd)
    Kc = K.astype(cd)
    Vc = V.astype(cd)

    # ---- Generation-aware VMEM budgeting and query-tile selection. ----
    budget = max(int(_vmem_capacity_bytes() * 0.9), 32 * 1024 * 1024)
    wdup = 1 if single_buffer_weights else 2

    def vmem_estimate(tq):
        need = 2 * (tq * D + 2 * S * D) * cd_bytes      # Q/K/V blocks (dbl buf)
        need += 2 * tq * D * out_bytes                  # output block
        need += wdup * 4 * D * D * cd_bytes             # projection weights
        need += wdup * 4 * D * 4                        # biases (f32)
        need += 2 * S * D * cd_bytes                    # projected K/V cache
        need += tq * D * 4                              # f32 output accumulator
        need += 2 * tq * S * 4 + tq * GW * 4            # live score/exp temps
        return int(need * 1.15)

    cands = [t for t in range(8, min(S, q_tile) + 1, 8) if S % t == 0]
    if not cands:
        cands = [S]     # TODO(synk): pad + mask ragged tail for odd small S
    TQ = cands[0]
    for t in cands:
        if vmem_estimate(t) <= budget:
            TQ = t
    n_q = S // TQ

    # ---- Advisory cost estimate (projections + attention, per batch). ----
    cost = pl.CostEstimate(
        flops=8 * B * S * D * D + 4 * B * S * S * D,
        transcendentals=B * num_heads * S * S,
        bytes_accessed=(3 * B * S * D) * cd_bytes + B * S * D * out_bytes
                       + 4 * D * D * cd_bytes + 4 * D * 4)

    kernel = functools.partial(_mha_kernel,
                               heads_per_group=G, d_k=d_k,
                               compute_dtype=cd, approx_recip=approx_reciprocal)

    def launch(weight_pipeline_mode):
        def const_spec(shape):
            idx = lambda b, qi, _n=len(shape): (0,) * _n
            if weight_pipeline_mode is None:
                return pl.BlockSpec(shape, idx)
            return pl.BlockSpec(shape, idx, pipeline_mode=weight_pipeline_mode)

        q_spec = pl.BlockSpec((1, TQ, D), lambda b, qi: (b, qi, 0))
        kv_spec = pl.BlockSpec((1, S, D), lambda b, qi: (b, 0, 0))
        o_spec = pl.BlockSpec((1, TQ, D), lambda b, qi: (b, qi, 0))

        return pl.pallas_call(
            kernel,
            out_shape=jax.ShapeDtypeStruct((B, S, D), out_dtype),
            grid_spec=pltpu.PrefetchScalarGridSpec(
                num_scalar_prefetch=0,
                grid=(B, n_q),
                in_specs=[q_spec, kv_spec, kv_spec,
                          const_spec((n_g, D, GW)), const_spec((n_g, 1, GW)),
                          const_spec((n_g, D, GW)), const_spec((n_g, 1, GW)),
                          const_spec((n_g, D, GW)), const_spec((n_g, 1, GW)),
                          const_spec((n_g, GW, D)), const_spec((1, D))],
                out_specs=o_spec,
                scratch_shapes=[pltpu.VMEM((n_g, S, GW), cd),     # proj K cache
                                pltpu.VMEM((n_g, S, GW), cd),     # proj V cache
                                pltpu.VMEM((TQ, D), jnp.float32)],  # out acc
            ),
            compiler_params=pltpu.CompilerParams(
                # qi axis must be sequential: qi==0 fills the K/V cache.
                dimension_semantics=("parallel", "arbitrary"),
                vmem_limit_bytes=budget),
            cost_estimate=cost,
        )(Qc, Kc, Vc, wq, bq, wk, bk, wv, bv, wo, bo)

    if single_buffer_weights:
        try:
            # Constant-index weight blocks never change -> single buffer them.
            return launch(pl.Buffered(1))
        except Exception:
            # pipeline_mode=Buffered(1) unsupported on this jax build:
            # fall back to default double-buffered weight blocks.
            pass
    return launch(None)


# --------------------------------------------------------------------------
# Pure-JAX reference mirroring the PyTorch forward (mask=None)
# --------------------------------------------------------------------------
def _reference(Q, K, V, params, num_heads):
    B, S, D = Q.shape
    d_k = D // num_heads

    def linear(x, w, b):
        return jnp.einsum("bsd,od->bso", x, w) + b

    def split(x):
        return x.reshape(B, S, num_heads, d_k).transpose(0, 2, 1, 3)

    Qh = split(linear(Q, params["wq"], params["bq"]))
    Kh = split(linear(K, params["wk"], params["bk"]))
    Vh = split(linear(V, params["wv"], params["bv"]))

    scores = jnp.einsum("bhqd,bhkd->bhqk", Qh, Kh) / math.sqrt(d_k)
    probs = jax.nn.softmax(scores, axis=-1)
    ctx = jnp.einsum("bhqk,bhkd->bhqd", probs, Vh)
    ctx = ctx.transpose(0, 2, 1, 3).reshape(B, S, D)
    return linear(ctx, params["wo"], params["bo"])


# --------------------------------------------------------------------------
# Self-test
# --------------------------------------------------------------------------
if __name__ == "__main__":
    def make_params(key, d_model):
        bound = 1.0 / math.sqrt(d_model)
        ks = jax.random.split(key, 8)
        uni = lambda k, shape: jax.random.uniform(k, shape, jnp.float32,
                                                  -bound, bound)
        return {
            "wq": uni(ks[0], (d_model, d_model)), "bq": uni(ks[1], (d_model,)),
            "wk": uni(ks[2], (d_model, d_model)), "bk": uni(ks[3], (d_model,)),
            "wv": uni(ks[4], (d_model, d_model)), "bv": uni(ks[5], (d_model,)),
            "wo": uni(ks[6], (d_model, d_model)), "bo": uni(ks[7], (d_model,)),
        }

    root = jax.random.PRNGKey(0)

    # --- Test 1: module-native precision (f32), small shapes. ---
    kp, kq, kk, kv, root = jax.random.split(root, 5)
    B, S, D, H = 2, 8, 32, 4
    params = make_params(kp, D)
    Q = jax.random.normal(kq, (B, S, D), jnp.float32)
    K = jax.random.normal(kk, (B, S, D), jnp.float32)
    V = jax.random.normal(kv, (B, S, D), jnp.float32)
    ref = _reference(Q, K, V, params, H)
    out = jax.block_until_ready(multi_head_attention(Q, K, V, params, H))
    assert out.shape == (B, S, D)
    assert jnp.allclose(out, ref, atol=1e-3, rtol=1e-3), "f32 mismatch"

    # --- Test 2: bf16 MXU operands + approx softmax reciprocal. ---
    out_bf16 = jax.block_until_ready(
        multi_head_attention(Q, K, V, params, H,
                             use_bf16_matmul=True, approx_reciprocal=True))
    assert jnp.allclose(out_bf16, ref, atol=5e-2, rtol=5e-2), "bf16 mismatch"

    # --- Test 3: multiple query tiles (cached K/V projections reused across
    #     qi > 0) and multiple head groups (n_g > 1 fori path). ---
    kp, kq, kk, kv, root = jax.random.split(root, 5)
    B, S, D, H = 2, 64, 128, 4
    params = make_params(kp, D)
    Q = jax.random.normal(kq, (B, S, D), jnp.float32)
    K = jax.random.normal(kk, (B, S, D), jnp.float32)
    V = jax.random.normal(kv, (B, S, D), jnp.float32)
    ref = _reference(Q, K, V, params, H)
    out = jax.block_until_ready(
        multi_head_attention(Q, K, V, params, H, q_tile=32, group_width=64))
    assert out.shape == (B, S, D)
    assert jnp.allclose(out, ref, atol=2e-3, rtol=2e-3), "tiled/grouped mismatch"

    print("KERNEL_OK")
</pallas_src>

<mosaic_0001>
module attributes {stable_mosaic.version = 11 : i64} {
  func.func @_mha_kernel(%arg0: i32, %arg1: i32, %arg2: memref<1x8x32xf32, #tpu.memory_space<vmem>>, %arg3: memref<1x8x32xf32, #tpu.memory_space<vmem>>, %arg4: memref<1x8x32xf32, #tpu.memory_space<vmem>>, %arg5: memref<1x32x32xf32, #tpu.memory_space<vmem>>, %arg6: memref<1x1x32xf32, #tpu.memory_space<vmem>>, %arg7: memref<1x32x32xf32, #tpu.memory_space<vmem>>, %arg8: memref<1x1x32xf32, #tpu.memory_space<vmem>>, %arg9: memref<1x32x32xf32, #tpu.memory_space<vmem>>, %arg10: memref<1x1x32xf32, #tpu.memory_space<vmem>>, %arg11: memref<1x32x32xf32, #tpu.memory_space<vmem>>, %arg12: memref<1x32xf32, #tpu.memory_space<vmem>>, %arg13: memref<1x8x32xf32, #tpu.memory_space<vmem>>, %arg14: memref<1x8x32xf32, #tpu.memory_space<vmem>>, %arg15: memref<1x8x32xf32, #tpu.memory_space<vmem>>, %arg16: memref<8x32xf32, #tpu.memory_space<vmem>>) attributes {dimension_semantics = [#tpu.dimension_semantics<parallel>, #tpu.dimension_semantics<arbitrary>], iteration_bounds = array<i64: 2, 1>, scalar_prefetch = 0 : i64, scratch_operands = 3 : i64, tpu.core_type = #tpu.core_type<tc>, window_params = [{transform_indices = @transform_0, window_bounds = array<i64: 1, 8, 32>}, {transform_indices = @transform_1, window_bounds = array<i64: 1, 8, 32>}, {transform_indices = @transform_2, window_bounds = array<i64: 1, 8, 32>}, {pipeline_mode = #tpu.pipeline_mode<synchronous>, transform_indices = @transform_3, window_bounds = array<i64: 1, 32, 32>}, {pipeline_mode = #tpu.pipeline_mode<synchronous>, transform_indices = @transform_4, window_bounds = array<i64: 1, 1, 32>}, {pipeline_mode = #tpu.pipeline_mode<synchronous>, transform_indices = @transform_5, window_bounds = array<i64: 1, 32, 32>}, {pipeline_mode = #tpu.pipeline_mode<synchronous>, transform_indices = @transform_6, window_bounds = array<i64: 1, 1, 32>}, {pipeline_mode = #tpu.pipeline_mode<synchronous>, transform_indices = @transform_7, window_bounds = array<i64: 1, 32, 32>}, {pipeline_mode = #tpu.pipeline_mode<synchronous>, transform_indices = @transform_8, window_bounds = array<i64: 1, 1, 32>}, {pipeline_mode = #tpu.pipeline_mode<synchronous>, transform_indices = @transform_9, window_bounds = array<i64: 1, 32, 32>}, {pipeline_mode = #tpu.pipeline_mode<synchronous>, transform_indices = @transform_10, window_bounds = array<i64: 1, 32>}, {transform_indices = @transform_11, window_bounds = array<i64: 1, 8, 32>}]} {
    %c0_i32 = arith.constant 0 : i32
    %0 = arith.cmpi eq, %arg1, %c0_i32 : i32
    %1 = arith.extui %0 : i1 to i32
    %c0_i32_0 = arith.constant 0 : i32
    %2 = arith.cmpi ne, %1, %c0_i32_0 : i32
    scf.if %2 {
      %c0_80 = arith.constant 0 : index
      %c0_81 = arith.constant 0 : index
      %c0_82 = arith.constant 0 : index
      %104 = vector.load %arg3[%c0_80, %c0_81, %c0_82] : memref<1x8x32xf32, #tpu.memory_space<vmem>>, vector<1x8x32xf32>
      %105 = vector.shape_cast %104 : vector<1x8x32xf32> to vector<8x32xf32>
      %c0_83 = arith.constant 0 : index
      %c0_84 = arith.constant 0 : index
      %c0_85 = arith.constant 0 : index
      %106 = vector.load %arg7[%c0_83, %c0_84, %c0_85] : memref<1x32x32xf32, #tpu.memory_space<vmem>>, vector<1x32x32xf32>
      %107 = vector.shape_cast %106 : vector<1x32x32xf32> to vector<32x32xf32>
      %cst_86 = arith.constant dense<0.000000e+00> : vector<8x32xf32>
      %108 = tpu.matmul %105, %107, %cst_86 {dimension_numbers = #tpu.dot_dimension_numbers<[1], [0], [0], [1], [0, 0, 1, 1], [], []>} : vector<8x32xf32>, vector<32x32xf32>, vector<8x32xf32> -> vector<8x32xf32>
      %c0_87 = arith.constant 0 : index
      %c0_88 = arith.constant 0 : index
      %c0_89 = arith.constant 0 : index
      %109 = vector.load %arg8[%c0_87, %c0_88, %c0_89] : memref<1x1x32xf32, #tpu.memory_space<vmem>>, vector<1x1x32xf32>
      %110 = vector.shape_cast %109 : vector<1x1x32xf32> to vector<1x32xf32>
      %111 = vector.broadcast %110 : vector<1x32xf32> to vector<8x32xf32>
      %112 = arith.addf %108, %111 : vector<8x32xf32>
      %c0_90 = arith.constant 0 : index
      %c0_91 = arith.constant 0 : index
      %c0_92 = arith.constant 0 : index
      %113 = vector.load %arg14[%c0_90, %c0_91, %c0_92] : memref<1x8x32xf32, #tpu.memory_space<vmem>>, vector<1x8x32xf32>
      %114 = vector.shape_cast %113 : vector<1x8x32xf32> to vector<8x32xf32>
      %115 = vector.shape_cast %112 : vector<8x32xf32> to vector<1x8x32xf32>
      tpu.vector_store %arg14[%c0_90, %c0_91, %c0_92], %115 {strides = array<i32>} : memref<1x8x32xf32, #tpu.memory_space<vmem>>, vector<1x8x32xf32>,
      %c0_93 = arith.constant 0 : index
      %c0_94 = arith.constant 0 : index
      %c0_95 = arith.constant 0 : index
      %116 = vector.load %arg4[%c0_93, %c0_94, %c0_95] : memref<1x8x32xf32, #tpu.memory_space<vmem>>, vector<1x8x32xf32>
      %117 = vector.shape_cast %116 : vector<1x8x32xf32> to vector<8x32xf32>
      %c0_96 = arith.constant 0 : index
      %c0_97 = arith.constant 0 : index
      %c0_98 = arith.constant 0 : index
      %118 = vector.load %arg9[%c0_96, %c0_97, %c0_98] : memref<1x32x32xf32, #tpu.memory_space<vmem>>, vector<1x32x32xf32>
      %119 = vector.shape_cast %118 : vector<1x32x32xf32> to vector<32x32xf32>
      %cst_99 = arith.constant dense<0.000000e+00> : vector<8x32xf32>
      %120 = tpu.matmul %117, %119, %cst_99 {dimension_numbers = #tpu.dot_dimension_numbers<[1], [0], [0], [1], [0, 0, 1, 1], [], []>} : vector<8x32xf32>, vector<32x32xf32>, vector<8x32xf32> -> vector<8x32xf32>
      %c0_100 = arith.constant 0 : index
      %c0_101 = arith.constant 0 : index
      %c0_102 = arith.constant 0 : index
      %121 = vector.load %arg10[%c0_100, %c0_101, %c0_102] : memref<1x1x32xf32, #tpu.memory_space<vmem>>, vector<1x1x32xf32>
      %122 = vector.shape_cast %121 : vector<1x1x32xf32> to vector<1x32xf32>
      %123 = vector.broadcast %122 : vector<1x32xf32> to vector<8x32xf32>
      %124 = arith.addf %120, %123 : vector<8x32xf32>
      %c0_103 = arith.constant 0 : index
      %c0_104 = arith.constant 0 : index
      %c0_105 = arith.constant 0 : index
      %125 = vector.load %arg15[%c0_103, %c0_104, %c0_105] : memref<1x8x32xf32, #tpu.memory_space<vmem>>, vector<1x8x32xf32>
      %126 = vector.shape_cast %125 : vector<1x8x32xf32> to vector<8x32xf32>
      %127 = vector.shape_cast %124 : vector<8x32xf32> to vector<1x8x32xf32>
      tpu.vector_store %arg15[%c0_103, %c0_104, %c0_105], %127 {strides = array<i32>} : memref<1x8x32xf32, #tpu.memory_space<vmem>>, vector<1x8x32xf32>,
    } else {
    }
    %cst = arith.constant 0.000000e+00 : f32
    %3 = vector.broadcast %cst : f32 to vector<8x32xf32>
    %c0 = arith.constant 0 : index
    %c0_1 = arith.constant 0 : index
    %4 = vector.load %arg16[%c0, %c0_1] : memref<8x32xf32, #tpu.memory_space<vmem>>, vector<8x32xf32>
    tpu.vector_store %arg16[%c0, %c0_1], %3 {strides = array<i32>} : memref<8x32xf32, #tpu.memory_space<vmem>>, vector<8x32xf32>,
    %c0_2 = arith.constant 0 : index
    %c0_3 = arith.constant 0 : index
    %c0_4 = arith.constant 0 : index
    %5 = vector.load %arg2[%c0_2, %c0_3, %c0_4] : memref<1x8x32xf32, #tpu.memory_space<vmem>>, vector<1x8x32xf32>
    %6 = vector.shape_cast %5 : vector<1x8x32xf32> to vector<8x32xf32>
    %c0_5 = arith.constant 0 : index
    %c0_6 = arith.constant 0 : index
    %c0_7 = arith.constant 0 : index
    %7 = vector.load %arg5[%c0_5, %c0_6, %c0_7] : memref<1x32x32xf32, #tpu.memory_space<vmem>>, vector<1x32x32xf32>
    %8 = vector.shape_cast %7 : vector<1x32x32xf32> to vector<32x32xf32>
    %cst_8 = arith.constant dense<0.000000e+00> : vector<8x32xf32>
    %9 = tpu.matmul %6, %8, %cst_8 {dimension_numbers = #tpu.dot_dimension_numbers<[1], [0], [0], [1], [0, 0, 1, 1], [], []>} : vector<8x32xf32>, vector<32x32xf32>, vector<8x32xf32> -> vector<8x32xf32>
    %c0_9 = arith.constant 0 : index
    %c0_10 = arith.constant 0 : index
    %c0_11 = arith.constant 0 : index
    %10 = vector.load %arg6[%c0_9, %c0_10, %c0_11] : memref<1x1x32xf32, #tpu.memory_space<vmem>>, vector<1x1x32xf32>
    %11 = vector.shape_cast %10 : vector<1x1x32xf32> to vector<1x32xf32>
    %12 = vector.broadcast %11 : vector<1x32xf32> to vector<8x32xf32>
    %13 = arith.addf %9, %12 : vector<8x32xf32>
    %14 = vector.extract_strided_slice %13 {offsets = [0, 0], sizes = [8, 8], strides = [1, 1]} : vector<8x32xf32> to vector<8x8xf32>
    %c0_i32_12 = arith.constant 0 : i32
    %c0_i32_13 = arith.constant 0 : i32
    %c0_i32_14 = arith.constant 0 : i32
    %15 = tpu.memref_slice %arg14[%c0_i32_12, %c0_i32_13, %c0_i32_14] : memref<1x8x32xf32, #tpu.memory_space<vmem>> -> memref<1x8x32xf32, #tpu.memory_space<vmem>>
    %16 = tpu.memref_squeeze %15 : memref<1x8x32xf32, #tpu.memory_space<vmem>> -> memref<8x32xf32, #tpu.memory_space<vmem>>
    %c0_15 = arith.constant 0 : index
    %c0_16 = arith.constant 0 : index
    %17 = vector.load %16[%c0_15, %c0_16] : memref<8x32xf32, #tpu.memory_space<vmem>>, vector<8x8xf32>
    %cst_17 = arith.constant dense<0.000000e+00> : vector<8x8xf32>
    %18 = tpu.matmul %14, %17, %cst_17 {dimension_numbers = #tpu.dot_dimension_numbers<[1], [1], [0], [0], [0, 0, 1, 0], [], []>} : vector<8x8xf32>, vector<8x8xf32>, vector<8x8xf32> -> vector<8x8xf32>
    %cst_18 = arith.constant dense<0xFF800000> : vector<8xf32>
    %19 = vector.multi_reduction <maximumf>, %18, %cst_18 [1] : vector<8x8xf32> to vector<8xf32>
    %20 = vector.shape_cast %19 : vector<8xf32> to vector<8x1xf32>
    %21 = vector.broadcast %20 : vector<8x1xf32> to vector<8x8xf32>
    %22 = arith.subf %18, %21 : vector<8x8xf32>
    %23 = math.exp %22 : vector<8x8xf32>
    %cst_19 = arith.constant dense<0.000000e+00> : vector<8xf32>
    %24 = vector.multi_reduction <add>, %23, %cst_19 [1] : vector<8x8xf32> to vector<8xf32>
    %25 = vector.shape_cast %24 : vector<8xf32> to vector<8x1xf32>
    %26 = tpu.reciprocal %25 : vector<8x1xf32> -> vector<8x1xf32>
    %c0_i32_20 = arith.constant 0 : i32
    %c0_i32_21 = arith.constant 0 : i32
    %c0_i32_22 = arith.constant 0 : i32
    %27 = tpu.memref_slice %arg15[%c0_i32_20, %c0_i32_21, %c0_i32_22] : memref<1x8x32xf32, #tpu.memory_space<vmem>> -> memref<1x8x32xf32, #tpu.memory_space<vmem>>
    %28 = tpu.memref_squeeze %27 : memref<1x8x32xf32, #tpu.memory_space<vmem>> -> memref<8x32xf32, #tpu.memory_space<vmem>>
    %c0_23 = arith.constant 0 : index
    %c0_24 = arith.constant 0 : index
    %29 = vector.load %28[%c0_23, %c0_24] : memref<8x32xf32, #tpu.memory_space<vmem>>, vector<8x8xf32>
    %cst_25 = arith.constant dense<0.000000e+00> : vector<8x8xf32>
    %30 = tpu.matmul %23, %29, %cst_25 {dimension_numbers = #tpu.dot_dimension_numbers<[1], [0], [0], [1], [0, 0, 1, 1], [], []>} : vector<8x8xf32>, vector<8x8xf32>, vector<8x8xf32> -> vector<8x8xf32>
    %31 = vector.broadcast %26 : vector<8x1xf32> to vector<8x8xf32>
    %32 = arith.mulf %30, %31 : vector<8x8xf32>
    %33 = vector.extract_strided_slice %13 {offsets = [0, 8], sizes = [8, 8], strides = [1, 1]} : vector<8x32xf32> to vector<8x8xf32>
    %c0_i32_26 = arith.constant 0 : i32
    %c0_i32_27 = arith.constant 0 : i32
    %c0_i32_28 = arith.constant 0 : i32
    %34 = tpu.memref_slice %arg14[%c0_i32_26, %c0_i32_27, %c0_i32_28] : memref<1x8x32xf32, #tpu.memory_space<vmem>> -> memref<1x8x32xf32, #tpu.memory_space<vmem>>
    %35 = tpu.memref_squeeze %34 : memref<1x8x32xf32, #tpu.memory_space<vmem>> -> memref<8x32xf32, #tpu.memory_space<vmem>>
    %c0_29 = arith.constant 0 : index
    %c8 = arith.constant 8 : index
    %36 = vector.load %35[%c0_29, %c8] : memref<8x32xf32, #tpu.memory_space<vmem>>, vector<8x8xf32>
    %cst_30 = arith.constant dense<0.000000e+00> : vector<8x8xf32>
    %37 = tpu.matmul %33, %36, %cst_30 {dimension_numbers = #tpu.dot_dimension_numbers<[1], [1], [0], [0], [0, 0, 1, 0], [], []>} : vector<8x8xf32>, vector<8x8xf32>, vector<8x8xf32> -> vector<8x8xf32>
    %cst_31 = arith.constant dense<0xFF800000> : vector<8xf32>
    %38 = vector.multi_reduction <maximumf>, %37, %cst_31 [1] : vector<8x8xf32> to vector<8xf32>
    %39 = vector.shape_cast %38 : vector<8xf32> to vector<8x1xf32>
    %40 = vector.broadcast %39 : vector<8x1xf32> to vector<8x8xf32>
    %41 = arith.subf %37, %40 : vector<8x8xf32>
    %42 = math.exp %41 : vector<8x8xf32>
    %cst_32 = arith.constant dense<0.000000e+00> : vector<8xf32>
    %43 = vector.multi_reduction <add>, %42, %cst_32 [1] : vector<8x8xf32> to vector<8xf32>
    %44 = vector.shape_cast %43 : vector<8xf32> to vector<8x1xf32>
    %45 = tpu.reciprocal %44 : vector<8x1xf32> -> vector<8x1xf32>
    %c0_i32_33 = arith.constant 0 : i32
    %c0_i32_34 = arith.constant 0 : i32
    %c0_i32_35 = arith.constant 0 : i32
    %46 = tpu.memref_slice %arg15[%c0_i32_33, %c0_i32_34, %c0_i32_35] : memref<1x8x32xf32, #tpu.memory_space<vmem>> -> memref<1x8x32xf32, #tpu.memory_space<vmem>>
    %47 = tpu.memref_squeeze %46 : memref<1x8x32xf32, #tpu.memory_space<vmem>> -> memref<8x32xf32, #tpu.memory_space<vmem>>
    %c0_36 = arith.constant 0 : index
    %c8_37 = arith.constant 8 : index
    %48 = vector.load %47[%c0_36, %c8_37] : memref<8x32xf32, #tpu.memory_space<vmem>>, vector<8x8xf32>
    %cst_38 = arith.constant dense<0.000000e+00> : vector<8x8xf32>
    %49 = tpu.matmul %42, %48, %cst_38 {dimension_numbers = #tpu.dot_dimension_numbers<[1], [0], [0], [1], [0, 0, 1, 1], [], []>} : vector<8x8xf32>, vector<8x8xf32>, vector<8x8xf32> -> vector<8x8xf32>
    %50 = vector.broadcast %45 : vector<8x1xf32> to vector<8x8xf32>
    %51 = arith.mulf %49, %50 : vector<8x8xf32>
    %52 = vector.extract_strided_slice %13 {offsets = [0, 16], sizes = [8, 8], strides = [1, 1]} : vector<8x32xf32> to vector<8x8xf32>
    %c0_i32_39 = arith.constant 0 : i32
    %c0_i32_40 = arith.constant 0 : i32
    %c0_i32_41 = arith.constant 0 : i32
    %53 = tpu.memref_slice %arg14[%c0_i32_39, %c0_i32_40, %c0_i32_41] : memref<1x8x32xf32, #tpu.memory_space<vmem>> -> memref<1x8x32xf32, #tpu.memory_space<vmem>>
    %54 = tpu.memref_squeeze %53 : memref<1x8x32xf32, #tpu.memory_space<vmem>> -> memref<8x32xf32, #tpu.memory_space<vmem>>
    %c0_42 = arith.constant 0 : index
    %c16 = arith.constant 16 : index
    %55 = vector.load %54[%c0_42, %c16] : memref<8x32xf32, #tpu.memory_space<vmem>>, vector<8x8xf32>
    %cst_43 = arith.constant dense<0.000000e+00> : vector<8x8xf32>
    %56 = tpu.matmul %52, %55, %cst_43 {dimension_numbers = #tpu.dot_dimension_numbers<[1], [1], [0], [0], [0, 0, 1, 0], [], []>} : vector<8x8xf32>, vector<8x8xf32>, vector<8x8xf32> -> vector<8x8xf32>
    %cst_44 = arith.constant dense<0xFF800000> : vector<8xf32>
    %57 = vector.multi_reduction <maximumf>, %56, %cst_44 [1] : vector<8x8xf32> to vector<8xf32>
    %58 = vector.shape_cast %57 : vector<8xf32> to vector<8x1xf32>
    %59 = vector.broadcast %58 : vector<8x1xf32> to vector<8x8xf32>
    %60 = arith.subf %56, %59 : vector<8x8xf32>
    %61 = math.exp %60 : vector<8x8xf32>
    %cst_45 = arith.constant dense<0.000000e+00> : vector<8xf32>
    %62 = vector.multi_reduction <add>, %61, %cst_45 [1] : vector<8x8xf32> to vector<8xf32>
    %63 = vector.shape_cast %62 : vector<8xf32> to vector<8x1xf32>
    %64 = tpu.reciprocal %63 : vector<8x1xf32> -> vector<8x1xf32>
    %c0_i32_46 = arith.constant 0 : i32
    %c0_i32_47 = arith.constant 0 : i32
    %c0_i32_48 = arith.constant 0 : i32
    %65 = tpu.memref_slice %arg15[%c0_i32_46, %c0_i32_47, %c0_i32_48] : memref<1x8x32xf32, #tpu.memory_space<vmem>> -> memref<1x8x32xf32, #tpu.memory_space<vmem>>
    %66 = tpu.memref_squeeze %65 : memref<1x8x32xf32, #tpu.memory_space<vmem>> -> memref<8x32xf32, #tpu.memory_space<vmem>>
    %c0_49 = arith.constant 0 : index
    %c16_50 = arith.constant 16 : index
    %67 = vector.load %66[%c0_49, %c16_50] : memref<8x32xf32, #tpu.memory_space<vmem>>, vector<8x8xf32>
    %cst_51 = arith.constant dense<0.000000e+00> : vector<8x8xf32>
    %68 = tpu.matmul %61, %67, %cst_51 {dimension_numbers = #tpu.dot_dimension_numbers<[1], [0], [0], [1], [0, 0, 1, 1], [], []>} : vector<8x8xf32>, vector<8x8xf32>, vector<8x8xf32> -> vector<8x8xf32>
    %69 = vector.broadcast %64 : vector<8x1xf32> to vector<8x8xf32>
    %70 = arith.mulf %68, %69 : vector<8x8xf32>
    %71 = vector.extract_strided_slice %13 {offsets = [0, 24], sizes = [8, 8], strides = [1, 1]} : vector<8x32xf32> to vector<8x8xf32>
    %c0_i32_52 = arith.constant 0 : i32
    %c0_i32_53 = arith.constant 0 : i32
    %c0_i32_54 = arith.constant 0 : i32
    %72 = tpu.memref_slice %arg14[%c0_i32_52, %c0_i32_53, %c0_i32_54] : memref<1x8x32xf32, #tpu.memory_space<vmem>> -> memref<1x8x32xf32, #tpu.memory_space<vmem>>
    %73 = tpu.memref_squeeze %72 : memref<1x8x32xf32, #tpu.memory_space<vmem>> -> memref<8x32xf32, #tpu.memory_space<vmem>>
    %c0_55 = arith.constant 0 : index
    %c24 = arith.constant 24 : index
    %74 = vector.load %73[%c0_55, %c24] : memref<8x32xf32, #tpu.memory_space<vmem>>, vector<8x8xf32>
    %cst_56 = arith.constant dense<0.000000e+00> : vector<8x8xf32>
    %75 = tpu.matmul %71, %74, %cst_56 {dimension_numbers = #tpu.dot_dimension_numbers<[1], [1], [0], [0], [0, 0, 1, 0], [], []>} : vector<8x8xf32>, vector<8x8xf32>, vector<8x8xf32> -> vector<8x8xf32>
    %cst_57 = arith.constant dense<0xFF800000> : vector<8xf32>
    %76 = vector.multi_reduction <maximumf>, %75, %cst_57 [1] : vector<8x8xf32> to vector<8xf32>
    %77 = vector.shape_cast %76 : vector<8xf32> to vector<8x1xf32>
    %78 = vector.broadcast %77 : vector<8x1xf32> to vector<8x8xf32>
    %79 = arith.subf %75, %78 : vector<8x8xf32>
    %80 = math.exp %79 : vector<8x8xf32>
    %cst_58 = arith.constant dense<0.000000e+00> : vector<8xf32>
    %81 = vector.multi_reduction <add>, %80, %cst_58 [1] : vector<8x8xf32> to vector<8xf32>
    %82 = vector.shape_cast %81 : vector<8xf32> to vector<8x1xf32>
    %83 = tpu.reciprocal %82 : vector<8x1xf32> -> vector<8x1xf32>
    %c0_i32_59 = arith.constant 0 : i32
    %c0_i32_60 = arith.constant 0 : i32
    %c0_i32_61 = arith.constant 0 : i32
    %84 = tpu.memref_slice %arg15[%c0_i32_59, %c0_i32_60, %c0_i32_61] : memref<1x8x32xf32, #tpu.memory_space<vmem>> -> memref<1x8x32xf32, #tpu.memory_space<vmem>>
    %85 = tpu.memref_squeeze %84 : memref<1x8x32xf32, #tpu.memory_space<vmem>> -> memref<8x32xf32, #tpu.memory_space<vmem>>
    %c0_62 = arith.constant 0 : index
    %c24_63 = arith.constant 24 : index
    %86 = vector.load %85[%c0_62, %c24_63] : memref<8x32xf32, #tpu.memory_space<vmem>>, vector<8x8xf32>
    %cst_64 = arith.constant dense<0.000000e+00> : vector<8x8xf32>
    %87 = tpu.matmul %80, %86, %cst_64 {dimension_numbers = #tpu.dot_dimension_numbers<[1], [0], [0], [1], [0, 0, 1, 1], [], []>} : vector<8x8xf32>, vector<8x8xf32>, vector<8x8xf32> -> vector<8x8xf32>
    %88 = vector.broadcast %83 : vector<8x1xf32> to vector<8x8xf32>
    %89 = arith.mulf %87, %88 : vector<8x8xf32>
    %90 = tpu.concatenate %32, %51, %70, %89 in 1 : vector<8x8xf32>, vector<8x8xf32>, vector<8x8xf32>, vector<8x8xf32> -> vector<8x32xf32>
    %c0_65 = arith.constant 0 : index
    %c0_66 = arith.constant 0 : index
    %91 = vector.load %arg16[%c0_65, %c0_66] : memref<8x32xf32, #tpu.memory_space<vmem>>, vector<8x32xf32>
    %c0_67 = arith.constant 0 : index
    %c0_68 = arith.constant 0 : index
    %c0_69 = arith.constant 0 : index
    %92 = vector.load %arg11[%c0_67, %c0_68, %c0_69] : memref<1x32x32xf32, #tpu.memory_space<vmem>>, vector<1x32x32xf32>
    %93 = vector.shape_cast %92 : vector<1x32x32xf32> to vector<32x32xf32>
    %cst_70 = arith.constant dense<0.000000e+00> : vector<8x32xf32>
    %94 = tpu.matmul %90, %93, %cst_70 {dimension_numbers = #tpu.dot_dimension_numbers<[1], [0], [0], [1], [0, 0, 1, 1], [], []>} : vector<8x32xf32>, vector<32x32xf32>, vector<8x32xf32> -> vector<8x32xf32>
    %95 = arith.addf %91, %94 : vector<8x32xf32>
    %c0_71 = arith.constant 0 : index
    %c0_72 = arith.constant 0 : index
    %96 = vector.load %arg16[%c0_71, %c0_72] : memref<8x32xf32, #tpu.memory_space<vmem>>, vector<8x32xf32>
    tpu.vector_store %arg16[%c0_71, %c0_72], %95 {strides = array<i32>} : memref<8x32xf32, #tpu.memory_space<vmem>>, vector<8x32xf32>,
    %c0_73 = arith.constant 0 : index
    %c0_74 = arith.constant 0 : index
    %97 = vector.load %arg16[%c0_73, %c0_74] : memref<8x32xf32, #tpu.memory_space<vmem>>, vector<8x32xf32>
    %c0_75 = arith.constant 0 : index
    %c0_76 = arith.constant 0 : index
    %98 = vector.load %arg12[%c0_75, %c0_76] : memref<1x32xf32, #tpu.memory_space<vmem>>, vector<1x32xf32>
    %99 = vector.broadcast %98 : vector<1x32xf32> to vector<8x32xf32>
    %100 = arith.addf %97, %99 : vector<8x32xf32>
    %c0_77 = arith.constant 0 : index
    %c0_78 = arith.constant 0 : index
    %c0_79 = arith.constant 0 : index
    %101 = vector.load %arg13[%c0_77, %c0_78, %c0_79] : memref<1x8x32xf32, #tpu.memory_space<vmem>>, vector<1x8x32xf32>
    %102 = vector.shape_cast %101 : vector<1x8x32xf32> to vector<8x32xf32>
    %103 = vector.shape_cast %100 : vector<8x32xf32> to vector<1x8x32xf32>
    tpu.vector_store %arg13[%c0_77, %c0_78, %c0_79], %103 {strides = array<i32>} : memref<1x8x32xf32, #tpu.memory_space<vmem>>, vector<1x8x32xf32>,
    return
  }
  func.func @transform_0(%arg0: i32, %arg1: i32) -> (i32, i32, i32) {
    %c0_i32 = arith.constant 0 : i32
    %c0_i32_0 = arith.constant 0 : i32
    return %arg0, %arg1, %c0_i32 : i32, i32, i32
  }
  func.func @transform_1(%arg0: i32, %arg1: i32) -> (i32, i32, i32) {
    %c0_i32 = arith.constant 0 : i32
    %c0_i32_0 = arith.constant 0 : i32
    %c0_i32_1 = arith.constant 0 : i32
    return %arg0, %c0_i32, %c0_i32_0 : i32, i32, i32
  }
  func.func @transform_2(%arg0: i32, %arg1: i32) -> (i32, i32, i32) {
    %c0_i32 = arith.constant 0 : i32
    %c0_i32_0 = arith.constant 0 : i32
    %c0_i32_1 = arith.constant 0 : i32
    return %arg0, %c0_i32, %c0_i32_0 : i32, i32, i32
  }
  func.func @transform_3(%arg0: i32, %arg1: i32) -> (i32, i32, i32) {
    %c0_i32 = arith.constant 0 : i32
    %c0_i32_0 = arith.constant 0 : i32
    %c0_i32_1 = arith.constant 0 : i32
    %c0_i32_2 = arith.constant 0 : i32
    return %c0_i32, %c0_i32_0, %c0_i32_1 : i32, i32, i32
  }
  func.func @transform_4(%arg0: i32, %arg1: i32) -> (i32, i32, i32) {
    %c0_i32 = arith.constant 0 : i32
    %c0_i32_0 = arith.constant 0 : i32
    %c0_i32_1 = arith.constant 0 : i32
    %c0_i32_2 = arith.constant 0 : i32
    return %c0_i32, %c0_i32_0, %c0_i32_1 : i32, i32, i32
  }
  func.func @transform_5(%arg0: i32, %arg1: i32) -> (i32, i32, i32) {
    %c0_i32 = arith.constant 0 : i32
    %c0_i32_0 = arith.constant 0 : i32
    %c0_i32_1 = arith.constant 0 : i32
    %c0_i32_2 = arith.constant 0 : i32
    return %c0_i32, %c0_i32_0, %c0_i32_1 : i32, i32, i32
  }
  func.func @transform_6(%arg0: i32, %arg1: i32) -> (i32, i32, i32) {
    %c0_i32 = arith.constant 0 : i32
    %c0_i32_0 = arith.constant 0 : i32
    %c0_i32_1 = arith.constant 0 : i32
    %c0_i32_2 = arith.constant 0 : i32
    return %c0_i32, %c0_i32_0, %c0_i32_1 : i32, i32, i32
  }
  func.func @transform_7(%arg0: i32, %arg1: i32) -> (i32, i32, i32) {
    %c0_i32 = arith.constant 0 : i32
    %c0_i32_0 = arith.constant 0 : i32
    %c0_i32_1 = arith.constant 0 : i32
    %c0_i32_2 = arith.constant 0 : i32
    return %c0_i32, %c0_i32_0, %c0_i32_1 : i32, i32, i32
  }
  func.func @transform_8(%arg0: i32, %arg1: i32) -> (i32, i32, i32) {
    %c0_i32 = arith.constant 0 : i32
    %c0_i32_0 = arith.constant 0 : i32
    %c0_i32_1 = arith.constant 0 : i32
    %c0_i32_2 = arith.constant 0 : i32
    return %c0_i32, %c0_i32_0, %c0_i32_1 : i32, i32, i32
  }
  func.func @transform_9(%arg0: i32, %arg1: i32) -> (i32, i32, i32) {
    %c0_i32 = arith.constant 0 : i32
    %c0_i32_0 = arith.constant 0 : i32
    %c0_i32_1 = arith.constant 0 : i32
    %c0_i32_2 = arith.constant 0 : i32
    return %c0_i32, %c0_i32_0, %c0_i32_1 : i32, i32, i32
  }
  func.func @transform_10(%arg0: i32, %arg1: i32) -> (i32, i32) {
    %c0_i32 = arith.constant 0 : i32
    %c0_i32_0 = arith.constant 0 : i32
    %c0_i32_1 = arith.constant 0 : i32
    return %c0_i32, %c0_i32_0 : i32, i32
  }
  func.func @transform_11(%arg0: i32, %arg1: i32) -> (i32, i32, i32) {
    %c0_i32 = arith.constant 0 : i32
    %c0_i32_0 = arith.constant 0 : i32
    return %arg0, %arg1, %c0_i32 : i32, i32, i32
  }
}

module attributes {stable_mosaic.version = 11 : i64} {
  func.func @_mha_kernel(%arg0: i32, %arg1: i32, %arg2: memref<1x8x32xf32, #tpu.memory_space<vmem>>, %arg3: memref<1x8x32xf32, #tpu.memory_space<vmem>>, %arg4: memref<1x8x32xf32, #tpu.memory_space<vmem>>, %arg5: memref<1x32x32xf32, #tpu.memory_space<vmem>>, %arg6: memref<1x1x32xf32, #tpu.memory_space<vmem>>, %arg7: memref<1x32x32xf32, #tpu.memory_space<vmem>>, %arg8: memref<1x1x32xf32, #tpu.memory_space<vmem>>, %arg9: memref<1x32x32xf32, #tpu.memory_space<vmem>>, %arg10: memref<1x1x32xf32, #tpu.memory_space<vmem>>, %arg11: memref<1x32x32xf32, #tpu.memory_space<vmem>>, %arg12: memref<1x32xf32, #tpu.memory_space<vmem>>, %arg13: memref<1x8x32xf32, #tpu.memory_space<vmem>>, %arg14: memref<1x8x32xf32, #tpu.memory_space<vmem>>, %arg15: memref<1x8x32xf32, #tpu.memory_space<vmem>>, %arg16: memref<8x32xf32, #tpu.memory_space<vmem>>) attributes {dimension_semantics = [#tpu.dimension_semantics<parallel>, #tpu.dimension_semantics<arbitrary>], iteration_bounds = array<i64: 2, 1>, scalar_prefetch = 0 : i64, scratch_operands = 3 : i64, tpu.core_type = #tpu.core_type<tc>, window_params = [{transform_indices = @transform_0, window_bounds = array<i64: 1, 8, 32>}, {transform_indices = @transform_1, window_bounds = array<i64: 1, 8, 32>}, {transform_indices = @transform_2, window_bounds = array<i64: 1, 8, 32>}, {pipeline_mode = #tpu.pipeline_mode<synchronous>, transform_indices = @transform_3, window_bounds = array<i64: 1, 32, 32>}, {pipeline_mode = #tpu.pipeline_mode<synchronous>, transform_indices = @transform_4, window_bounds = array<i64: 1, 1, 32>}, {pipeline_mode = #tpu.pipeline_mode<synchronous>, transform_indices = @transform_5, window_bounds = array<i64: 1, 32, 32>}, {pipeline_mode = #tpu.pipeline_mode<synchronous>, transform_indices = @transform_6, window_bounds = array<i64: 1, 1, 32>}, {pipeline_mode = #tpu.pipeline_mode<synchronous>, transform_indices = @transform_7, window_bounds = array<i64: 1, 32, 32>}, {pipeline_mode = #tpu.pipeline_mode<synchronous>, transform_indices = @transform_8, window_bounds = array<i64: 1, 1, 32>}, {pipeline_mode = #tpu.pipeline_mode<synchronous>, transform_indices = @transform_9, window_bounds = array<i64: 1, 32, 32>}, {pipeline_mode = #tpu.pipeline_mode<synchronous>, transform_indices = @transform_10, window_bounds = array<i64: 1, 32>}, {transform_indices = @transform_11, window_bounds = array<i64: 1, 8, 32>}]} {
    %c0_i32 = arith.constant 0 : i32
    %0 = arith.cmpi eq, %arg1, %c0_i32 : i32
    %1 = arith.extui %0 : i1 to i32
    %c0_i32_0 = arith.constant 0 : i32
    %2 = arith.cmpi ne, %1, %c0_i32_0 : i32
    scf.if %2 {
      %c0_80 = arith.constant 0 : index
      %c0_81 = arith.constant 0 : index
      %c0_82 = arith.constant 0 : index
      %104 = vector.load %arg3[%c0_80, %c0_81, %c0_82] : memref<1x8x32xf32, #tpu.memory_space<vmem>>, vector<1x8x32xf32>
      %105 = vector.shape_cast %104 : vector<1x8x32xf32> to vector<8x32xf32>
      %c0_83 = arith.constant 0 : index
      %c0_84 = arith.constant 0 : index
      %c0_85 = arith.constant 0 : index
      %106 = vector.load %arg7[%c0_83, %c0_84, %c0_85] : memref<1x32x32xf32, #tpu.memory_space<vmem>>, vector<1x32x32xf32>
      %107 = vector.shape_cast %106 : vector<1x32x32xf32> to vector<32x32xf32>
      %cst_86 = arith.constant dense<0.000000e+00> : vector<8x32xf32>
      %108 = tpu.matmul %105, %107, %cst_86 {dimension_numbers = #tpu.dot_dimension_numbers<[1], [0], [0], [1], [0, 0, 1, 1], [], []>} : vector<8x32xf32>, vector<32x32xf32>, vector<8x32xf32> -> vector<8x32xf32>
      %c0_87 = arith.constant 0 : index
      %c0_88 = arith.constant 0 : index
      %c0_89 = arith.constant 0 : index
      %109 = vector.load %arg8[%c0_87, %c0_88, %c0_89] : memref<1x1x32xf32, #tpu.memory_space<vmem>>, vector<1x1x32xf32>
      %110 = vector.shape_cast %109 : vector<1x1x32xf32> to vector<1x32xf32>
      %111 = vector.broadcast %110 : vector<1x32xf32> to vector<8x32xf32>
      %112 = arith.addf %108, %111 : vector<8x32xf32>
      %c0_90 = arith.constant 0 : index
      %c0_91 = arith.constant 0 : index
      %c0_92 = arith.constant 0 : index
      %113 = vector.load %arg14[%c0_90, %c0_91, %c0_92] : memref<1x8x32xf32, #tpu.memory_space<vmem>>, vector<1x8x32xf32>
      %114 = vector.shape_cast %113 : vector<1x8x32xf32> to vector<8x32xf32>
      %115 = vector.shape_cast %112 : vector<8x32xf32> to vector<1x8x32xf32>
      tpu.vector_store %arg14[%c0_90, %c0_91, %c0_92], %115 {strides = array<i32>} : memref<1x8x32xf32, #tpu.memory_space<vmem>>, vector<1x8x32xf32>,
      %c0_93 = arith.constant 0 : index
      %c0_94 = arith.constant 0 : index
      %c0_95 = arith.constant 0 : index
      %116 = vector.load %arg4[%c0_93, %c0_94, %c0_95] : memref<1x8x32xf32, #tpu.memory_space<vmem>>, vector<1x8x32xf32>
      %117 = vector.shape_cast %116 : vector<1x8x32xf32> to vector<8x32xf32>
      %c0_96 = arith.constant 0 : index
      %c0_97 = arith.constant 0 : index
      %c0_98 = arith.constant 0 : index
      %118 = vector.load %arg9[%c0_96, %c0_97, %c0_98] : memref<1x32x32xf32, #tpu.memory_space<vmem>>, vector<1x32x32xf32>
      %119 = vector.shape_cast %118 : vector<1x32x32xf32> to vector<32x32xf32>
      %cst_99 = arith.constant dense<0.000000e+00> : vector<8x32xf32>
      %120 = tpu.matmul %117, %119, %cst_99 {dimension_numbers = #tpu.dot_dimension_numbers<[1], [0], [0], [1], [0, 0, 1, 1], [], []>} : vector<8x32xf32>, vector<32x32xf32>, vector<8x32xf32> -> vector<8x32xf32>
      %c0_100 = arith.constant 0 : index
      %c0_101 = arith.constant 0 : index
      %c0_102 = arith.constant 0 : index
      %121 = vector.load %arg10[%c0_100, %c0_101, %c0_102] : memref<1x1x32xf32, #tpu.memory_space<vmem>>, vector<1x1x32xf32>
      %122 = vector.shape_cast %121 : vector<1x1x32xf32> to vector<1x32xf32>
      %123 = vector.broadcast %122 : vector<1x32xf32> to vector<8x32xf32>
      %124 = arith.addf %120, %123 : vector<8x32xf32>
      %c0_103 = arith.constant 0 : index
      %c0_104 = arith.constant 0 : index
      %c0_105 = arith.constant 0 : index
      %125 = vector.load %arg15[%c0_103, %c0_104, %c0_105] : memref<1x8x32xf32, #tpu.memory_space<vmem>>, vector<1x8x32xf32>
      %126 = vector.shape_cast %125 : vector<1x8x32xf32> to vector<8x32xf32>
      %127 = vector.shape_cast %124 : vector<8x32xf32> to vector<1x8x32xf32>
      tpu.vector_store %arg15[%c0_103, %c0_104, %c0_105], %127 {strides = array<i32>} : memref<1x8x32xf32, #tpu.memory_space<vmem>>, vector<1x8x32xf32>,
    } else {
    }
    %cst = arith.constant 0.000000e+00 : f32
    %3 = vector.broadcast %cst : f32 to vector<8x32xf32>
    %c0 = arith.constant 0 : index
    %c0_1 = arith.constant 0 : index
    %4 = vector.load %arg16[%c0, %c0_1] : memref<8x32xf32, #tpu.memory_space<vmem>>, vector<8x32xf32>
    tpu.vector_store %arg16[%c0, %c0_1], %3 {strides = array<i32>} : memref<8x32xf32, #tpu.memory_space<vmem>>, vector<8x32xf32>,
    %c0_2 = arith.constant 0 : index
    %c0_3 = arith.constant 0 : index
    %c0_4 = arith.constant 0 : index
    %5 = vector.load %arg2[%c0_2, %c0_3, %c0_4] : memref<1x8x32xf32, #tpu.memory_space<vmem>>, vector<1x8x32xf32>
    %6 = vector.shape_cast %5 : vector<1x8x32xf32> to vector<8x32xf32>
    %c0_5 = arith.constant 0 : index
    %c0_6 = arith.constant 0 : index
    %c0_7 = arith.constant 0 : index
    %7 = vector.load %arg5[%c0_5, %c0_6, %c0_7] : memref<1x32x32xf32, #tpu.memory_space<vmem>>, vector<1x32x32xf32>
    %8 = vector.shape_cast %7 : vector<1x32x32xf32> to vector<32x32xf32>
    %cst_8 = arith.constant dense<0.000000e+00> : vector<8x32xf32>
    %9 = tpu.matmul %6, %8, %cst_8 {dimension_numbers = #tpu.dot_dimension_numbers<[1], [0], [0], [1], [0, 0, 1, 1], [], []>} : vector<8x32xf32>, vector<32x32xf32>, vector<8x32xf32> -> vector<8x32xf32>
    %c0_9 = arith.constant 0 : index
    %c0_10 = arith.constant 0 : index
    %c0_11 = arith.constant 0 : index
    %10 = vector.load %arg6[%c0_9, %c0_10, %c0_11] : memref<1x1x32xf32, #tpu.memory_space<vmem>>, vector<1x1x32xf32>
    %11 = vector.shape_cast %10 : vector<1x1x32xf32> to vector<1x32xf32>
    %12 = vector.broadcast %11 : vector<1x32xf32> to vector<8x32xf32>
    %13 = arith.addf %9, %12 : vector<8x32xf32>
    %14 = vector.extract_strided_slice %13 {offsets = [0, 0], sizes = [8, 8], strides = [1, 1]} : vector<8x32xf32> to vector<8x8xf32>
    %c0_i32_12 = arith.constant 0 : i32
    %c0_i32_13 = arith.constant 0 : i32
    %c0_i32_14 = arith.constant 0 : i32
    %15 = tpu.memref_slice %arg14[%c0_i32_12, %c0_i32_13, %c0_i32_14] : memref<1x8x32xf32, #tpu.memory_space<vmem>> -> memref<1x8x32xf32, #tpu.memory_space<vmem>>
    %16 = tpu.memref_squeeze %15 : memref<1x8x32xf32, #tpu.memory_space<vmem>> -> memref<8x32xf32, #tpu.memory_space<vmem>>
    %c0_15 = arith.constant 0 : index
    %c0_16 = arith.constant 0 : index
    %17 = vector.load %16[%c0_15, %c0_16] : memref<8x32xf32, #tpu.memory_space<vmem>>, vector<8x8xf32>
    %cst_17 = arith.constant dense<0.000000e+00> : vector<8x8xf32>
    %18 = tpu.matmul %14, %17, %cst_17 {dimension_numbers = #tpu.dot_dimension_numbers<[1], [1], [0], [0], [0, 0, 1, 0], [], []>} : vector<8x8xf32>, vector<8x8xf32>, vector<8x8xf32> -> vector<8x8xf32>
    %cst_18 = arith.constant dense<0xFF800000> : vector<8xf32>
    %19 = vector.multi_reduction <maximumf>, %18, %cst_18 [1] : vector<8x8xf32> to vector<8xf32>
    %20 = vector.shape_cast %19 : vector<8xf32> to vector<8x1xf32>
    %21 = vector.broadcast %20 : vector<8x1xf32> to vector<8x8xf32>
    %22 = arith.subf %18, %21 : vector<8x8xf32>
    %23 = math.exp %22 : vector<8x8xf32>
    %cst_19 = arith.constant dense<0.000000e+00> : vector<8xf32>
    %24 = vector.multi_reduction <add>, %23, %cst_19 [1] : vector<8x8xf32> to vector<8xf32>
    %25 = vector.shape_cast %24 : vector<8xf32> to vector<8x1xf32>
    %26 = tpu.reciprocal %25 : vector<8x1xf32> -> vector<8x1xf32>
    %c0_i32_20 = arith.constant 0 : i32
    %c0_i32_21 = arith.constant 0 : i32
    %c0_i32_22 = arith.constant 0 : i32
    %27 = tpu.memref_slice %arg15[%c0_i32_20, %c0_i32_21, %c0_i32_22] : memref<1x8x32xf32, #tpu.memory_space<vmem>> -> memref<1x8x32xf32, #tpu.memory_space<vmem>>
    %28 = tpu.memref_squeeze %27 : memref<1x8x32xf32, #tpu.memory_space<vmem>> -> memref<8x32xf32, #tpu.memory_space<vmem>>
    %c0_23 = arith.constant 0 : index
    %c0_24 = arith.constant 0 : index
    %29 = vector.load %28[%c0_23, %c0_24] : memref<8x32xf32, #tpu.memory_space<vmem>>, vector<8x8xf32>
    %cst_25 = arith.constant dense<0.000000e+00> : vector<8x8xf32>
    %30 = tpu.matmul %23, %29, %cst_25 {dimension_numbers = #tpu.dot_dimension_numbers<[1], [0], [0], [1], [0, 0, 1, 1], [], []>} : vector<8x8xf32>, vector<8x8xf32>, vector<8x8xf32> -> vector<8x8xf32>
    %31 = vector.broadcast %26 : vector<8x1xf32> to vector<8x8xf32>
    %32 = arith.mulf %30, %31 : vector<8x8xf32>
    %33 = vector.extract_strided_slice %13 {offsets = [0, 8], sizes = [8, 8], strides = [1, 1]} : vector<8x32xf32> to vector<8x8xf32>
    %c0_i32_26 = arith.constant 0 : i32
    %c0_i32_27 = arith.constant 0 : i32
    %c0_i32_28 = arith.constant 0 : i32
    %34 = tpu.memref_slice %arg14[%c0_i32_26, %c0_i32_27, %c0_i32_28] : memref<1x8x32xf32, #tpu.memory_space<vmem>> -> memref<1x8x32xf32, #tpu.memory_space<vmem>>
    %35 = tpu.memref_squeeze %34 : memref<1x8x32xf32, #tpu.memory_space<vmem>> -> memref<8x32xf32, #tpu.memory_space<vmem>>
    %c0_29 = arith.constant 0 : index
    %c8 = arith.constant 8 : index
    %36 = vector.load %35[%c0_29, %c8] : memref<8x32xf32, #tpu.memory_space<vmem>>, vector<8x8xf32>
    %cst_30 = arith.constant dense<0.000000e+00> : vector<8x8xf32>
    %37 = tpu.matmul %33, %36, %cst_30 {dimension_numbers = #tpu.dot_dimension_numbers<[1], [1], [0], [0], [0, 0, 1, 0], [], []>} : vector<8x8xf32>, vector<8x8xf32>, vector<8x8xf32> -> vector<8x8xf32>
    %cst_31 = arith.constant dense<0xFF800000> : vector<8xf32>
    %38 = vector.multi_reduction <maximumf>, %37, %cst_31 [1] : vector<8x8xf32> to vector<8xf32>
    %39 = vector.shape_cast %38 : vector<8xf32> to vector<8x1xf32>
    %40 = vector.broadcast %39 : vector<8x1xf32> to vector<8x8xf32>
    %41 = arith.subf %37, %40 : vector<8x8xf32>
    %42 = math.exp %41 : vector<8x8xf32>
    %cst_32 = arith.constant dense<0.000000e+00> : vector<8xf32>
    %43 = vector.multi_reduction <add>, %42, %cst_32 [1] : vector<8x8xf32> to vector<8xf32>
    %44 = vector.shape_cast %43 : vector<8xf32> to vector<8x1xf32>
    %45 = tpu.reciprocal %44 : vector<8x1xf32> -> vector<8x1xf32>
    %c0_i32_33 = arith.constant 0 : i32
    %c0_i32_34 = arith.constant 0 : i32
    %c0_i32_35 = arith.constant 0 : i32
    %46 = tpu.memref_slice %arg15[%c0_i32_33, %c0_i32_34, %c0_i32_35] : memref<1x8x32xf32, #tpu.memory_space<vmem>> -> memref<1x8x32xf32, #tpu.memory_space<vmem>>
    %47 = tpu.memref_squeeze %46 : memref<1x8x32xf32, #tpu.memory_space<vmem>> -> memref<8x32xf32, #tpu.memory_space<vmem>>
    %c0_36 = arith.constant 0 : index
    %c8_37 = arith.constant 8 : index
    %48 = vector.load %47[%c0_36, %c8_37] : memref<8x32xf32, #tpu.memory_space<vmem>>, vector<8x8xf32>
    %cst_38 = arith.constant dense<0.000000e+00> : vector<8x8xf32>
    %49 = tpu.matmul %42, %48, %cst_38 {dimension_numbers = #tpu.dot_dimension_numbers<[1], [0], [0], [1], [0, 0, 1, 1], [], []>} : vector<8x8xf32>, vector<8x8xf32>, vector<8x8xf32> -> vector<8x8xf32>
    %50 = vector.broadcast %45 : vector<8x1xf32> to vector<8x8xf32>
    %51 = arith.mulf %49, %50 : vector<8x8xf32>
    %52 = vector.extract_strided_slice %13 {offsets = [0, 16], sizes = [8, 8], strides = [1, 1]} : vector<8x32xf32> to vector<8x8xf32>
    %c0_i32_39 = arith.constant 0 : i32
    %c0_i32_40 = arith.constant 0 : i32
    %c0_i32_41 = arith.constant 0 : i32
    %53 = tpu.memref_slice %arg14[%c0_i32_39, %c0_i32_40, %c0_i32_41] : memref<1x8x32xf32, #tpu.memory_space<vmem>> -> memref<1x8x32xf32, #tpu.memory_space<vmem>>
    %54 = tpu.memref_squeeze %53 : memref<1x8x32xf32, #tpu.memory_space<vmem>> -> memref<8x32xf32, #tpu.memory_space<vmem>>
    %c0_42 = arith.constant 0 : index
    %c16 = arith.constant 16 : index
    %55 = vector.load %54[%c0_42, %c16] : memref<8x32xf32, #tpu.memory_space<vmem>>, vector<8x8xf32>
    %cst_43 = arith.constant dense<0.000000e+00> : vector<8x8xf32>
    %56 = tpu.matmul %52, %55, %cst_43 {dimension_numbers = #tpu.dot_dimension_numbers<[1], [1], [0], [0], [0, 0, 1, 0], [], []>} : vector<8x8xf32>, vector<8x8xf32>, vector<8x8xf32> -> vector<8x8xf32>
    %cst_44 = arith.constant dense<0xFF800000> : vector<8xf32>
    %57 = vector.multi_reduction <maximumf>, %56, %cst_44 [1] : vector<8x8xf32> to vector<8xf32>
    %58 = vector.shape_cast %57 : vector<8xf32> to vector<8x1xf32>
    %59 = vector.broadcast %58 : vector<8x1xf32> to vector<8x8xf32>
    %60 = arith.subf %56, %59 : vector<8x8xf32>
    %61 = math.exp %60 : vector<8x8xf32>
    %cst_45 = arith.constant dense<0.000000e+00> : vector<8xf32>
    %62 = vector.multi_reduction <add>, %61, %cst_45 [1] : vector<8x8xf32> to vector<8xf32>
    %63 = vector.shape_cast %62 : vector<8xf32> to vector<8x1xf32>
    %64 = tpu.reciprocal %63 : vector<8x1xf32> -> vector<8x1xf32>
    %c0_i32_46 = arith.constant 0 : i32
    %c0_i32_47 = arith.constant 0 : i32
    %c0_i32_48 = arith.constant 0 : i32
    %65 = tpu.memref_slice %arg15[%c0_i32_46, %c0_i32_47, %c0_i32_48] : memref<1x8x32xf32, #tpu.memory_space<vmem>> -> memref<1x8x32xf32, #tpu.memory_space<vmem>>
    %66 = tpu.memref_squeeze %65 : memref<1x8x32xf32, #tpu.memory_space<vmem>> -> memref<8x32xf32, #tpu.memory_space<vmem>>
    %c0_49 = arith.constant 0 : index
    %c16_50 = arith.constant 16 : index
    %67 = vector.load %66[%c0_49, %c16_50] : memref<8x32xf32, #tpu.memory_space<vmem>>, vector<8x8xf32>
    %cst_51 = arith.constant dense<0.000000e+00> : vector<8x8xf32>
    %68 = tpu.matmul %61, %67, %cst_51 {dimension_numbers = #tpu.dot_dimension_numbers<[1], [0], [0], [1], [0, 0, 1, 1], [], []>} : vector<8x8xf32>, vector<8x8xf32>, vector<8x8xf32> -> vector<8x8xf32>
    %69 = vector.broadcast %64 : vector<8x1xf32> to vector<8x8xf32>
    %70 = arith.mulf %68, %69 : vector<8x8xf32>
    %71 = vector.extract_strided_slice %13 {offsets = [0, 24], sizes = [8, 8], strides = [1, 1]} : vector<8x32xf32> to vector<8x8xf32>
    %c0_i32_52 = arith.constant 0 : i32
    %c0_i32_53 = arith.constant 0 : i32
    %c0_i32_54 = arith.constant 0 : i32
    %72 = tpu.memref_slice %arg14[%c0_i32_52, %c0_i32_53, %c0_i32_54] : memref<1x8x32xf32, #tpu.memory_space<vmem>> -> memref<1x8x32xf32, #tpu.memory_space<vmem>>
    %73 = tpu.memref_squeeze %72 : memref<1x8x32xf32, #tpu.memory_space<vmem>> -> memref<8x32xf32, #tpu.memory_space<vmem>>
    %c0_55 = arith.constant 0 : index
    %c24 = arith.constant 24 : index
    %74 = vector.load %73[%c0_55, %c24] : memref<8x32xf32, #tpu.memory_space<vmem>>, vector<8x8xf32>
    %cst_56 = arith.constant dense<0.000000e+00> : vector<8x8xf32>
    %75 = tpu.matmul %71, %74, %cst_56 {dimension_numbers = #tpu.dot_dimension_numbers<[1], [1], [0], [0], [0, 0, 1, 0], [], []>} : vector<8x8xf32>, vector<8x8xf32>, vector<8x8xf32> -> vector<8x8xf32>
    %cst_57 = arith.constant dense<0xFF800000> : vector<8xf32>
    %76 = vector.multi_reduction <maximumf>, %75, %cst_57 [1] : vector<8x8xf32> to vector<8xf32>
    %77 = vector.shape_cast %76 : vector<8xf32> to vector<8x1xf32>
    %78 = vector.broadcast %77 : vector<8x1xf32> to vector<8x8xf32>
    %79 = arith.subf %75, %78 : vector<8x8xf32>
    %80 = math.exp %79 : vector<8x8xf32>
    %cst_58 = arith.constant dense<0.000000e+00> : vector<8xf32>
    %81 = vector.multi_reduction <add>, %80, %cst_58 [1] : vector<8x8xf32> to vector<8xf32>
    %82 = vector.shape_cast %81 : vector<8xf32> to vector<8x1xf32>
    %83 = tpu.reciprocal %82 : vector<8x1xf32> -> vector<8x1xf32>
    %c0_i32_59 = arith.constant 0 : i32
    %c0_i32_60 = arith.constant 0 : i32
    %c0_i32_61 = arith.constant 0 : i32
    %84 = tpu.memref_slice %arg15[%c0_i32_59, %c0_i32_60, %c0_i32_61] : memref<1x8x32xf32, #tpu.memory_space<vmem>> -> memref<1x8x32xf32, #tpu.memory_space<vmem>>
    %85 = tpu.memref_squeeze %84 : memref<1x8x32xf32, #tpu.memory_space<vmem>> -> memref<8x32xf32, #tpu.memory_space<vmem>>
    %c0_62 = arith.constant 0 : index
    %c24_63 = arith.constant 24 : index
    %86 = vector.load %85[%c0_62, %c24_63] : memref<8x32xf32, #tpu.memory_space<vmem>>, vector<8x8xf32>
    %cst_64 = arith.constant dense<0.000000e+00> : vector<8x8xf32>
    %87 = tpu.matmul %80, %86, %cst_64 {dimension_numbers = #tpu.dot_dimension_numbers<[1], [0], [0], [1], [0, 0, 1, 1], [], []>} : vector<8x8xf32>, vector<8x8xf32>, vector<8x8xf32> -> vector<8x8xf32>
    %88 = vector.broadcast %83 : vector<8x1xf32> to vector<8x8xf32>
    %89 = arith.mulf %87, %88 : vector<8x8xf32>
    %90 = tpu.concatenate %32, %51, %70, %89 in 1 : vector<8x8xf32>, vector<8x8xf32>, vector<8x8xf32>, vector<8x8xf32> -> vector<8x32xf32>
    %c0_65 = arith.constant 0 : index
    %c0_66 = arith.constant 0 : index
    %91 = vector.load %arg16[%c0_65, %c0_66] : memref<8x32xf32, #tpu.memory_space<vmem>>, vector<8x32xf32>
    %c0_67 = arith.constant 0 : index
    %c0_68 = arith.constant 0 : index
    %c0_69 = arith.constant 0 : index
    %92 = vector.load %arg11[%c0_67, %c0_68, %c0_69] : memref<1x32x32xf32, #tpu.memory_space<vmem>>, vector<1x32x32xf32>
    %93 = vector.shape_cast %92 : vector<1x32x32xf32> to vector<32x32xf32>
    %cst_70 = arith.constant dense<0.000000e+00> : vector<8x32xf32>
    %94 = tpu.matmul %90, %93, %cst_70 {dimension_numbers = #tpu.dot_dimension_numbers<[1], [0], [0], [1], [0, 0, 1, 1], [], []>} : vector<8x32xf32>, vector<32x32xf32>, vector<8x32xf32> -> vector<8x32xf32>
    %95 = arith.addf %91, %94 : vector<8x32xf32>
    %c0_71 = arith.constant 0 : index
    %c0_72 = arith.constant 0 : index
    %96 = vector.load %arg16[%c0_71, %c0_72] : memref<8x32xf32, #tpu.memory_space<vmem>>, vector<8x32xf32>
    tpu.vector_store %arg16[%c0_71, %c0_72], %95 {strides = array<i32>} : memref<8x32xf32, #tpu.memory_space<vmem>>, vector<8x32xf32>,
    %c0_73 = arith.constant 0 : index
    %c0_74 = arith.constant 0 : index
    %97 = vector.load %arg16[%c0_73, %c0_74] : memref<8x32xf32, #tpu.memory_space<vmem>>, vector<8x32xf32>
    %c0_75 = arith.constant 0 : index
    %c0_76 = arith.constant 0 : index
    %98 = vector.load %arg12[%c0_75, %c0_76] : memref<1x32xf32, #tpu.memory_space<vmem>>, vector<1x32xf32>
    %99 = vector.broadcast %98 : vector<1x32xf32> to vector<8x32xf32>
    %100 = arith.addf %97, %99 : vector<8x32xf32>
    %c0_77 = arith.constant 0 : index
    %c0_78 = arith.constant 0 : index
    %c0_79 = arith.constant 0 : index
    %101 = vector.load %arg13[%c0_77, %c0_78, %c0_79] : memref<1x8x32xf32, #tpu.memory_space<vmem>>, vector<1x8x32xf32>
    %102 = vector.shape_cast %101 : vector<1x8x32xf32> to vector<8x32xf32>
    %103 = vector.shape_cast %100 : vector<8x32xf32> to vector<1x8x32xf32>
    tpu.vector_store %arg13[%c0_77, %c0_78, %c0_79], %103 {strides = array<i32>} : memref<1x8x32xf32, #tpu.memory_space<vmem>>, vector<1x8x32xf32>,
    return
  }
  func.func @transform_0(%arg0: i32, %arg1: i32) -> (i32, i32, i32) {
    %c0_i32 = arith.constant 0 : i32
    %c0_i32_0 = arith.constant 0 : i32
    return %arg0, %arg1, %c0_i32 : i32, i32, i32
  }
  func.func @transform_1(%arg0: i32, %arg1: i32) -> (i32, i32, i32) {
    %c0_i32 = arith.constant 0 : i32
    %c0_i32_0 = arith.constant 0 : i32
    %c0_i32_1 = arith.constant 0 : i32
    return %arg0, %c0_i32, %c0_i32_0 : i32, i32, i32
  }
  func.func @transform_2(%arg0: i32, %arg1: i32) -> (i32, i32, i32) {
    %c0_i32 = arith.constant 0 : i32
    %c0_i32_0 = arith.constant 0 : i32
    %c0_i32_1 = arith.constant 0 : i32
    return %arg0, %c0_i32, %c0_i32_0 : i32, i32, i32
  }
  func.func @transform_3(%arg0: i32, %arg1: i32) -> (i32, i32, i32) {
    %c0_i32 = arith.constant 0 : i32
    %c0_i32_0 = arith.constant 0 : i32
    %c0_i32_1 = arith.constant 0 : i32
    %c0_i32_2 = arith.constant 0 : i32
    return %c0_i32, %c0_i32_0, %c0_i32_1 : i32, i32, i32
  }
  func.func @transform_4(%arg0: i32, %arg1: i32) -> (i32, i32, i32) {
    %c0_i32 = arith.constant 0 : i32
    %c0_i32_0 = arith.constant 0 : i32
    %c0_i32_1 = arith.constant 0 : i32
    %c0_i32_2 = arith.constant 0 : i32
    return %c0_i32, %c0_i32_0, %c0_i32_1 : i32, i32, i32
  }
  func.func @transform_5(%arg0: i32, %arg1: i32) -> (i32, i32, i32) {
    %c0_i32 = arith.constant 0 : i32
    %c0_i32_0 = arith.constant 0 : i32
    %c0_i32_1 = arith.constant 0 : i32
    %c0_i32_2 = arith.constant 0 : i32
    return %c0_i32, %c0_i32_0, %c0_i32_1 : i32, i32, i32
  }
  func.func @transform_6(%arg0: i32, %arg1: i32) -> (i32, i32, i32) {
    %c0_i32 = arith.constant 0 : i32
    %c0_i32_0 = arith.constant 0 : i32
    %c0_i32_1 = arith.constant 0 : i32
    %c0_i32_2 = arith.constant 0 : i32
    return %c0_i32, %c0_i32_0, %c0_i32_1 : i32, i32, i32
  }
  func.func @transform_7(%arg0: i32, %arg1: i32) -> (i32, i32, i32) {
    %c0_i32 = arith.constant 0 : i32
    %c0_i32_0 = arith.constant 0 : i32
    %c0_i32_1 = arith.constant 0 : i32
    %c0_i32_2 = arith.constant 0 : i32
    return %c0_i32, %c0_i32_0, %c0_i32_1 : i32, i32, i32
  }
  func.func @transform_8(%arg0: i32, %arg1: i32) -> (i32, i32, i32) {
    %c0_i32 = arith.constant 0 : i32
    %c0_i32_0 = arith.constant 0 : i32
    %c0_i32_1 = arith.constant 0 : i32
    %c0_i32_2 = arith.constant 0 : i32
    return %c0_i32, %c0_i32_0, %c0_i32_1 : i32, i32, i32
  }
  func.func @transform_9(%arg0: i32, %arg1: i32) -> (i32, i32, i32) {
    %c0_i32 = arith.constant 0 : i32
    %c0_i32_0 = arith.constant 0 : i32
    %c0_i32_1 = arith.constant 0 : i32
    %c0_i32_2 = arith.constant 0 : i32
    return %c0_i32, %c0_i32_0, %c0_i32_1 : i32, i32, i32
  }
  func.func @transform_10(%arg0: i32, %arg1: i32) -> (i32, i32) {
    %c0_i32 = arith.constant 0 : i32
    %c0_i32_0 = arith.constant 0 : i32
    %c0_i32_1 = arith.constant 0 : i32
    return %c0_i32, %c0_i32_0 : i32, i32
  }
  func.func @transform_11(%arg0: i32, %arg1: i32) -> (i32, i32, i32) {
    %c0_i32 = arith.constant 0 : i32
    %c0_i32_0 = arith.constant 0 : i32
    return %arg0, %arg1, %c0_i32 : i32, i32, i32
  }
}

</mosaic_0001>

<llo_original>
// kernel: tpu_custom_call.1
$region0: #{tpu_custom_call.1}
  #allocation0 [shape = 'u32[]', space=smem, size = 0x4, offset = 0x4, fixed_abs, tag = 'smem constant byte address 0x4 - core index']
  #allocation1 [shape = 'u32[144,128]{1,0:T(1,128)}', space=vmem, size = 0x12000, scoped, tag = 'internal scratch']
  #allocation2 [shape = 'f32[1,8,32]{2,1,0:T(8,128)}', space=vmem, size = 0x1000, scoped, tag = 'scratch operand']
  #allocation3 [shape = 'f32[1,8,32]{2,1,0:T(8,128)}', space=vmem, size = 0x1000, scoped, tag = 'scratch operand']
  #allocation4 [shape = 'f32[8,32]{1,0:T(8,128)}', space=vmem, size = 0x1000, scoped, tag = 'scratch operand']
  %s0 = inlined_call_operand.hbm [shape: f32[2,8,32], index: 0, kind: input, shape index: {}]
  %s1 = inlined_call_operand.hbm [shape: f32[2,8,32], index: 1, kind: input, shape index: {}]
  %s2 = inlined_call_operand.hbm [shape: f32[2,8,32], index: 2, kind: input, shape index: {}]
  %s3 = inlined_call_operand.hbm [shape: f32[1,32,32], index: 3, kind: input, shape index: {}]
  %s4 = inlined_call_operand.vmem [shape: f32[1,1,32], index: 4, kind: input, shape index: {}]
  %s5 = inlined_call_operand.hbm [shape: f32[1,32,32], index: 5, kind: input, shape index: {}]
  %s6 = inlined_call_operand.vmem [shape: f32[1,1,32], index: 6, kind: input, shape index: {}]
  %s7 = inlined_call_operand.hbm [shape: f32[1,32,32], index: 7, kind: input, shape index: {}]
  %s8 = inlined_call_operand.vmem [shape: f32[1,1,32], index: 8, kind: input, shape index: {}]
  %s9 = inlined_call_operand.hbm [shape: f32[1,32,32], index: 9, kind: input, shape index: {}]
  %s10 = inlined_call_operand.vmem [shape: f32[1,32], index: 10, kind: input, shape index: {}]
  %s11 = inlined_call_operand.hbm [shape: f32[2,8,32], index: 11, kind: output, shape index: {}]
  %s12 = sld [smem:[#allocation0]]
  $region109: #{tpu_custom_call.1} parent=0
    _
  %s14 = ssub.s32 1, %s12
  %s15 = scalar_select 0, %s14, %s12
  $region1: #{tpu_custom_call.1} parent=0
    #allocation5 [shape = 'u8[8192]{0}', space=vmem, size = 0x2000, scoped, tag = 'input window, operand 0']
    #allocation6 [shape = 's32[2]{0}', space=sflag, size = 0x8, scoped, tag = 'scoped memory for tpu_custom_call.1']
    #allocation7 [shape = 's32[2]{0}', space=sflag, size = 0x8, scoped, tag = 'scoped memory for tpu_custom_call.1']
    #allocation8 [shape = 'u8[8192]{0}', space=vmem, size = 0x2000, scoped, tag = 'input window, operand 1']
    #allocation9 [shape = 's32[2]{0}', space=sflag, size = 0x8, scoped, tag = 'scoped memory for tpu_custom_call.1']
    #allocation10 [shape = 'u8[8192]{0}', space=vmem, size = 0x2000, scoped, tag = 'input window, operand 2']
    #allocation11 [shape = 'u8[16384]{0}', space=vmem, size = 0x4000, scoped, tag = 'input window, operand 3, single buffered']
    #allocation12 [shape = 's32[1]{0}', space=sflag, size = 0x4, scoped, tag = 'scoped memory for tpu_custom_call.1']
    #allocation13 [shape = 'u8[16384]{0}', space=vmem, size = 0x4000, scoped, tag = 'input window, operand 5, single buffered']
    #allocation14 [shape = 'u8[16384]{0}', space=vmem, size = 0x4000, scoped, tag = 'input window, operand 7, single buffered']
    #allocation15 [shape = 's32[1]{0}', space=sflag, size = 0x4, scoped, tag = 'scoped memory for tpu_custom_call.1']
    #allocation16 [shape = 'u8[16384]{0}', space=vmem, size = 0x4000, scoped, tag = 'input window, operand 9, single buffered']
    #allocation17 [shape = 'u8[8192]{0}', space=vmem, size = 0x2000, scoped, tag = 'output window, operand 0']
    %16 = vsyncpa [#allocation6], 0
    %s17 = scalar_lea.sflag [#allocation6], 1
    %18 = vsyncpa %s17, 0
    %19 = vsyncpa [#allocation9], 0
    %s20 = scalar_lea.sflag [#allocation9], 1
    %21 = vsyncpa %s20, 0
    %22 = vsyncpa [#allocation12], 0
    %23 = vsyncpa [#allocation15], 0
    %24 = vsyncpa [#allocation7], 0
    %s25 = scalar_lea.sflag [#allocation7], 1
    %26 = vsyncpa %s25, 0
    loop: start=0, step=1, limit=4
    $region2: #{tpu_custom_call.1} parent=1 // loop_pre_header
      _
    $region3: #{tpu_custom_call.1} parent=1 // loop_header
      %s28 = sphi 0, %s32
      %p29 = scmp.ge.s32.totalorder %s28, 4
      %s35 = sphi 0, %s47
      %s36 = sphi 0, %s43
      %s37 = sphi 0, %s35
      %s38 = sphi 0, %s36
      %s39 = sphi 0, %s37
      %s40 = sphi 0, %s38
      %s52 = sphi 0, %s54
      %s55 = sphi 0, %s52
      %s56 = sphi 0, %s55
      %s72 = sphi 0, %s56
      %s78 = sphi 0, %s80
      %s81 = sphi 0, %s78
      %s82 = sphi 0, %s81
      %s98 = sphi 0, %s82
      %s104 = sphi 0, %s106
      %s107 = sphi 0, %s104
      %s108 = sphi 0, %s107
      %s124 = sphi 0, %s108
      %s128 = sphi 0, %s128
      %s130 = sphi 0, %s128
      %s131 = sphi 0, %s130
      %s145 = sphi 0, %s131
      %s149 = sphi 0, %s149
      %s151 = sphi 0, %s149
      %s152 = sphi 0, %s151
      %s166 = sphi 0, %s152
      %s170 = sphi 0, %s170
      %s172 = sphi 0, %s170
      %s173 = sphi 0, %s172
      %s187 = sphi 0, %s173
      %s191 = sphi 0, %s191
      %s193 = sphi 0, %s191
      %s194 = sphi 0, %s193
      %s208 = sphi 0, %s194
      %s212 = sphi 0, %s212
      %s214 = sphi 0, %s212
      %s215 = sphi 0, %s214
      %s229 = sphi 0, %s215
      %s233 = sphi 0, %s233
      %s235 = sphi 0, %s233
      %s236 = sphi 0, %s235
      %s250 = sphi 0, %s236
      %s254 = sphi 0, %s254
      %s256 = sphi 0, %s254
      %s257 = sphi 0, %s256
      %s271 = sphi 0, %s257
      %s275 = sphi 0, %s275
      %s277 = sphi 0, %s275
      %s278 = sphi 0, %s277
      %s292 = sphi 0, %s278
      %s300 = sphi 0, %s302
      %s303 = sphi 0, %s300
      %s304 = sphi 0, %s303
      %s320 = sphi 0, %s304
    $region4: #{tpu_custom_call.1} parent=1 // loop_header_branch
      %31 = sbr.rel (%p29) target = $region8
    $region5: #{tpu_custom_call.1} parent=1 // loop_body
      %s33 = ssub.s32 %s28, 1
      %s34 = ssub.s32 %s28, 2
      %s41 = sadd.s32 1, %s36
      %p42 = scmp.ge.s32.totalorder %s41, 1
      %s43 = scalar_select %p42, 0, %s41
      %s44 = sadd.s32 1, %s35
      %s45 = scalar_select %p42, %s44, %s35
      %p46 = scmp.ge.s32.totalorder %s45, 2
      %s47 = scalar_select %p46, 0, %s45
      %s48 = ssub.s32 %s35, %s47
      %s49 = ssub.s32 %s36, %s43
      %s50 = sor.u32 %s48, %s49
      %p51 = scmp.eq.s32.totalorder %s50, 0
      %s53 = sadd.s32 %s52, 1
      %s54 = scalar_select %p51, %s52, %s53
      %p57 = pneg %p51
      %p58 = scmp.eq.s32.totalorder %s28, 1
      %p59 = por %p57, %p58
      %p60 = scmp.ne.s32.totalorder %s52, %s55
      %p61 = scmp.eq.s32.totalorder %s28, 0
      %p62 = por %p60, %p61
      %p63 = scmp.ne.s32.totalorder %s52, %s55
      %p64 = scmp.eq.s32.totalorder %s33, 1
      %p65 = por %p63, %p64
      %p66 = scmp.ne.s32.totalorder %s55, %s56
      %p67 = scmp.eq.s32.totalorder %s33, 0
      %p68 = por %p66, %p67
      %p69 = scmp.ne.s32.totalorder %s55, %s56
      %p70 = scmp.eq.s32.totalorder %s34, 1
      %p71 = por %p69, %p70
      %p73 = scmp.ne.s32.totalorder %s56, %s72
      %p74 = scmp.eq.s32.totalorder %s34, 0
      %p75 = por %p73, %p74
      %s76 = ssub.s32 %s35, %s47
      %p77 = scmp.eq.s32.totalorder %s76, 0
      %s79 = sadd.s32 %s78, 1
      %s80 = scalar_select %p77, %s78, %s79
      %p83 = pneg %p77
      %p84 = scmp.eq.s32.totalorder %s28, 1
      %p85 = por %p83, %p84
      %p86 = scmp.ne.s32.totalorder %s78, %s81
      %p87 = scmp.eq.s32.totalorder %s28, 0
      %p88 = por %p86, %p87
      %p89 = scmp.ne.s32.totalorder %s78, %s81
      %p90 = scmp.eq.s32.totalorder %s33, 1
      %p91 = por %p89, %p90
      %p92 = scmp.ne.s32.totalorder %s81, %s82
      %p93 = scmp.eq.s32.totalorder %s33, 0
      %p94 = por %p92, %p93
      %p95 = scmp.ne.s32.totalorder %s81, %s82
      %p96 = scmp.eq.s32.totalorder %s34, 1
      %p97 = por %p95, %p96
      %p99 = scmp.ne.s32.totalorder %s82, %s98
      %p100 = scmp.eq.s32.totalorder %s34, 0
      %p101 = por %p99, %p100
      %s102 = ssub.s32 %s35, %s47
      %p103 = scmp.eq.s32.totalorder %s102, 0
      %s105 = sadd.s32 %s104, 1
      %s106 = scalar_select %p103, %s104, %s105
      %p109 = pneg %p103
      %p110 = scmp.eq.s32.totalorder %s28, 1
      %p111 = por %p109, %p110
      %p112 = scmp.ne.s32.totalorder %s104, %s107
      %p113 = scmp.eq.s32.totalorder %s28, 0
      %p114 = por %p112, %p113
      %p115 = scmp.ne.s32.totalorder %s104, %s107
      %p116 = scmp.eq.s32.totalorder %s33, 1
      %p117 = por %p115, %p116
      %p118 = scmp.ne.s32.totalorder %s107, %s108
      %p119 = scmp.eq.s32.totalorder %s33, 0
      %p120 = por %p118, %p119
      %p121 = scmp.ne.s32.totalorder %s107, %s108
      %p122 = scmp.eq.s32.totalorder %s34, 1
      %p123 = por %p121, %p122
      %p125 = scmp.ne.s32.totalorder %s108, %s124
      %p126 = scmp.eq.s32.totalorder %s34, 0
      %p127 = por %p125, %p126
      %s129 = sadd.s32 %s128, 1
      %p132 = scmp.eq.s32.totalorder %s28, 1
      %p133 = scmp.ne.s32.totalorder %s128, %s130
      %p134 = scmp.eq.s32.totalorder %s28, 0
      %p135 = por %p133, %p134
      %p136 = scmp.ne.s32.totalorder %s128, %s130
      %p137 = scmp.eq.s32.totalorder %s33, 1
      %p138 = por %p136, %p137
      %p139 = scmp.ne.s32.totalorder %s130, %s131
      %p140 = scmp.eq.s32.totalorder %s33, 0
      %p141 = por %p139, %p140
      %p142 = scmp.ne.s32.totalorder %s130, %s131
      %p143 = scmp.eq.s32.totalorder %s34, 1
      %p144 = por %p142, %p143
      %p146 = scmp.ne.s32.totalorder %s131, %s145
      %p147 = scmp.eq.s32.totalorder %s34, 0
      %p148 = por %p146, %p147
      %s150 = sadd.s32 %s149, 1
      %p153 = scmp.eq.s32.totalorder %s28, 1
      %p154 = scmp.ne.s32.totalorder %s149, %s151
      %p155 = scmp.eq.s32.totalorder %s28, 0
      %p156 = por %p154, %p155
      %p157 = scmp.ne.s32.totalorder %s149, %s151
      %p158 = scmp.eq.s32.totalorder %s33, 1
      %p159 = por %p157, %p158
      %p160 = scmp.ne.s32.totalorder %s151, %s152
      %p161 = scmp.eq.s32.totalorder %s33, 0
      %p162 = por %p160, %p161
      %p163 = scmp.ne.s32.totalorder %s151, %s152
      %p164 = scmp.eq.s32.totalorder %s34, 1
      %p165 = por %p163, %p164
      %p167 = scmp.ne.s32.totalorder %s152, %s166
      %p168 = scmp.eq.s32.totalorder %s34, 0
      %p169 = por %p167, %p168
      %s171 = sadd.s32 %s170, 1
      %p174 = scmp.eq.s32.totalorder %s28, 1
      %p175 = scmp.ne.s32.totalorder %s170, %s172
      %p176 = scmp.eq.s32.totalorder %s28, 0
      %p177 = por %p175, %p176
      %p178 = scmp.ne.s32.totalorder %s170, %s172
      %p179 = scmp.eq.s32.totalorder %s33, 1
      %p180 = por %p178, %p179
      %p181 = scmp.ne.s32.totalorder %s172, %s173
      %p182 = scmp.eq.s32.totalorder %s33, 0
      %p183 = por %p181, %p182
      %p184 = scmp.ne.s32.totalorder %s172, %s173
      %p185 = scmp.eq.s32.totalorder %s34, 1
      %p186 = por %p184, %p185
      %p188 = scmp.ne.s32.totalorder %s173, %s187
      %p189 = scmp.eq.s32.totalorder %s34, 0
      %p190 = por %p188, %p189
      %s192 = sadd.s32 %s191, 1
      %p195 = scmp.eq.s32.totalorder %s28, 1
      %p196 = scmp.ne.s32.totalorder %s191, %s193
      %p197 = scmp.eq.s32.totalorder %s28, 0
      %p198 = por %p196, %p197
      %p199 = scmp.ne.s32.totalorder %s191, %s193
      %p200 = scmp.eq.s32.totalorder %s33, 1
      %p201 = por %p199, %p200
      %p202 = scmp.ne.s32.totalorder %s193, %s194
      %p203 = scmp.eq.s32.totalorder %s33, 0
      %p204 = por %p202, %p203
      %p205 = scmp.ne.s32.totalorder %s193, %s194
      %p206 = scmp.eq.s32.totalorder %s34, 1
      %p207 = por %p205, %p206
      %p209 = scmp.ne.s32.totalorder %s194, %s208
      %p210 = scmp.eq.s32.totalorder %s34, 0
      %p211 = por %p209, %p210
      %s213 = sadd.s32 %s212, 1
      %p216 = scmp.eq.s32.totalorder %s28, 1
      %p217 = scmp.ne.s32.totalorder %s212, %s214
      %p218 = scmp.eq.s32.totalorder %s28, 0
      %p219 = por %p217, %p218
      %p220 = scmp.ne.s32.totalorder %s212, %s214
      %p221 = scmp.eq.s32.totalorder %s33, 1
      %p222 = por %p220, %p221
      %p223 = scmp.ne.s32.totalorder %s214, %s215
      %p224 = scmp.eq.s32.totalorder %s33, 0
      %p225 = por %p223, %p224
      %p226 = scmp.ne.s32.totalorder %s214, %s215
      %p227 = scmp.eq.s32.totalorder %s34, 1
      %p228 = por %p226, %p227
      %p230 = scmp.ne.s32.totalorder %s215, %s229
      %p231 = scmp.eq.s32.totalorder %s34, 0
      %p232 = por %p230, %p231
      %s234 = sadd.s32 %s233, 1
      %p237 = scmp.eq.s32.totalorder %s28, 1
      %p238 = scmp.ne.s32.totalorder %s233, %s235
      %p239 = scmp.eq.s32.totalorder %s28, 0
      %p240 = por %p238, %p239
      %p241 = scmp.ne.s32.totalorder %s233, %s235
      %p242 = scmp.eq.s32.totalorder %s33, 1
      %p243 = por %p241, %p242
      %p244 = scmp.ne.s32.totalorder %s235, %s236
      %p245 = scmp.eq.s32.totalorder %s33, 0
      %p246 = por %p244, %p245
      %p247 = scmp.ne.s32.totalorder %s235, %s236
      %p248 = scmp.eq.s32.totalorder %s34, 1
      %p249 = por %p247, %p248
      %p251 = scmp.ne.s32.totalorder %s236, %s250
      %p252 = scmp.eq.s32.totalorder %s34, 0
      %p253 = por %p251, %p252
      %s255 = sadd.s32 %s254, 1
      %p258 = scmp.eq.s32.totalorder %s28, 1
      %p259 = scmp.ne.s32.totalorder %s254, %s256
      %p260 = scmp.eq.s32.totalorder %s28, 0
      %p261 = por %p259, %p260
      %p262 = scmp.ne.s32.totalorder %s254, %s256
      %p263 = scmp.eq.s32.totalorder %s33, 1
      %p264 = por %p262, %p263
      %p265 = scmp.ne.s32.totalorder %s256, %s257
      %p266 = scmp.eq.s32.totalorder %s33, 0
      %p267 = por %p265, %p266
      %p268 = scmp.ne.s32.totalorder %s256, %s257
      %p269 = scmp.eq.s32.totalorder %s34, 1
      %p270 = por %p268, %p269
      %p272 = scmp.ne.s32.totalorder %s257, %s271
      %p273 = scmp.eq.s32.totalorder %s34, 0
      %p274 = por %p272, %p273
      %s276 = sadd.s32 %s275, 1
      %p279 = scmp.eq.s32.totalorder %s28, 1
      %p280 = scmp.ne.s32.totalorder %s275, %s277
      %p281 = scmp.eq.s32.totalorder %s28, 0
      %p282 = por %p280, %p281
      %p283 = scmp.ne.s32.totalorder %s275, %s277
      %p284 = scmp.eq.s32.totalorder %s33, 1
      %p285 = por %p283, %p284
      %p286 = scmp.ne.s32.totalorder %s277, %s278
      %p287 = scmp.eq.s32.totalorder %s33, 0
      %p288 = por %p286, %p287
      %p289 = scmp.ne.s32.totalorder %s277, %s278
      %p290 = scmp.eq.s32.totalorder %s34, 1
      %p291 = por %p289, %p290
      %p293 = scmp.ne.s32.totalorder %s278, %s292
      %p294 = scmp.eq.s32.totalorder %s34, 0
      %p295 = por %p293, %p294
      %s296 = ssub.s32 %s35, %s47
      %s297 = ssub.s32 %s36, %s43
      %s298 = sor.u32 %s296, %s297
      %p299 = scmp.eq.s32.totalorder %s298, 0
      %s301 = sadd.s32 %s300, 1
      %s302 = scalar_select %p299, %s300, %s301
      %p305 = pneg %p299
      %p306 = scmp.eq.s32.totalorder %s28, 1
      %p307 = por %p305, %p306
      %p308 = scmp.ne.s32.totalorder %s300, %s303
      %p309 = scmp.eq.s32.totalorder %s28, 0
      %p310 = por %p308, %p309
      %p311 = scmp.ne.s32.totalorder %s300, %s303
      %p312 = scmp.eq.s32.totalorder %s33, 1
      %p313 = por %p311, %p312
      %p314 = scmp.ne.s32.totalorder %s303, %s304
      %p315 = scmp.eq.s32.totalorder %s33, 0
      %p316 = por %p314, %p315
      %p317 = scmp.ne.s32.totalorder %s303, %s304
      %p318 = scmp.eq.s32.totalorder %s34, 1
      %p319 = por %p317, %p318
      %p321 = scmp.ne.s32.totalorder %s304, %s320
      %p322 = scmp.eq.s32.totalorder %s34, 0
      %p323 = por %p321, %p322
      %p324 = scmp.le.s32.totalorder 1, %s28
      %p325 = scmp.lt.s32.totalorder %s28, 3
      %p326 = pnand %p324, %p325
      %p327 = pneg %p326
      // Predicated region
      $region9: #{tpu_custom_call.1} parent=5 // pred_check
        _
      $region10: #{tpu_custom_call.1} parent=5 // pred_check_branch
        %329 = sbr.rel (%p326) target = $region12
      $region11: #{tpu_custom_call.1} parent=5 // pred_region
        %s330 = ssub.s32 %s28, 1
        // Predicated region
        $region13: #{tpu_custom_call.1} parent=11 // pred_check
          %p331 = pneg %p141
        $region14: #{tpu_custom_call.1} parent=11 // pred_check_branch
          %333 = sbr.rel (%p331) target = $region16
        $region15: #{tpu_custom_call.1} parent=11 // pred_region
          %s335 = ssub.s32 512, 512
          %336 = vsyncadd [#allocation12], %s335
          %s337 = sshll.u32 [#allocation11], 4
          %s338 = int_to_ptr.vmem [resolvable:$true] %s337
          %343 = dma.hbm_to_vmem [thread:$0]  %s3, 512, %s338, [#allocation12], 128, 128, 8
        $region16: #{tpu_custom_call.1} parent=11 // pred_fallthru
          _
        // Predicated region
        $region17: #{tpu_custom_call.1} parent=11 // pred_check
          %p344 = pneg %p162
        $region18: #{tpu_custom_call.1} parent=11 // pred_check_branch
          %346 = sbr.rel (%p344) target = $region20
        $region19: #{tpu_custom_call.1} parent=11 // pred_region
          _
        $region20: #{tpu_custom_call.1} parent=11 // pred_fallthru
          _
        // Predicated region
        $region21: #{tpu_custom_call.1} parent=11 // pred_check
          %p347 = pneg %p183
        $region22: #{tpu_custom_call.1} parent=11 // pred_check_branch
          %349 = sbr.rel (%p347) target = $region24
        $region23: #{tpu_custom_call.1} parent=11 // pred_region
          %s351 = ssub.s32 512, 512
          %352 = vsyncadd [#allocation12], %s351
          %s353 = sshll.u32 [#allocation13], 4
          %s354 = int_to_ptr.vmem [resolvable:$true] %s353
          %359 = dma.hbm_to_vmem [thread:$0]  %s5, 512, %s354, [#allocation12], 128, 128, 8
        $region24: #{tpu_custom_call.1} parent=11 // pred_fallthru
          _
        // Predicated region
        $region25: #{tpu_custom_call.1} parent=11 // pred_check
          %p360 = pneg %p204
        $region26: #{tpu_custom_call.1} parent=11 // pred_check_branch
          %362 = sbr.rel (%p360) target = $region28
        $region27: #{tpu_custom_call.1} parent=11 // pred_region
          _
        $region28: #{tpu_custom_call.1} parent=11 // pred_fallthru
          _
        // Predicated region
        $region29: #{tpu_custom_call.1} parent=11 // pred_check
          %p363 = pneg %p225
        $region30: #{tpu_custom_call.1} parent=11 // pred_check_branch
          %365 = sbr.rel (%p363) target = $region32
        $region31: #{tpu_custom_call.1} parent=11 // pred_region
          %s367 = ssub.s32 512, 512
          %368 = vsyncadd [#allocation15], %s367
          %s369 = sshll.u32 [#allocation14], 4
          %s370 = int_to_ptr.vmem [resolvable:$true] %s369
          %375 = dma.hbm_to_vmem [thread:$0]  %s7, 512, %s370, [#allocation15], 128, 128, 8
        $region32: #{tpu_custom_call.1} parent=11 // pred_fallthru
          _
        // Predicated region
        $region33: #{tpu_custom_call.1} parent=11 // pred_check
          %p376 = pneg %p246
        $region34: #{tpu_custom_call.1} parent=11 // pred_check_branch
          %378 = sbr.rel (%p376) target = $region36
        $region35: #{tpu_custom_call.1} parent=11 // pred_region
          _
        $region36: #{tpu_custom_call.1} parent=11 // pred_fallthru
          _
        // Predicated region
        $region37: #{tpu_custom_call.1} parent=11 // pred_check
          %p379 = pneg %p267
        $region38: #{tpu_custom_call.1} parent=11 // pred_check_branch
          %381 = sbr.rel (%p379) target = $region40
        $region39: #{tpu_custom_call.1} parent=11 // pred_region
          %s383 = ssub.s32 512, 512
          %384 = vsyncadd [#allocation15], %s383
          %s385 = sshll.u32 [#allocation16], 4
          %s386 = int_to_ptr.vmem [resolvable:$true] %s385
          %391 = dma.hbm_to_vmem [thread:$0]  %s9, 512, %s386, [#allocation15], 128, 128, 8
        $region40: #{tpu_custom_call.1} parent=11 // pred_fallthru
          _
        // Predicated region
        $region41: #{tpu_custom_call.1} parent=11 // pred_check
          %p392 = pneg %p288
        $region42: #{tpu_custom_call.1} parent=11 // pred_check_branch
          %394 = sbr.rel (%p392) target = $region44
        $region43: #{tpu_custom_call.1} parent=11 // pred_region
          _
        $region44: #{tpu_custom_call.1} parent=11 // pred_fallthru
          _
      $region12: #{tpu_custom_call.1} parent=5 // pred_fallthru
        _
      %p395 = scmp.lt.s32.totalorder %s28, 2
      // Predicated region
      $region45: #{tpu_custom_call.1} parent=5 // pred_check
        %p396 = pneg %p395
      $region46: #{tpu_custom_call.1} parent=5 // pred_check_branch
        %398 = sbr.rel (%p396) target = $region48
      $region47: #{tpu_custom_call.1} parent=5 // pred_region
        // Predicated region
        $region49: #{tpu_custom_call.1} parent=47 // pred_check
          %p399 = pneg %p62
        $region50: #{tpu_custom_call.1} parent=47 // pred_check_branch
          %401 = sbr.rel (%p399) target = $region52
        $region51: #{tpu_custom_call.1} parent=47 // pred_region
          %s402 = sand.u32 %s52, 1
          %s403 = scalar_lea.sflag [#allocation6], %s402
          %s404 = sand.u32 %s52, 1
          %s405 = smul.addr %s404, 8
          %s406 = scalar_lea.vmem [#allocation5], %s405
          %s408 = ssub.s32 128, 128
          %409 = vsyncadd %s403, %s408
          %s410 = sadd.s32 %s36, %s35
          %s411 = smul.addr %s410, 128
          %s412 = scalar_lea.hbm %s0, %s411
          %s414 = sshll.u32 %s406, 4
          %s415 = int_to_ptr.vmem [resolvable:$true] %s414
          %417 = dma.hbm_to_vmem [thread:$0]  %s412, 128, %s415, %s403
        $region52: #{tpu_custom_call.1} parent=47 // pred_fallthru
          _
        // Predicated region
        $region53: #{tpu_custom_call.1} parent=47 // pred_check
          %p418 = pneg %p88
        $region54: #{tpu_custom_call.1} parent=47 // pred_check_branch
          %420 = sbr.rel (%p418) target = $region56
        $region55: #{tpu_custom_call.1} parent=47 // pred_region
          %s421 = sand.u32 %s28, 1
          %s422 = scalar_lea.sflag [#allocation9], %s421
          %s423 = sand.u32 %s78, 1
          %s424 = smul.addr %s423, 8
          %s425 = scalar_lea.vmem [#allocation8], %s424
          %s427 = ssub.s32 128, 128
          %428 = vsyncadd %s422, %s427
          %s429 = smul.addr %s35, 128
          %s430 = scalar_lea.hbm %s1, %s429
          %s432 = sshll.u32 %s425, 4
          %s433 = int_to_ptr.vmem [resolvable:$true] %s432
          %435 = dma.hbm_to_vmem [thread:$0]  %s430, 128, %s433, %s422
        $region56: #{tpu_custom_call.1} parent=47 // pred_fallthru
          _
        // Predicated region
        $region57: #{tpu_custom_call.1} parent=47 // pred_check
          %p436 = pneg %p114
        $region58: #{tpu_custom_call.1} parent=47 // pred_check_branch
          %438 = sbr.rel (%p436) target = $region60
        $region59: #{tpu_custom_call.1} parent=47 // pred_region
          %s439 = sand.u32 %s28, 1
          %s440 = scalar_lea.sflag [#allocation9], %s439
          %s441 = sand.u32 %s104, 1
          %s442 = smul.addr %s441, 8
          %s443 = scalar_lea.vmem [#allocation10], %s442
          %s445 = ssub.s32 128, 128
          %446 = vsyncadd %s440, %s445
          %s447 = smul.addr %s35, 128
          %s448 = scalar_lea.hbm %s2, %s447
          %s450 = sshll.u32 %s443, 4
          %s451 = int_to_ptr.vmem [resolvable:$true] %s450
          %453 = dma.hbm_to_vmem [thread:$0]  %s448, 128, %s451, %s440
        $region60: #{tpu_custom_call.1} parent=47 // pred_fallthru
          _
      $region48: #{tpu_custom_call.1} parent=5 // pred_fallthru
        _
      %p454 = scmp.le.s32.totalorder 1, %s28
      %p455 = scmp.lt.s32.totalorder %s28, 3
      %p456 = pnand %p454, %p455
      %p457 = pneg %p456
      // Predicated region
      $region61: #{tpu_custom_call.1} parent=5 // pred_check
        _
      $region62: #{tpu_custom_call.1} parent=5 // pred_check_branch
        %459 = sbr.rel (%p456) target = $region64
      $region63: #{tpu_custom_call.1} parent=5 // pred_region
        %s460 = ssub.s32 %s28, 1
        %s461 = sand.u32 %s55, 1
        %s462 = scalar_lea.sflag [#allocation6], %s461
        %s463 = sand.u32 %s55, 1
        %s464 = smul.addr %s463, 8
        %s465 = scalar_lea.vmem [#allocation5], %s464
        // Predicated region
        $region65: #{tpu_custom_call.1} parent=63 // pred_check
          %p466 = pneg %p68
        $region66: #{tpu_custom_call.1} parent=63 // pred_check_branch
          %468 = sbr.rel (%p466) target = $region68
        $region67: #{tpu_custom_call.1} parent=63 // pred_region
          %469 = dma.done %s462, 128
        $region68: #{tpu_custom_call.1} parent=63 // pred_fallthru
          _
        %s470 = sand.u32 %s33, 1
        %s471 = scalar_lea.sflag [#allocation9], %s470
        %s472 = sand.u32 %s81, 1
        %s473 = smul.addr %s472, 8
        %s474 = scalar_lea.vmem [#allocation8], %s473
        // Predicated region
        $region69: #{tpu_custom_call.1} parent=63 // pred_check
          %p475 = pneg %p94
        $region70: #{tpu_custom_call.1} parent=63 // pred_check_branch
          %477 = sbr.rel (%p475) target = $region72
        $region71: #{tpu_custom_call.1} parent=63 // pred_region
          %478 = dma.done %s471, 128
        $region72: #{tpu_custom_call.1} parent=63 // pred_fallthru
          _
        %s479 = sand.u32 %s33, 1
        %s480 = scalar_lea.sflag [#allocation9], %s479
        %s481 = sand.u32 %s107, 1
        %s482 = smul.addr %s481, 8
        %s483 = scalar_lea.vmem [#allocation10], %s482
        // Predicated region
        $region73: #{tpu_custom_call.1} parent=63 // pred_check
          %p484 = pneg %p120
        $region74: #{tpu_custom_call.1} parent=63 // pred_check_branch
          %486 = sbr.rel (%p484) target = $region76
        $region75: #{tpu_custom_call.1} parent=63 // pred_region
          %487 = dma.done %s480, 128
        $region76: #{tpu_custom_call.1} parent=63 // pred_fallthru
          _
        // Predicated region
        $region77: #{tpu_custom_call.1} parent=63 // pred_check
          %p488 = pneg %p141
        $region78: #{tpu_custom_call.1} parent=63 // pred_check_branch
          %490 = sbr.rel (%p488) target = $region80
        $region79: #{tpu_custom_call.1} parent=63 // pred_region
          %491 = dma.done [#allocation12], 512
        $region80: #{tpu_custom_call.1} parent=63 // pred_fallthru
          _
        // Predicated region
        $region81: #{tpu_custom_call.1} parent=63 // pred_check
          %p492 = pneg %p183
        $region82: #{tpu_custom_call.1} parent=63 // pred_check_branch
          %494 = sbr.rel (%p492) target = $region84
        $region83: #{tpu_custom_call.1} parent=63 // pred_region
          %495 = dma.done [#allocation12], 512
        $region84: #{tpu_custom_call.1} parent=63 // pred_fallthru
          _
        // Predicated region
        $region85: #{tpu_custom_call.1} parent=63 // pred_check
          %p496 = pneg %p225
        $region86: #{tpu_custom_call.1} parent=63 // pred_check_branch
          %498 = sbr.rel (%p496) target = $region88
        $region87: #{tpu_custom_call.1} parent=63 // pred_region
          %499 = dma.done [#allocation15], 512
        $region88: #{tpu_custom_call.1} parent=63 // pred_fallthru
          _
        // Predicated region
        $region89: #{tpu_custom_call.1} parent=63 // pred_check
          %p500 = pneg %p267
        $region90: #{tpu_custom_call.1} parent=63 // pred_check_branch
          %502 = sbr.rel (%p500) target = $region92
        $region91: #{tpu_custom_call.1} parent=63 // pred_region
          %503 = dma.done [#allocation15], 512
        $region92: #{tpu_custom_call.1} parent=63 // pred_fallthru
          _
        %s504 = sand.u32 %s55, 1
        %s505 = scalar_lea.sflag [#allocation6], %s504
        %s506 = sand.u32 %s55, 1
        %s507 = smul.addr %s506, 8
        %s508 = scalar_lea.vmem [#allocation5], %s507
        %p509 = pneg %p68
        %p510 = pneg %p65
        %s511 = sand.u32 %s33, 1
        %s512 = scalar_lea.sflag [#allocation9], %s511
        %s513 = sand.u32 %s81, 1
        %s514 = smul.addr %s513, 8
        %s515 = scalar_lea.vmem [#allocation8], %s514
        %p516 = pneg %p94
        %p517 = pneg %p91
        %s518 = sand.u32 %s33, 1
        %s519 = scalar_lea.sflag [#allocation9], %s518
        %s520 = sand.u32 %s107, 1
        %s521 = smul.addr %s520, 8
        %s522 = scalar_lea.vmem [#allocation10], %s521
        %p523 = pneg %p120
        %p524 = pneg %p117
        %p525 = pneg %p141
        %p526 = pneg %p138
        %p527 = pneg %p162
        %p528 = pneg %p159
        %p529 = pneg %p183
        %p530 = pneg %p180
        %p531 = pneg %p204
        %p532 = pneg %p201
        %p533 = pneg %p225
        %p534 = pneg %p222
        %p535 = pneg %p246
        %p536 = pneg %p243
        %p537 = pneg %p267
        %p538 = pneg %p264
        %p539 = pneg %p288
        %p540 = pneg %p285
        %p541 = pneg %p316
        %p542 = pneg %p313
        %s543 = sand.u32 %s303, 1
        %s544 = scalar_lea.sflag [#allocation7], %s543
        %s545 = sand.u32 %s303, 1
        %s546 = smul.addr %s545, 8
        %s547 = scalar_lea.vmem [#allocation17], %s546
        %p548 = scmp.eq.s32.totalorder %s38, 0
        // Predicated region
        $region93: #{tpu_custom_call.1} parent=63 // pred_check
          %p549 = pneg %p548
        $region94: #{tpu_custom_call.1} parent=63 // pred_check_branch
          %551 = sbr.rel (%p549) target = $region96
        $region95: #{tpu_custom_call.1} parent=63 // pred_region
          %v552 = vld [vmem:[%s474] sm:$0xff]
          %v553 = vld [vmem:[#allocation13] sm:$0xff]
          %v554 = vld [vmem:[#allocation13 + $0x8] sm:$0xff]
          %v555 = vld [vmem:[#allocation13 + $0x10] sm:$0xff]
          %v556 = vld [vmem:[#allocation13 + $0x18] sm:$0xff]
          %v557 = vld [vmem:[%s6] sm:$0x1]
          %v559 = vlaneseq
          %v560 = vshrl.u32 %v559, 7
          %v561 = vsub.s32 0, %v560
          %v562 = vrot.slane %v557, %v561
          %vm564 = vcmask 261120
          %v566 = vsel %vm564, %v552, 0
          %568 = vmatprep.subr.mxu0 0.0
          %569 = vmatpush1.msra.mxu0 0.0
          %570 = vmatprep.subr.mxu0 0.0
          %571 = vmatpush1.msra.mxu0 0.0
          %572 = vmatprep.subr.mxu0 0.0
          %573 = vmatpush1.msra.mxu0 0.0
          %574 = vmatprep.subr.mxu0 0.0
          %575 = vmatpush1.msra.mxu0 0.0
          %576 = vmatprep.subr.mxu0 0.0
          %577 = vmatpush1.msra.mxu0 0.0
          %578 = vmatprep.subr.mxu0 0.0
          %579 = vmatpush1.msra.mxu0 0.0
          %580 = vmatprep.subr.mxu0 0.0
          %581 = vmatpush1.msra.mxu0 0.0
          %582 = vmatprep.subr.mxu0 0.0
          %583 = vmatpush1.msra.mxu0 0.0
          %584 = vmatprep.subr.mxu0 0.0
          %585 = vmatpush1.msra.mxu0 0.0
          %586 = vmatprep.subr.mxu0 0.0
          %587 = vmatpush1.msra.mxu0 0.0
          %588 = vmatprep.subr.mxu0 0.0
          %589 = vmatpush1.msra.mxu0 0.0
          %590 = vmatprep.subr.mxu0 0.0
          %591 = vmatpush1.msra.mxu0 0.0
          %592 = vmatprep.subr.mxu0 0.0
          %593 = vmatpush1.msra.mxu0 %v556
          %594 = vmatprep.subr.mxu0 0.0
          %595 = vmatpush1.msra.mxu0 %v555
          %596 = vmatprep.subr.mxu0 0.0
          %597 = vmatpush1.msra.mxu0 %v554
          %598 = vmatprep.subr.mxu0 0.0
          %599 = vmatpush1.msra.mxu0 %v553
          %600 = vmatprep.subr.mxu0 0.0
          %601 = vmatpush2.msra.mxu0 0.0
          %602 = vmatprep.subr.mxu0 0.0
          %603 = vmatpush2.msra.mxu0 0.0
          %604 = vmatprep.subr.mxu0 0.0
          %605 = vmatpush2.msra.mxu0 0.0
          %606 = vmatprep.subr.mxu0 0.0
          %607 = vmatpush2.msra.mxu0 0.0
          %608 = vmatprep.subr.mxu0 0.0
          %609 = vmatpush2.msra.mxu0 0.0
          %610 = vmatprep.subr.mxu0 0.0
          %611 = vmatpush2.msra.mxu0 0.0
          %612 = vmatprep.subr.mxu0 0.0
          %613 = vmatpush2.msra.mxu0 0.0
          %614 = vmatprep.subr.mxu0 0.0
          %615 = vmatpush2.msra.mxu0 0.0
          %616 = vmatprep.subr.mxu0 0.0
          %617 = vmatpush2.msra.mxu0 0.0
          %618 = vmatprep.subr.mxu0 0.0
          %619 = vmatpush2.msra.mxu0 0.0
          %620 = vmatprep.subr.mxu0 0.0
          %621 = vmatpush2.msra.mxu0 0.0
          %622 = vmatprep.subr.mxu0 0.0
          %623 = vmatpush2.msra.mxu0 0.0
          %624 = vmatprep.subr.mxu0 0.0
          %625 = vmatpush2.msra.mxu0 0.0
          %626 = vmatprep.subr.mxu0 0.0
          %627 = vmatpush2.msra.mxu0 0.0
          %628 = vmatprep.subr.mxu0 0.0
          %629 = vmatpush2.msra.mxu0 0.0
          %630 = vmatprep.subr.mxu0 0.0
          %631 = vmatpush2.msra.mxu0 0.0
          %632 = vmatprep.mubr.f32.mxu0 0.0
          %633 = vmatmul.mubr.f32.gmra.mxu0 %v566
          %v634 = vpop.f32.mrf.mxu0
          %v635 = vadd.f32 %v562, %v634
          %v636 = vpop.f32.mrf.mxu0
          %637 = vdwg.mxu0
          %638 = vst.msk [vmem:[#allocation2] sm:$0xff] %vm564, %v635
          %v639 = vld [vmem:[%s483] sm:$0xff]
          %v640 = vld [vmem:[#allocation14] sm:$0xff]
          %v641 = vld [vmem:[#allocation14 + $0x8] sm:$0xff]
          %v642 = vld [vmem:[#allocation14 + $0x10] sm:$0xff]
          %v643 = vld [vmem:[#allocation14 + $0x18] sm:$0xff]
          %v644 = vld [vmem:[%s8] sm:$0x1]
          %v646 = vlaneseq
          %v647 = vshrl.u32 %v646, 7
          %v648 = vsub.s32 0, %v647
          %v649 = vrot.slane %v644, %v648
          %v652 = vsel %vm564, %v639, 0
          %654 = vmatprep.subr.mxu0 0.0
          %655 = vmatpush1.msra.mxu0 0.0
          %656 = vmatprep.subr.mxu0 0.0
          %657 = vmatpush1.msra.mxu0 0.0
          %658 = vmatprep.subr.mxu0 0.0
          %659 = vmatpush1.msra.mxu0 0.0
          %660 = vmatprep.subr.mxu0 0.0
          %661 = vmatpush1.msra.mxu0 0.0
          %662 = vmatprep.subr.mxu0 0.0
          %663 = vmatpush1.msra.mxu0 0.0
          %664 = vmatprep.subr.mxu0 0.0
          %665 = vmatpush1.msra.mxu0 0.0
          %666 = vmatprep.subr.mxu0 0.0
          %667 = vmatpush1.msra.mxu0 0.0
          %668 = vmatprep.subr.mxu0 0.0
          %669 = vmatpush1.msra.mxu0 0.0
          %670 = vmatprep.subr.mxu0 0.0
          %671 = vmatpush1.msra.mxu0 0.0
          %672 = vmatprep.subr.mxu0 0.0
          %673 = vmatpush1.msra.mxu0 0.0
          %674 = vmatprep.subr.mxu0 0.0
          %675 = vmatpush1.msra.mxu0 0.0
          %676 = vmatprep.subr.mxu0 0.0
          %677 = vmatpush1.msra.mxu0 0.0
          %678 = vmatprep.subr.mxu0 0.0
          %679 = vmatpush1.msra.mxu0 %v643
          %680 = vmatprep.subr.mxu0 0.0
          %681 = vmatpush1.msra.mxu0 %v642
          %682 = vmatprep.subr.mxu0 0.0
          %683 = vmatpush1.msra.mxu0 %v641
          %684 = vmatprep.subr.mxu0 0.0
          %685 = vmatpush1.msra.mxu0 %v640
          %686 = vmatprep.subr.mxu0 0.0
          %687 = vmatpush2.msra.mxu0 0.0
          %688 = vmatprep.subr.mxu0 0.0
          %689 = vmatpush2.msra.mxu0 0.0
          %690 = vmatprep.subr.mxu0 0.0
          %691 = vmatpush2.msra.mxu0 0.0
          %692 = vmatprep.subr.mxu0 0.0
          %693 = vmatpush2.msra.mxu0 0.0
          %694 = vmatprep.subr.mxu0 0.0
          %695 = vmatpush2.msra.mxu0 0.0
          %696 = vmatprep.subr.mxu0 0.0
          %697 = vmatpush2.msra.mxu0 0.0
          %698 = vmatprep.subr.mxu0 0.0
          %699 = vmatpush2.msra.mxu0 0.0
          %700 = vmatprep.subr.mxu0 0.0
          %701 = vmatpush2.msra.mxu0 0.0
          %702 = vmatprep.subr.mxu0 0.0
          %703 = vmatpush2.msra.mxu0 0.0
          %704 = vmatprep.subr.mxu0 0.0
          %705 = vmatpush2.msra.mxu0 0.0
          %706 = vmatprep.subr.mxu0 0.0
          %707 = vmatpush2.msra.mxu0 0.0
          %708 = vmatprep.subr.mxu0 0.0
          %709 = vmatpush2.msra.mxu0 0.0
          %710 = vmatprep.subr.mxu0 0.0
          %711 = vmatpush2.msra.mxu0 0.0
          %712 = vmatprep.subr.mxu0 0.0
          %713 = vmatpush2.msra.mxu0 0.0
          %714 = vmatprep.subr.mxu0 0.0
          %715 = vmatpush2.msra.mxu0 0.0
          %716 = vmatprep.subr.mxu0 0.0
          %717 = vmatpush2.msra.mxu0 0.0
          %718 = vmatprep.mubr.f32.mxu0 0.0
          %719 = vmatmul.mubr.f32.gmra.mxu0 %v652
          %v720 = vpop.f32.mrf.mxu0
          %v721 = vadd.f32 %v649, %v720
          %v722 = vpop.f32.mrf.mxu0
          %723 = vdwg.mxu0
          %724 = vst.msk [vmem:[#allocation3] sm:$0xff] %vm564, %v721
        $region96: #{tpu_custom_call.1} parent=63 // pred_fallthru
          _
        %vm725 = vcmask 261120
        %726 = vst.msk [vmem:[#allocation4] sm:$0xff] %vm725, 0.0
        %v727 = vld [vmem:[%s465] sm:$0xff]
        %v728 = vld [vmem:[#allocation11] sm:$0xff]
        %v729 = vld [vmem:[#allocation11 + $0x8] sm:$0xff]
        %v730 = vld [vmem:[#allocation11 + $0x10] sm:$0xff]
        %v731 = vld [vmem:[#allocation11 + $0x18] sm:$0xff]
        %v732 = vld [vmem:[%s4] sm:$0x1]
        %v734 = vlaneseq
        %v735 = vshrl.u32 %v734, 7
        %v736 = vsub.s32 0, %v735
        %v737 = vrot.slane %v732, %v736
        %v740 = vsel %vm725, %v727, 0
        %742 = vmatprep.subr.mxu0 0.0
        %743 = vmatpush1.msra.mxu0 0.0
        %744 = vmatprep.subr.mxu0 0.0
        %745 = vmatpush1.msra.mxu0 0.0
        %746 = vmatprep.subr.mxu0 0.0
        %747 = vmatpush1.msra.mxu0 0.0
        %748 = vmatprep.subr.mxu0 0.0
        %749 = vmatpush1.msra.mxu0 0.0
        %750 = vmatprep.subr.mxu0 0.0
        %751 = vmatpush1.msra.mxu0 0.0
        %752 = vmatprep.subr.mxu0 0.0
        %753 = vmatpush1.msra.mxu0 0.0
        %754 = vmatprep.subr.mxu0 0.0
        %755 = vmatpush1.msra.mxu0 0.0
        %756 = vmatprep.subr.mxu0 0.0
        %757 = vmatpush1.msra.mxu0 0.0
        %758 = vmatprep.subr.mxu0 0.0
        %759 = vmatpush1.msra.mxu0 0.0
        %760 = vmatprep.subr.mxu0 0.0
        %761 = vmatpush1.msra.mxu0 0.0
        %762 = vmatprep.subr.mxu0 0.0
        %763 = vmatpush1.msra.mxu0 0.0
        %764 = vmatprep.subr.mxu0 0.0
        %765 = vmatpush1.msra.mxu0 0.0
        %766 = vmatprep.subr.mxu0 0.0
        %767 = vmatpush1.msra.mxu0 %v731
        %768 = vmatprep.subr.mxu0 0.0
        %769 = vmatpush1.msra.mxu0 %v730
        %770 = vmatprep.subr.mxu0 0.0
        %771 = vmatpush1.msra.mxu0 %v729
        %772 = vmatprep.subr.mxu0 0.0
        %773 = vmatpush1.msra.mxu0 %v728
        %774 = vmatprep.subr.mxu0 0.0
        %775 = vmatpush2.msra.mxu0 0.0
        %776 = vmatprep.subr.mxu0 0.0
        %777 = vmatpush2.msra.mxu0 0.0
        %778 = vmatprep.subr.mxu0 0.0
        %779 = vmatpush2.msra.mxu0 0.0
        %780 = vmatprep.subr.mxu0 0.0
        %781 = vmatpush2.msra.mxu0 0.0
        %782 = vmatprep.subr.mxu0 0.0
        %783 = vmatpush2.msra.mxu0 0.0
        %784 = vmatprep.subr.mxu0 0.0
        %785 = vmatpush2.msra.mxu0 0.0
        %786 = vmatprep.subr.mxu0 0.0
        %787 = vmatpush2.msra.mxu0 0.0
        %788 = vmatprep.subr.mxu0 0.0
        %789 = vmatpush2.msra.mxu0 0.0
        %790 = vmatprep.subr.mxu0 0.0
        %791 = vmatpush2.msra.mxu0 0.0
        %792 = vmatprep.subr.mxu0 0.0
        %793 = vmatpush2.msra.mxu0 0.0
        %794 = vmatprep.subr.mxu0 0.0
        %795 = vmatpush2.msra.mxu0 0.0
        %796 = vmatprep.subr.mxu0 0.0
        %797 = vmatpush2.msra.mxu0 0.0
        %798 = vmatprep.subr.mxu0 0.0
        %799 = vmatpush2.msra.mxu0 0.0
        %800 = vmatprep.subr.mxu0 0.0
        %801 = vmatpush2.msra.mxu0 0.0
        %802 = vmatprep.subr.mxu0 0.0
        %803 = vmatpush2.msra.mxu0 0.0
        %804 = vmatprep.subr.mxu0 0.0
        %805 = vmatpush2.msra.mxu0 0.0
        %806 = vmatprep.mubr.f32.mxu0 0.0
        %807 = vmatmul.mubr.f32.gmra.mxu0 %v740
        %v808 = vpop.f32.mrf.mxu0
        %v809 = vadd.f32 %v737, %v808
        %v810 = vpop.f32.mrf.mxu0
        %811 = vdwg.mxu0
        %v812 = vld [vmem:[#allocation2] sm:$0xff]
        %vm813 = vcmask 64512
        %v815 = vsel %vm813, %v809, 0
        %v818 = vsel %vm813, %v812, 0
        %820 = vmatprep.subr.mxu0 0.0
        %821 = vmatpush1.xpose.msra.mxu0 0.0
        %822 = vmatprep.subr.mxu0 0.0
        %823 = vmatpush1.xpose.msra.mxu0 0.0
        %824 = vmatprep.subr.mxu0 0.0
        %825 = vmatpush1.xpose.msra.mxu0 0.0
        %826 = vmatprep.subr.mxu0 0.0
        %827 = vmatpush1.xpose.msra.mxu0 0.0
        %828 = vmatprep.subr.mxu0 0.0
        %829 = vmatpush1.xpose.msra.mxu0 0.0
        %830 = vmatprep.subr.mxu0 0.0
        %831 = vmatpush1.xpose.msra.mxu0 0.0
        %832 = vmatprep.subr.mxu0 0.0
        %833 = vmatpush1.xpose.msra.mxu0 0.0
        %834 = vmatprep.subr.mxu0 0.0
        %835 = vmatpush1.xpose.msra.mxu0 0.0
        %836 = vmatprep.subr.mxu0 0.0
        %837 = vmatpush1.xpose.msra.mxu0 0.0
        %838 = vmatprep.subr.mxu0 0.0
        %839 = vmatpush1.xpose.msra.mxu0 0.0
        %840 = vmatprep.subr.mxu0 0.0
        %841 = vmatpush1.xpose.msra.mxu0 0.0
        %842 = vmatprep.subr.mxu0 0.0
        %843 = vmatpush1.xpose.msra.mxu0 0.0
        %844 = vmatprep.subr.mxu0 0.0
        %845 = vmatpush1.xpose.msra.mxu0 0.0
        %846 = vmatprep.subr.mxu0 0.0
        %847 = vmatpush1.xpose.msra.mxu0 0.0
        %848 = vmatprep.subr.mxu0 0.0
        %849 = vmatpush1.xpose.msra.mxu0 0.0
        %850 = vmatprep.subr.mxu0 0.0
        %851 = vmatpush1.xpose.msra.mxu0 %v818
        %852 = vmatprep.subr.mxu0 0.0
        %853 = vmatpush2.xpose.msra.mxu0 0.0
        %854 = vmatprep.subr.mxu0 0.0
        %855 = vmatpush2.xpose.msra.mxu0 0.0
        %856 = vmatprep.subr.mxu0 0.0
        %857 = vmatpush2.xpose.msra.mxu0 0.0
        %858 = vmatprep.subr.mxu0 0.0
        %859 = vmatpush2.xpose.msra.mxu0 0.0
        %860 = vmatprep.subr.mxu0 0.0
        %861 = vmatpush2.xpose.msra.mxu0 0.0
        %862 = vmatprep.subr.mxu0 0.0
        %863 = vmatpush2.xpose.msra.mxu0 0.0
        %864 = vmatprep.subr.mxu0 0.0
        %865 = vmatpush2.xpose.msra.mxu0 0.0
        %866 = vmatprep.subr.mxu0 0.0
        %867 = vmatpush2.xpose.msra.mxu0 0.0
        %868 = vmatprep.subr.mxu0 0.0
        %869 = vmatpush2.xpose.msra.mxu0 0.0
        %870 = vmatprep.subr.mxu0 0.0
        %871 = vmatpush2.xpose.msra.mxu0 0.0
        %872 = vmatprep.subr.mxu0 0.0
        %873 = vmatpush2.xpose.msra.mxu0 0.0
        %874 = vmatprep.subr.mxu0 0.0
        %875 = vmatpush2.xpose.msra.mxu0 0.0
        %876 = vmatprep.subr.mxu0 0.0
        %877 = vmatpush2.xpose.msra.mxu0 0.0
        %878 = vmatprep.subr.mxu0 0.0
        %879 = vmatpush2.xpose.msra.mxu0 0.0
        %880 = vmatprep.subr.mxu0 0.0
        %881 = vmatpush2.xpose.msra.mxu0 0.0
        %882 = vmatprep.subr.mxu0 0.0
        %883 = vmatpush2.xpose.msra.mxu0 0.0
        %884 = vmatprep.mubr.f32.mxu0 0.0
        %885 = vmatmul.mubr.f32.gmra.mxu0 %v815
        %v886 = vpop.f32.mrf.mxu0
        %v887 = vadd.f32 0.0, %v886
        %v888 = vpop.f32.mrf.mxu0
        %889 = vdwg.mxu0
        %v890 = vsel %vm813, %v887, -inf
        %891 = vmax.xlane.f32.xlu0 %v890
        %v892 = vpop.xlane.xlu0 %891
        %v893 = vsub.f32 %v887, %v892
        %v894 = vmul.f32 %v893, 1.442695
        %v895 = vpow.pop %v894
        %v896 = vsel %vm813, %v895, 0.0
        %897 = vadd.xlane.f32.xlu0 %v896
        %v898 = vpop.xlane.xlu0 %897
        %v899 = vrcp.pop %v898
        %v900 = vld [vmem:[#allocation3] sm:$0xff]
        %v902 = vsel %vm813, %v895, 0
        %904 = vmatprep.subr.mxu0 0.0
        %905 = vmatpush1.msra.mxu0 0.0
        %906 = vmatprep.subr.mxu0 0.0
        %907 = vmatpush1.msra.mxu0 0.0
        %908 = vmatprep.subr.mxu0 0.0
        %909 = vmatpush1.msra.mxu0 0.0
        %910 = vmatprep.subr.mxu0 0.0
        %911 = vmatpush1.msra.mxu0 0.0
        %912 = vmatprep.subr.mxu0 0.0
        %913 = vmatpush1.msra.mxu0 0.0
        %914 = vmatprep.subr.mxu0 0.0
        %915 = vmatpush1.msra.mxu0 0.0
        %916 = vmatprep.subr.mxu0 0.0
        %917 = vmatpush1.msra.mxu0 0.0
        %918 = vmatprep.subr.mxu0 0.0
        %919 = vmatpush1.msra.mxu0 0.0
        %920 = vmatprep.subr.mxu0 0.0
        %921 = vmatpush1.msra.mxu0 0.0
        %922 = vmatprep.subr.mxu0 0.0
        %923 = vmatpush1.msra.mxu0 0.0
        %924 = vmatprep.subr.mxu0 0.0
        %925 = vmatpush1.msra.mxu0 0.0
        %926 = vmatprep.subr.mxu0 0.0
        %927 = vmatpush1.msra.mxu0 0.0
        %928 = vmatprep.subr.mxu0 0.0
        %929 = vmatpush1.msra.mxu0 0.0
        %930 = vmatprep.subr.mxu0 0.0
        %931 = vmatpush1.msra.mxu0 0.0
        %932 = vmatprep.subr.mxu0 0.0
        %933 = vmatpush1.msra.mxu0 0.0
        %934 = vmatprep.subr.mxu0 0.0
        %935 = vmatpush1.msra.mxu0 %v900
        %936 = vmatprep.subr.mxu0 0.0
        %937 = vmatpush2.msra.mxu0 0.0
        %938 = vmatprep.subr.mxu0 0.0
        %939 = vmatpush2.msra.mxu0 0.0
        %940 = vmatprep.subr.mxu0 0.0
        %941 = vmatpush2.msra.mxu0 0.0
        %942 = vmatprep.subr.mxu0 0.0
        %943 = vmatpush2.msra.mxu0 0.0
        %944 = vmatprep.subr.mxu0 0.0
        %945 = vmatpush2.msra.mxu0 0.0
        %946 = vmatprep.subr.mxu0 0.0
        %947 = vmatpush2.msra.mxu0 0.0
        %948 = vmatprep.subr.mxu0 0.0
        %949 = vmatpush2.msra.mxu0 0.0
        %950 = vmatprep.subr.mxu0 0.0
        %951 = vmatpush2.msra.mxu0 0.0
        %952 = vmatprep.subr.mxu0 0.0
        %953 = vmatpush2.msra.mxu0 0.0
        %954 = vmatprep.subr.mxu0 0.0
        %955 = vmatpush2.msra.mxu0 0.0
        %956 = vmatprep.subr.mxu0 0.0
        %957 = vmatpush2.msra.mxu0 0.0
        %958 = vmatprep.subr.mxu0 0.0
        %959 = vmatpush2.msra.mxu0 0.0
        %960 = vmatprep.subr.mxu0 0.0
        %961 = vmatpush2.msra.mxu0 0.0
        %962 = vmatprep.subr.mxu0 0.0
        %963 = vmatpush2.msra.mxu0 0.0
        %964 = vmatprep.subr.mxu0 0.0
        %965 = vmatpush2.msra.mxu0 0.0
        %966 = vmatprep.subr.mxu0 0.0
        %967 = vmatpush2.msra.mxu0 0.0
        %968 = vmatprep.mubr.f32.mxu0 0.0
        %969 = vmatmul.mubr.f32.gmra.mxu0 %v902
        %v970 = vpop.f32.mrf.mxu0
        %v971 = vadd.f32 0.0, %v970
        %v972 = vpop.f32.mrf.mxu0
        %973 = vdwg.mxu0
        %v974 = vmul.f32 %v971, %v899
        %975 = vrot.lane.b32.xlu0 %v809, 120
        %v976 = vpop.permute.xlu0 %975
        %977 = vrot.lane.b32.xlu0 %v812, 120
        %v978 = vpop.permute.xlu0 %977
        %v979 = vsel %vm813, %v976, 0
        %v981 = vsel %vm813, %v978, 0
        %983 = vmatprep.subr.mxu0 0.0
        %984 = vmatpush1.xpose.msra.mxu0 0.0
        %985 = vmatprep.subr.mxu0 0.0
        %986 = vmatpush1.xpose.msra.mxu0 0.0
        %987 = vmatprep.subr.mxu0 0.0
        %988 = vmatpush1.xpose.msra.mxu0 0.0
        %989 = vmatprep.subr.mxu0 0.0
        %990 = vmatpush1.xpose.msra.mxu0 0.0
        %991 = vmatprep.subr.mxu0 0.0
        %992 = vmatpush1.xpose.msra.mxu0 0.0
        %993 = vmatprep.subr.mxu0 0.0
        %994 = vmatpush1.xpose.msra.mxu0 0.0
        %995 = vmatprep.subr.mxu0 0.0
        %996 = vmatpush1.xpose.msra.mxu0 0.0
        %997 = vmatprep.subr.mxu0 0.0
        %998 = vmatpush1.xpose.msra.mxu0 0.0
        %999 = vmatprep.subr.mxu0 0.0
        %1000 = vmatpush1.xpose.msra.mxu0 0.0
        %1001 = vmatprep.subr.mxu0 0.0
        %1002 = vmatpush1.xpose.msra.mxu0 0.0
        %1003 = vmatprep.subr.mxu0 0.0
        %1004 = vmatpush1.xpose.msra.mxu0 0.0
        %1005 = vmatprep.subr.mxu0 0.0
        %1006 = vmatpush1.xpose.msra.mxu0 0.0
        %1007 = vmatprep.subr.mxu0 0.0
        %1008 = vmatpush1.xpose.msra.mxu0 0.0
        %1009 = vmatprep.subr.mxu0 0.0
        %1010 = vmatpush1.xpose.msra.mxu0 0.0
        %1011 = vmatprep.subr.mxu0 0.0
        %1012 = vmatpush1.xpose.msra.mxu0 0.0
        %1013 = vmatprep.subr.mxu0 0.0
        %1014 = vmatpush1.xpose.msra.mxu0 %v981
        %1015 = vmatprep.subr.mxu0 0.0
        %1016 = vmatpush2.xpose.msra.mxu0 0.0
        %1017 = vmatprep.subr.mxu0 0.0
        %1018 = vmatpush2.xpose.msra.mxu0 0.0
        %1019 = vmatprep.subr.mxu0 0.0
        %1020 = vmatpush2.xpose.msra.mxu0 0.0
        %1021 = vmatprep.subr.mxu0 0.0
        %1022 = vmatpush2.xpose.msra.mxu0 0.0
        %1023 = vmatprep.subr.mxu0 0.0
        %1024 = vmatpush2.xpose.msra.mxu0 0.0
        %1025 = vmatprep.subr.mxu0 0.0
        %1026 = vmatpush2.xpose.msra.mxu0 0.0
        %1027 = vmatprep.subr.mxu0 0.0
        %1028 = vmatpush2.xpose.msra.mxu0 0.0
        %1029 = vmatprep.subr.mxu0 0.0
        %1030 = vmatpush2.xpose.msra.mxu0 0.0
        %1031 = vmatprep.subr.mxu0 0.0
        %1032 = vmatpush2.xpose.msra.mxu0 0.0
        %1033 = vmatprep.subr.mxu0 0.0
        %1034 = vmatpush2.xpose.msra.mxu0 0.0
        %1035 = vmatprep.subr.mxu0 0.0
        %1036 = vmatpush2.xpose.msra.mxu0 0.0
        %1037 = vmatprep.subr.mxu0 0.0
        %1038 = vmatpush2.xpose.msra.mxu0 0.0
        %1039 = vmatprep.subr.mxu0 0.0
        %1040 = vmatpush2.xpose.msra.mxu0 0.0
        %1041 = vmatprep.subr.mxu0 0.0
        %1042 = vmatpush2.xpose.msra.mxu0 0.0
        %1043 = vmatprep.subr.mxu0 0.0
        %1044 = vmatpush2.xpose.msra.mxu0 0.0
        %1045 = vmatprep.subr.mxu0 0.0
        %1046 = vmatpush2.xpose.msra.mxu0 0.0
        %1047 = vmatprep.mubr.f32.mxu0 0.0
        %1048 = vmatmul.mubr.f32.gmra.mxu0 %v979
        %v1049 = vpop.f32.mrf.mxu0
        %v1050 = vadd.f32 0.0, %v1049
        %v1051 = vpop.f32.mrf.mxu0
        %1052 = vdwg.mxu0
        %v1053 = vsel %vm813, %v1050, -inf
        %1054 = vmax.xlane.f32.xlu0 %v1053
        %v1055 = vpop.xlane.xlu0 %1054
        %v1056 = vsub.f32 %v1050, %v1055
        %v1057 = vmul.f32 %v1056, 1.442695
        %v1058 = vpow.pop %v1057
        %v1059 = vsel %vm813, %v1058, 0.0
        %1060 = vadd.xlane.f32.xlu0 %v1059
        %v1061 = vpop.xlane.xlu0 %1060
        %v1062 = vrcp.pop %v1061
        %1064 = vrot.lane.b32.xlu0 %v900, 120
        %v1065 = vpop.permute.xlu0 %1064
        %v1068 = vsel %vm813, %v1058, 0
        %1070 = vmatprep.subr.mxu0 0.0
        %1071 = vmatpush1.msra.mxu0 0.0
        %1072 = vmatprep.subr.mxu0 0.0
        %1073 = vmatpush1.msra.mxu0 0.0
        %1074 = vmatprep.subr.mxu0 0.0
        %1075 = vmatpush1.msra.mxu0 0.0
        %1076 = vmatprep.subr.mxu0 0.0
        %1077 = vmatpush1.msra.mxu0 0.0
        %1078 = vmatprep.subr.mxu0 0.0
        %1079 = vmatpush1.msra.mxu0 0.0
        %1080 = vmatprep.subr.mxu0 0.0
        %1081 = vmatpush1.msra.mxu0 0.0
        %1082 = vmatprep.subr.mxu0 0.0
        %1083 = vmatpush1.msra.mxu0 0.0
        %1084 = vmatprep.subr.mxu0 0.0
        %1085 = vmatpush1.msra.mxu0 0.0
        %1086 = vmatprep.subr.mxu0 0.0
        %1087 = vmatpush1.msra.mxu0 0.0
        %1088 = vmatprep.subr.mxu0 0.0
        %1089 = vmatpush1.msra.mxu0 0.0
        %1090 = vmatprep.subr.mxu0 0.0
        %1091 = vmatpush1.msra.mxu0 0.0
        %1092 = vmatprep.subr.mxu0 0.0
        %1093 = vmatpush1.msra.mxu0 0.0
        %1094 = vmatprep.subr.mxu0 0.0
        %1095 = vmatpush1.msra.mxu0 0.0
        %1096 = vmatprep.subr.mxu0 0.0
        %1097 = vmatpush1.msra.mxu0 0.0
        %1098 = vmatprep.subr.mxu0 0.0
        %1099 = vmatpush1.msra.mxu0 0.0
        %1100 = vmatprep.subr.mxu0 0.0
        %1101 = vmatpush1.msra.mxu0 %v1065
        %1102 = vmatprep.subr.mxu0 0.0
        %1103 = vmatpush2.msra.mxu0 0.0
        %1104 = vmatprep.subr.mxu0 0.0
        %1105 = vmatpush2.msra.mxu0 0.0
        %1106 = vmatprep.subr.mxu0 0.0
        %1107 = vmatpush2.msra.mxu0 0.0
        %1108 = vmatprep.subr.mxu0 0.0
        %1109 = vmatpush2.msra.mxu0 0.0
        %1110 = vmatprep.subr.mxu0 0.0
        %1111 = vmatpush2.msra.mxu0 0.0
        %1112 = vmatprep.subr.mxu0 0.0
        %1113 = vmatpush2.msra.mxu0 0.0
        %1114 = vmatprep.subr.mxu0 0.0
        %1115 = vmatpush2.msra.mxu0 0.0
        %1116 = vmatprep.subr.mxu0 0.0
        %1117 = vmatpush2.msra.mxu0 0.0
        %1118 = vmatprep.subr.mxu0 0.0
        %1119 = vmatpush2.msra.mxu0 0.0
        %1120 = vmatprep.subr.mxu0 0.0
        %1121 = vmatpush2.msra.mxu0 0.0
        %1122 = vmatprep.subr.mxu0 0.0
        %1123 = vmatpush2.msra.mxu0 0.0
        %1124 = vmatprep.subr.mxu0 0.0
        %1125 = vmatpush2.msra.mxu0 0.0
        %1126 = vmatprep.subr.mxu0 0.0
        %1127 = vmatpush2.msra.mxu0 0.0
        %1128 = vmatprep.subr.mxu0 0.0
        %1129 = vmatpush2.msra.mxu0 0.0
        %1130 = vmatprep.subr.mxu0 0.0
        %1131 = vmatpush2.msra.mxu0 0.0
        %1132 = vmatprep.subr.mxu0 0.0
        %1133 = vmatpush2.msra.mxu0 0.0
        %1134 = vmatprep.mubr.f32.mxu0 0.0
        %1135 = vmatmul.mubr.f32.gmra.mxu0 %v1068
        %v1136 = vpop.f32.mrf.mxu0
        %v1137 = vadd.f32 0.0, %v1136
        %v1138 = vpop.f32.mrf.mxu0
        %1139 = vdwg.mxu0
        %v1140 = vmul.f32 %v1137, %v1062
        %1141 = vrot.lane.b32.xlu0 %v809, 112
        %v1142 = vpop.permute.xlu0 %1141
        %1143 = vrot.lane.b32.xlu0 %v812, 112
        %v1144 = vpop.permute.xlu0 %1143
        %v1145 = vsel %vm813, %v1142, 0
        %v1147 = vsel %vm813, %v1144, 0
        %1149 = vmatprep.subr.mxu0 0.0
        %1150 = vmatpush1.xpose.msra.mxu0 0.0
        %1151 = vmatprep.subr.mxu0 0.0
        %1152 = vmatpush1.xpose.msra.mxu0 0.0
        %1153 = vmatprep.subr.mxu0 0.0
        %1154 = vmatpush1.xpose.msra.mxu0 0.0
        %1155 = vmatprep.subr.mxu0 0.0
        %1156 = vmatpush1.xpose.msra.mxu0 0.0
        %1157 = vmatprep.subr.mxu0 0.0
        %1158 = vmatpush1.xpose.msra.mxu0 0.0
        %1159 = vmatprep.subr.mxu0 0.0
        %1160 = vmatpush1.xpose.msra.mxu0 0.0
        %1161 = vmatprep.subr.mxu0 0.0
        %1162 = vmatpush1.xpose.msra.mxu0 0.0
        %1163 = vmatprep.subr.mxu0 0.0
        %1164 = vmatpush1.xpose.msra.mxu0 0.0
        %1165 = vmatprep.subr.mxu0 0.0
        %1166 = vmatpush1.xpose.msra.mxu0 0.0
        %1167 = vmatprep.subr.mxu0 0.0
        %1168 = vmatpush1.xpose.msra.mxu0 0.0
        %1169 = vmatprep.subr.mxu0 0.0
        %1170 = vmatpush1.xpose.msra.mxu0 0.0
        %1171 = vmatprep.subr.mxu0 0.0
        %1172 = vmatpush1.xpose.msra.mxu0 0.0
        %1173 = vmatprep.subr.mxu0 0.0
        %1174 = vmatpush1.xpose.msra.mxu0 0.0
        %1175 = vmatprep.subr.mxu0 0.0
        %1176 = vmatpush1.xpose.msra.mxu0 0.0
        %1177 = vmatprep.subr.mxu0 0.0
        %1178 = vmatpush1.xpose.msra.mxu0 0.0
        %1179 = vmatprep.subr.mxu0 0.0
        %1180 = vmatpush1.xpose.msra.mxu0 %v1147
        %1181 = vmatprep.subr.mxu0 0.0
        %1182 = vmatpush2.xpose.msra.mxu0 0.0
        %1183 = vmatprep.subr.mxu0 0.0
        %1184 = vmatpush2.xpose.msra.mxu0 0.0
        %1185 = vmatprep.subr.mxu0 0.0
        %1186 = vmatpush2.xpose.msra.mxu0 0.0
        %1187 = vmatprep.subr.mxu0 0.0
        %1188 = vmatpush2.xpose.msra.mxu0 0.0
        %1189 = vmatprep.subr.mxu0 0.0
        %1190 = vmatpush2.xpose.msra.mxu0 0.0
        %1191 = vmatprep.subr.mxu0 0.0
        %1192 = vmatpush2.xpose.msra.mxu0 0.0
        %1193 = vmatprep.subr.mxu0 0.0
        %1194 = vmatpush2.xpose.msra.mxu0 0.0
        %1195 = vmatprep.subr.mxu0 0.0
        %1196 = vmatpush2.xpose.msra.mxu0 0.0
        %1197 = vmatprep.subr.mxu0 0.0
        %1198 = vmatpush2.xpose.msra.mxu0 0.0
        %1199 = vmatprep.subr.mxu0 0.0
        %1200 = vmatpush2.xpose.msra.mxu0 0.0
        %1201 = vmatprep.subr.mxu0 0.0
        %1202 = vmatpush2.xpose.msra.mxu0 0.0
        %1203 = vmatprep.subr.mxu0 0.0
        %1204 = vmatpush2.xpose.msra.mxu0 0.0
        %1205 = vmatprep.subr.mxu0 0.0
        %1206 = vmatpush2.xpose.msra.mxu0 0.0
        %1207 = vmatprep.subr.mxu0 0.0
        %1208 = vmatpush2.xpose.msra.mxu0 0.0
        %1209 = vmatprep.subr.mxu0 0.0
        %1210 = vmatpush2.xpose.msra.mxu0 0.0
        %1211 = vmatprep.subr.mxu0 0.0
        %1212 = vmatpush2.xpose.msra.mxu0 0.0
        %1213 = vmatprep.mubr.f32.mxu0 0.0
        %1214 = vmatmul.mubr.f32.gmra.mxu0 %v1145
        %v1215 = vpop.f32.mrf.mxu0
        %v1216 = vadd.f32 0.0, %v1215
        %v1217 = vpop.f32.mrf.mxu0
        %1218 = vdwg.mxu0
        %v1219 = vsel %vm813, %v1216, -inf
        %1220 = vmax.xlane.f32.xlu0 %v1219
        %v1221 = vpop.xlane.xlu0 %1220
        %v1222 = vsub.f32 %v1216, %v1221
        %v1223 = vmul.f32 %v1222, 1.442695
        %v1224 = vpow.pop %v1223
        %v1225 = vsel %vm813, %v1224, 0.0
        %1226 = vadd.xlane.f32.xlu0 %v1225
        %v1227 = vpop.xlane.xlu0 %1226
        %v1228 = vrcp.pop %v1227
        %1229 = vrot.lane.b32.xlu0 %v900, 112
        %v1230 = vpop.permute.xlu0 %1229
        %v1233 = vsel %vm813, %v1224, 0
        %1235 = vmatprep.subr.mxu0 0.0
        %1236 = vmatpush1.msra.mxu0 0.0
        %1237 = vmatprep.subr.mxu0 0.0
        %1238 = vmatpush1.msra.mxu0 0.0
        %1239 = vmatprep.subr.mxu0 0.0
        %1240 = vmatpush1.msra.mxu0 0.0
        %1241 = vmatprep.subr.mxu0 0.0
        %1242 = vmatpush1.msra.mxu0 0.0
        %1243 = vmatprep.subr.mxu0 0.0
        %1244 = vmatpush1.msra.mxu0 0.0
        %1245 = vmatprep.subr.mxu0 0.0
        %1246 = vmatpush1.msra.mxu0 0.0
        %1247 = vmatprep.subr.mxu0 0.0
        %1248 = vmatpush1.msra.mxu0 0.0
        %1249 = vmatprep.subr.mxu0 0.0
        %1250 = vmatpush1.msra.mxu0 0.0
        %1251 = vmatprep.subr.mxu0 0.0
        %1252 = vmatpush1.msra.mxu0 0.0
        %1253 = vmatprep.subr.mxu0 0.0
        %1254 = vmatpush1.msra.mxu0 0.0
        %1255 = vmatprep.subr.mxu0 0.0
        %1256 = vmatpush1.msra.mxu0 0.0
        %1257 = vmatprep.subr.mxu0 0.0
        %1258 = vmatpush1.msra.mxu0 0.0
        %1259 = vmatprep.subr.mxu0 0.0
        %1260 = vmatpush1.msra.mxu0 0.0
        %1261 = vmatprep.subr.mxu0 0.0
        %1262 = vmatpush1.msra.mxu0 0.0
        %1263 = vmatprep.subr.mxu0 0.0
        %1264 = vmatpush1.msra.mxu0 0.0
        %1265 = vmatprep.subr.mxu0 0.0
        %1266 = vmatpush1.msra.mxu0 %v1230
        %1267 = vmatprep.subr.mxu0 0.0
        %1268 = vmatpush2.msra.mxu0 0.0
        %1269 = vmatprep.subr.mxu0 0.0
        %1270 = vmatpush2.msra.mxu0 0.0
        %1271 = vmatprep.subr.mxu0 0.0
        %1272 = vmatpush2.msra.mxu0 0.0
        %1273 = vmatprep.subr.mxu0 0.0
        %1274 = vmatpush2.msra.mxu0 0.0
        %1275 = vmatprep.subr.mxu0 0.0
        %1276 = vmatpush2.msra.mxu0 0.0
        %1277 = vmatprep.subr.mxu0 0.0
        %1278 = vmatpush2.msra.mxu0 0.0
        %1279 = vmatprep.subr.mxu0 0.0
        %1280 = vmatpush2.msra.mxu0 0.0
        %1281 = vmatprep.subr.mxu0 0.0
        %1282 = vmatpush2.msra.mxu0 0.0
        %1283 = vmatprep.subr.mxu0 0.0
        %1284 = vmatpush2.msra.mxu0 0.0
        %1285 = vmatprep.subr.mxu0 0.0
        %1286 = vmatpush2.msra.mxu0 0.0
        %1287 = vmatprep.subr.mxu0 0.0
        %1288 = vmatpush2.msra.mxu0 0.0
        %1289 = vmatprep.subr.mxu0 0.0
        %1290 = vmatpush2.msra.mxu0 0.0
        %1291 = vmatprep.subr.mxu0 0.0
        %1292 = vmatpush2.msra.mxu0 0.0
        %1293 = vmatprep.subr.mxu0 0.0
        %1294 = vmatpush2.msra.mxu0 0.0
        %1295 = vmatprep.subr.mxu0 0.0
        %1296 = vmatpush2.msra.mxu0 0.0
        %1297 = vmatprep.subr.mxu0 0.0
        %1298 = vmatpush2.msra.mxu0 0.0
        %1299 = vmatprep.mubr.f32.mxu0 0.0
        %1300 = vmatmul.mubr.f32.gmra.mxu0 %v1233
        %v1301 = vpop.f32.mrf.mxu0
        %v1302 = vadd.f32 0.0, %v1301
        %v1303 = vpop.f32.mrf.mxu0
        %1304 = vdwg.mxu0
        %v1305 = vmul.f32 %v1302, %v1228
        %1306 = vrot.lane.b32.xlu0 %v809, 104
        %v1307 = vpop.permute.xlu0 %1306
        %1308 = vrot.lane.b32.xlu0 %v812, 104
        %v1309 = vpop.permute.xlu0 %1308
        %v1310 = vsel %vm813, %v1307, 0
        %v1312 = vsel %vm813, %v1309, 0
        %1314 = vmatprep.subr.mxu0 0.0
        %1315 = vmatpush1.xpose.msra.mxu0 0.0
        %1316 = vmatprep.subr.mxu0 0.0
        %1317 = vmatpush1.xpose.msra.mxu0 0.0
        %1318 = vmatprep.subr.mxu0 0.0
        %1319 = vmatpush1.xpose.msra.mxu0 0.0
        %1320 = vmatprep.subr.mxu0 0.0
        %1321 = vmatpush1.xpose.msra.mxu0 0.0
        %1322 = vmatprep.subr.mxu0 0.0
        %1323 = vmatpush1.xpose.msra.mxu0 0.0
        %1324 = vmatprep.subr.mxu0 0.0
        %1325 = vmatpush1.xpose.msra.mxu0 0.0
        %1326 = vmatprep.subr.mxu0 0.0
        %1327 = vmatpush1.xpose.msra.mxu0 0.0
        %1328 = vmatprep.subr.mxu0 0.0
        %1329 = vmatpush1.xpose.msra.mxu0 0.0
        %1330 = vmatprep.subr.mxu0 0.0
        %1331 = vmatpush1.xpose.msra.mxu0 0.0
        %1332 = vmatprep.subr.mxu0 0.0
        %1333 = vmatpush1.xpose.msra.mxu0 0.0
        %1334 = vmatprep.subr.mxu0 0.0
        %1335 = vmatpush1.xpose.msra.mxu0 0.0
        %1336 = vmatprep.subr.mxu0 0.0
        %1337 = vmatpush1.xpose.msra.mxu0 0.0
        %1338 = vmatprep.subr.mxu0 0.0
        %1339 = vmatpush1.xpose.msra.mxu0 0.0
        %1340 = vmatprep.subr.mxu0 0.0
        %1341 = vmatpush1.xpose.msra.mxu0 0.0
        %1342 = vmatprep.subr.mxu0 0.0
        %1343 = vmatpush1.xpose.msra.mxu0 0.0
        %1344 = vmatprep.subr.mxu0 0.0
        %1345 = vmatpush1.xpose.msra.mxu0 %v1312
        %1346 = vmatprep.subr.mxu0 0.0
        %1347 = vmatpush2.xpose.msra.mxu0 0.0
        %1348 = vmatprep.subr.mxu0 0.0
        %1349 = vmatpush2.xpose.msra.mxu0 0.0
        %1350 = vmatprep.subr.mxu0 0.0
        %1351 = vmatpush2.xpose.msra.mxu0 0.0
        %1352 = vmatprep.subr.mxu0 0.0
        %1353 = vmatpush2.xpose.msra.mxu0 0.0
        %1354 = vmatprep.subr.mxu0 0.0
        %1355 = vmatpush2.xpose.msra.mxu0 0.0
        %1356 = vmatprep.subr.mxu0 0.0
        %1357 = vmatpush2.xpose.msra.mxu0 0.0
        %1358 = vmatprep.subr.mxu0 0.0
        %1359 = vmatpush2.xpose.msra.mxu0 0.0
        %1360 = vmatprep.subr.mxu0 0.0
        %1361 = vmatpush2.xpose.msra.mxu0 0.0
        %1362 = vmatprep.subr.mxu0 0.0
        %1363 = vmatpush2.xpose.msra.mxu0 0.0
        %1364 = vmatprep.subr.mxu0 0.0
        %1365 = vmatpush2.xpose.msra.mxu0 0.0
        %1366 = vmatprep.subr.mxu0 0.0
        %1367 = vmatpush2.xpose.msra.mxu0 0.0
        %1368 = vmatprep.subr.mxu0 0.0
        %1369 = vmatpush2.xpose.msra.mxu0 0.0
        %1370 = vmatprep.subr.mxu0 0.0
        %1371 = vmatpush2.xpose.msra.mxu0 0.0
        %1372 = vmatprep.subr.mxu0 0.0
        %1373 = vmatpush2.xpose.msra.mxu0 0.0
        %1374 = vmatprep.subr.mxu0 0.0
        %1375 = vmatpush2.xpose.msra.mxu0 0.0
        %1376 = vmatprep.subr.mxu0 0.0
        %1377 = vmatpush2.xpose.msra.mxu0 0.0
        %1378 = vmatprep.mubr.f32.mxu0 0.0
        %1379 = vmatmul.mubr.f32.gmra.mxu0 %v1310
        %v1380 = vpop.f32.mrf.mxu0
        %v1381 = vadd.f32 0.0, %v1380
        %v1382 = vpop.f32.mrf.mxu0
        %1383 = vdwg.mxu0
        %v1384 = vsel %vm813, %v1381, -inf
        %1385 = vmax.xlane.f32.xlu0 %v1384
        %v1386 = vpop.xlane.xlu0 %1385
        %v1387 = vsub.f32 %v1381, %v1386
        %v1388 = vmul.f32 %v1387, 1.442695
        %v1389 = vpow.pop %v1388
        %v1390 = vsel %vm813, %v1389, 0.0
        %1391 = vadd.xlane.f32.xlu0 %v1390
        %v1392 = vpop.xlane.xlu0 %1391
        %v1393 = vrcp.pop %v1392
        %1394 = vrot.lane.b32.xlu0 %v900, 104
        %v1395 = vpop.permute.xlu0 %1394
        %v1398 = vsel %vm813, %v1389, 0
        %1400 = vmatprep.subr.mxu0 0.0
        %1401 = vmatpush1.msra.mxu0 0.0
        %1402 = vmatprep.subr.mxu0 0.0
        %1403 = vmatpush1.msra.mxu0 0.0
        %1404 = vmatprep.subr.mxu0 0.0
        %1405 = vmatpush1.msra.mxu0 0.0
        %1406 = vmatprep.subr.mxu0 0.0
        %1407 = vmatpush1.msra.mxu0 0.0
        %1408 = vmatprep.subr.mxu0 0.0
        %1409 = vmatpush1.msra.mxu0 0.0
        %1410 = vmatprep.subr.mxu0 0.0
        %1411 = vmatpush1.msra.mxu0 0.0
        %1412 = vmatprep.subr.mxu0 0.0
        %1413 = vmatpush1.msra.mxu0 0.0
        %1414 = vmatprep.subr.mxu0 0.0
        %1415 = vmatpush1.msra.mxu0 0.0
        %1416 = vmatprep.subr.mxu0 0.0
        %1417 = vmatpush1.msra.mxu0 0.0
        %1418 = vmatprep.subr.mxu0 0.0
        %1419 = vmatpush1.msra.mxu0 0.0
        %1420 = vmatprep.subr.mxu0 0.0
        %1421 = vmatpush1.msra.mxu0 0.0
        %1422 = vmatprep.subr.mxu0 0.0
        %1423 = vmatpush1.msra.mxu0 0.0
        %1424 = vmatprep.subr.mxu0 0.0
        %1425 = vmatpush1.msra.mxu0 0.0
        %1426 = vmatprep.subr.mxu0 0.0
        %1427 = vmatpush1.msra.mxu0 0.0
        %1428 = vmatprep.subr.mxu0 0.0
        %1429 = vmatpush1.msra.mxu0 0.0
        %1430 = vmatprep.subr.mxu0 0.0
        %1431 = vmatpush1.msra.mxu0 %v1395
        %1432 = vmatprep.subr.mxu0 0.0
        %1433 = vmatpush2.msra.mxu0 0.0
        %1434 = vmatprep.subr.mxu0 0.0
        %1435 = vmatpush2.msra.mxu0 0.0
        %1436 = vmatprep.subr.mxu0 0.0
        %1437 = vmatpush2.msra.mxu0 0.0
        %1438 = vmatprep.subr.mxu0 0.0
        %1439 = vmatpush2.msra.mxu0 0.0
        %1440 = vmatprep.subr.mxu0 0.0
        %1441 = vmatpush2.msra.mxu0 0.0
        %1442 = vmatprep.subr.mxu0 0.0
        %1443 = vmatpush2.msra.mxu0 0.0
        %1444 = vmatprep.subr.mxu0 0.0
        %1445 = vmatpush2.msra.mxu0 0.0
        %1446 = vmatprep.subr.mxu0 0.0
        %1447 = vmatpush2.msra.mxu0 0.0
        %1448 = vmatprep.subr.mxu0 0.0
        %1449 = vmatpush2.msra.mxu0 0.0
        %1450 = vmatprep.subr.mxu0 0.0
        %1451 = vmatpush2.msra.mxu0 0.0
        %1452 = vmatprep.subr.mxu0 0.0
        %1453 = vmatpush2.msra.mxu0 0.0
        %1454 = vmatprep.subr.mxu0 0.0
        %1455 = vmatpush2.msra.mxu0 0.0
        %1456 = vmatprep.subr.mxu0 0.0
        %1457 = vmatpush2.msra.mxu0 0.0
        %1458 = vmatprep.subr.mxu0 0.0
        %1459 = vmatpush2.msra.mxu0 0.0
        %1460 = vmatprep.subr.mxu0 0.0
        %1461 = vmatpush2.msra.mxu0 0.0
        %1462 = vmatprep.subr.mxu0 0.0
        %1463 = vmatpush2.msra.mxu0 0.0
        %1464 = vmatprep.mubr.f32.mxu0 0.0
        %1465 = vmatmul.mubr.f32.gmra.mxu0 %v1398
        %v1466 = vpop.f32.mrf.mxu0
        %v1467 = vadd.f32 0.0, %v1466
        %v1468 = vpop.f32.mrf.mxu0
        %1469 = vdwg.mxu0
        %v1470 = vmul.f32 %v1467, %v1393
        %1472 = vrot.lane.b32.xlu0 %v1140, 8
        %v1473 = vpop.permute.xlu0 %1472
        %1476 = vrot.lane.b32.xlu0 %v1305, 16
        %v1477 = vpop.permute.xlu0 %1476
        %1480 = vrot.lane.b32.xlu0 %v1470, 24
        %v1481 = vpop.permute.xlu0 %1480
        %v1483 = vsel %vm813, %v974, %v1473
        %vm1484 = vcmask 130048
        %v1485 = vsel %vm1484, %v1483, %v1477
        %vm1486 = vcmask 195584
        %v1487 = vsel %vm1486, %v1485, %v1481
        %v1488 = vld [vmem:[#allocation4] sm:$0xff]
        %v1489 = vld [vmem:[#allocation16] sm:$0xff]
        %v1490 = vld [vmem:[#allocation16 + $0x8] sm:$0xff]
        %v1491 = vld [vmem:[#allocation16 + $0x10] sm:$0xff]
        %v1492 = vld [vmem:[#allocation16 + $0x18] sm:$0xff]
        %v1494 = vsel %vm725, %v1487, 0
        %1496 = vmatprep.subr.mxu0 0.0
        %1497 = vmatpush1.msra.mxu0 0.0
        %1498 = vmatprep.subr.mxu0 0.0
        %1499 = vmatpush1.msra.mxu0 0.0
        %1500 = vmatprep.subr.mxu0 0.0
        %1501 = vmatpush1.msra.mxu0 0.0
        %1502 = vmatprep.subr.mxu0 0.0
        %1503 = vmatpush1.msra.mxu0 0.0
        %1504 = vmatprep.subr.mxu0 0.0
        %1505 = vmatpush1.msra.mxu0 0.0
        %1506 = vmatprep.subr.mxu0 0.0
        %1507 = vmatpush1.msra.mxu0 0.0
        %1508 = vmatprep.subr.mxu0 0.0
        %1509 = vmatpush1.msra.mxu0 0.0
        %1510 = vmatprep.subr.mxu0 0.0
        %1511 = vmatpush1.msra.mxu0 0.0
        %1512 = vmatprep.subr.mxu0 0.0
        %1513 = vmatpush1.msra.mxu0 0.0
        %1514 = vmatprep.subr.mxu0 0.0
        %1515 = vmatpush1.msra.mxu0 0.0
        %1516 = vmatprep.subr.mxu0 0.0
        %1517 = vmatpush1.msra.mxu0 0.0
        %1518 = vmatprep.subr.mxu0 0.0
        %1519 = vmatpush1.msra.mxu0 0.0
        %1520 = vmatprep.subr.mxu0 0.0
        %1521 = vmatpush1.msra.mxu0 %v1492
        %1522 = vmatprep.subr.mxu0 0.0
        %1523 = vmatpush1.msra.mxu0 %v1491
        %1524 = vmatprep.subr.mxu0 0.0
        %1525 = vmatpush1.msra.mxu0 %v1490
        %1526 = vmatprep.subr.mxu0 0.0
        %1527 = vmatpush1.msra.mxu0 %v1489
        %1528 = vmatprep.subr.mxu0 0.0
        %1529 = vmatpush2.msra.mxu0 0.0
        %1530 = vmatprep.subr.mxu0 0.0
        %1531 = vmatpush2.msra.mxu0 0.0
        %1532 = vmatprep.subr.mxu0 0.0
        %1533 = vmatpush2.msra.mxu0 0.0
        %1534 = vmatprep.subr.mxu0 0.0
        %1535 = vmatpush2.msra.mxu0 0.0
        %1536 = vmatprep.subr.mxu0 0.0
        %1537 = vmatpush2.msra.mxu0 0.0
        %1538 = vmatprep.subr.mxu0 0.0
        %1539 = vmatpush2.msra.mxu0 0.0
        %1540 = vmatprep.subr.mxu0 0.0
        %1541 = vmatpush2.msra.mxu0 0.0
        %1542 = vmatprep.subr.mxu0 0.0
        %1543 = vmatpush2.msra.mxu0 0.0
        %1544 = vmatprep.subr.mxu0 0.0
        %1545 = vmatpush2.msra.mxu0 0.0
        %1546 = vmatprep.subr.mxu0 0.0
        %1547 = vmatpush2.msra.mxu0 0.0
        %1548 = vmatprep.subr.mxu0 0.0
        %1549 = vmatpush2.msra.mxu0 0.0
        %1550 = vmatprep.subr.mxu0 0.0
        %1551 = vmatpush2.msra.mxu0 0.0
        %1552 = vmatprep.subr.mxu0 0.0
        %1553 = vmatpush2.msra.mxu0 0.0
        %1554 = vmatprep.subr.mxu0 0.0
        %1555 = vmatpush2.msra.mxu0 0.0
        %1556 = vmatprep.subr.mxu0 0.0
        %1557 = vmatpush2.msra.mxu0 0.0
        %1558 = vmatprep.subr.mxu0 0.0
        %1559 = vmatpush2.msra.mxu0 0.0
        %1560 = vmatprep.mubr.f32.mxu0 0.0
        %1561 = vmatmul.mubr.f32.gmra.mxu0 %v1494
        %v1562 = vpop.f32.mrf.mxu0
        %v1563 = vadd.f32 0.0, %v1562
        %v1564 = vpop.f32.mrf.mxu0
        %1565 = vdwg.mxu0
        %v1566 = vadd.f32 %v1488, %v1563
        %1567 = vst.msk [vmem:[#allocation4] sm:$0xff] %vm725, %v1566
        %v1568 = vld [vmem:[#allocation4] sm:$0xff]
        %v1569 = vld [vmem:[%s10] sm:$0x1]
        %v1571 = vlaneseq
        %v1572 = vshrl.u32 %v1571, 7
        %v1573 = vsub.s32 0, %v1572
        %v1574 = vrot.slane %v1569, %v1573
        %v1576 = vadd.f32 %v1568, %v1574
        %1577 = vst.msk [vmem:[%s547] sm:$0xff] %vm725, %v1576
        %s1578 = sand.u32 %s303, 1
        %s1579 = scalar_lea.sflag [#allocation7], %s1578
        %s1580 = sand.u32 %s303, 1
        %s1581 = smul.addr %s1580, 8
        %s1582 = scalar_lea.vmem [#allocation17], %s1581
        // Predicated region
        $region97: #{tpu_custom_call.1} parent=63 // pred_check
          %p1583 = pneg %p313
        $region98: #{tpu_custom_call.1} parent=63 // pred_check_branch
          %1585 = sbr.rel (%p1583) target = $region100
        $region99: #{tpu_custom_call.1} parent=63 // pred_region
          %s1587 = ssub.s32 128, 128
          %1588 = vsyncadd %s1579, %s1587
          %s1589 = sadd.s32 %s38, %s37
          %s1590 = smul.addr %s1589, 128
          %s1591 = scalar_lea.hbm %s11, %s1590
          %s1593 = sshll.u32 %s1582, 4
          %s1594 = int_to_ptr.vmem [resolvable:$true] %s1593
          %1596 = dma.vmem_to_hbm [thread:$0]  %s1594, 128, %s1591, %s1579
        $region100: #{tpu_custom_call.1} parent=63 // pred_fallthru
          _
      $region64: #{tpu_custom_call.1} parent=5 // pred_fallthru
        _
      %p1597 = scmp.le.s32.totalorder 2, %s28
      // Predicated region
      $region101: #{tpu_custom_call.1} parent=5 // pred_check
        %p1598 = pneg %p1597
      $region102: #{tpu_custom_call.1} parent=5 // pred_check_branch
        %1600 = sbr.rel (%p1598) target = $region104
      $region103: #{tpu_custom_call.1} parent=5 // pred_region
        %s1601 = ssub.s32 %s28, 2
        // Predicated region
        $region105: #{tpu_custom_call.1} parent=103 // pred_check
          %p1602 = pneg %p319
        $region106: #{tpu_custom_call.1} parent=103 // pred_check_branch
          %1604 = sbr.rel (%p1602) target = $region108
        $region107: #{tpu_custom_call.1} parent=103 // pred_region
          %s1605 = sand.u32 %s304, 1
          %s1606 = scalar_lea.sflag [#allocation7], %s1605
          %s1607 = sand.u32 %s304, 1
          %s1608 = smul.addr %s1607, 8
          %s1609 = scalar_lea.vmem [#allocation17], %s1608
          %1610 = dma.done %s1606, 128
        $region108: #{tpu_custom_call.1} parent=103 // pred_fallthru
          _
      $region104: #{tpu_custom_call.1} parent=5 // pred_fallthru
        _
    $region6: #{tpu_custom_call.1} parent=1 // loop_footer
      %s32 = sadd.s32 1, %s28
    $region7: #{tpu_custom_call.1} parent=1 // loop_footer_branch
      %27 = sbr.rel target = $region3
    $region8: #{tpu_custom_call.1} parent=1 // loop_exit
      _
    %1611 = vsyncpa [#allocation6], 1
    %s1612 = scalar_lea.sflag [#allocation6], 1
    %1613 = vsyncpa %s1612, 1
    %1614 = vsyncpa [#allocation9], 1
    %s1615 = scalar_lea.sflag [#allocation9], 1
    %1616 = vsyncpa %s1615, 1
    %1617 = vsyncpa [#allocation12], 1
    %1618 = vsyncpa [#allocation15], 1
    %1619 = vsyncpa [#allocation7], 1
    %s1620 = scalar_lea.sflag [#allocation7], 1
    %1621 = vsyncpa %s1620, 1

// kernel: tpu_custom_call.1
$region0: #{tpu_custom_call.1}
  #allocation0 [shape = 'u32[]', space=smem, size = 0x4, offset = 0x4, fixed_abs, tag = 'smem constant byte address 0x4 - core index']
  #allocation1 [shape = 'u32[144,128]{1,0:T(1,128)}', space=vmem, size = 0x12000, scoped, tag = 'internal scratch']
  #allocation2 [shape = 'f32[1,8,32]{2,1,0:T(8,128)}', space=vmem, size = 0x1000, scoped, tag = 'scratch operand']
  #allocation3 [shape = 'f32[1,8,32]{2,1,0:T(8,128)}', space=vmem, size = 0x1000, scoped, tag = 'scratch operand']
  #allocation4 [shape = 'f32[8,32]{1,0:T(8,128)}', space=vmem, size = 0x1000, scoped, tag = 'scratch operand']
  %s0 = inlined_call_operand.hbm [shape: f32[2,8,32], index: 0, kind: input, shape index: {}]
  %s1 = inlined_call_operand.hbm [shape: f32[2,8,32], index: 1, kind: input, shape index: {}]
  %s2 = inlined_call_operand.hbm [shape: f32[2,8,32], index: 2, kind: input, shape index: {}]
  %s3 = inlined_call_operand.hbm [shape: f32[1,32,32], index: 3, kind: input, shape index: {}]
  %s4 = inlined_call_operand.vmem [shape: f32[1,1,32], index: 4, kind: input, shape index: {}]
  %s5 = inlined_call_operand.hbm [shape: f32[1,32,32], index: 5, kind: input, shape index: {}]
  %s6 = inlined_call_operand.vmem [shape: f32[1,1,32], index: 6, kind: input, shape index: {}]
  %s7 = inlined_call_operand.hbm [shape: f32[1,32,32], index: 7, kind: input, shape index: {}]
  %s8 = inlined_call_operand.vmem [shape: f32[1,1,32], index: 8, kind: input, shape index: {}]
  %s9 = inlined_call_operand.hbm [shape: f32[1,32,32], index: 9, kind: input, shape index: {}]
  %s10 = inlined_call_operand.vmem [shape: f32[1,32], index: 10, kind: input, shape index: {}]
  %s11 = inlined_call_operand.hbm [shape: f32[2,8,32], index: 11, kind: output, shape index: {}]
  %s12 = sld [smem:[#allocation0]]
  $region109: #{tpu_custom_call.1} parent=0
    _
  %s14 = ssub.s32 1, %s12
  %s15 = scalar_select 0, %s14, %s12
  $region1: #{tpu_custom_call.1} parent=0
    #allocation5 [shape = 'u8[8192]{0}', space=vmem, size = 0x2000, scoped, tag = 'input window, operand 0']
    #allocation6 [shape = 's32[2]{0}', space=sflag, size = 0x8, scoped, tag = 'scoped memory for tpu_custom_call.1']
    #allocation7 [shape = 's32[2]{0}', space=sflag, size = 0x8, scoped, tag = 'scoped memory for tpu_custom_call.1']
    #allocation8 [shape = 'u8[8192]{0}', space=vmem, size = 0x2000, scoped, tag = 'input window, operand 1']
    #allocation9 [shape = 's32[2]{0}', space=sflag, size = 0x8, scoped, tag = 'scoped memory for tpu_custom_call.1']
    #allocation10 [shape = 'u8[8192]{0}', space=vmem, size = 0x2000, scoped, tag = 'input window, operand 2']
    #allocation11 [shape = 'u8[16384]{0}', space=vmem, size = 0x4000, scoped, tag = 'input window, operand 3, single buffered']
    #allocation12 [shape = 's32[1]{0}', space=sflag, size = 0x4, scoped, tag = 'scoped memory for tpu_custom_call.1']
    #allocation13 [shape = 'u8[16384]{0}', space=vmem, size = 0x4000, scoped, tag = 'input window, operand 5, single buffered']
    #allocation14 [shape = 'u8[16384]{0}', space=vmem, size = 0x4000, scoped, tag = 'input window, operand 7, single buffered']
    #allocation15 [shape = 's32[1]{0}', space=sflag, size = 0x4, scoped, tag = 'scoped memory for tpu_custom_call.1']
    #allocation16 [shape = 'u8[16384]{0}', space=vmem, size = 0x4000, scoped, tag = 'input window, operand 9, single buffered']
    #allocation17 [shape = 'u8[8192]{0}', space=vmem, size = 0x2000, scoped, tag = 'output window, operand 0']
    %16 = vsyncpa [#allocation6], 0
    %s17 = scalar_lea.sflag [#allocation6], 1
    %18 = vsyncpa %s17, 0
    %19 = vsyncpa [#allocation9], 0
    %s20 = scalar_lea.sflag [#allocation9], 1
    %21 = vsyncpa %s20, 0
    %22 = vsyncpa [#allocation12], 0
    %23 = vsyncpa [#allocation15], 0
    %24 = vsyncpa [#allocation7], 0
    %s25 = scalar_lea.sflag [#allocation7], 1
    %26 = vsyncpa %s25, 0
    loop: start=0, step=1, limit=4
    $region2: #{tpu_custom_call.1} parent=1 // loop_pre_header
      _
    $region3: #{tpu_custom_call.1} parent=1 // loop_header
      %s28 = sphi 0, %s32
      %p29 = scmp.ge.s32.totalorder %s28, 4
      %s35 = sphi 0, %s47
      %s36 = sphi 0, %s43
      %s37 = sphi 0, %s35
      %s38 = sphi 0, %s36
      %s39 = sphi 0, %s37
      %s40 = sphi 0, %s38
      %s52 = sphi 0, %s54
      %s55 = sphi 0, %s52
      %s56 = sphi 0, %s55
      %s72 = sphi 0, %s56
      %s78 = sphi 0, %s80
      %s81 = sphi 0, %s78
      %s82 = sphi 0, %s81
      %s98 = sphi 0, %s82
      %s104 = sphi 0, %s106
      %s107 = sphi 0, %s104
      %s108 = sphi 0, %s107
      %s124 = sphi 0, %s108
      %s128 = sphi 0, %s128
      %s130 = sphi 0, %s128
      %s131 = sphi 0, %s130
      %s145 = sphi 0, %s131
      %s149 = sphi 0, %s149
      %s151 = sphi 0, %s149
      %s152 = sphi 0, %s151
      %s166 = sphi 0, %s152
      %s170 = sphi 0, %s170
      %s172 = sphi 0, %s170
      %s173 = sphi 0, %s172
      %s187 = sphi 0, %s173
      %s191 = sphi 0, %s191
      %s193 = sphi 0, %s191
      %s194 = sphi 0, %s193
      %s208 = sphi 0, %s194
      %s212 = sphi 0, %s212
      %s214 = sphi 0, %s212
      %s215 = sphi 0, %s214
      %s229 = sphi 0, %s215
      %s233 = sphi 0, %s233
      %s235 = sphi 0, %s233
      %s236 = sphi 0, %s235
      %s250 = sphi 0, %s236
      %s254 = sphi 0, %s254
      %s256 = sphi 0, %s254
      %s257 = sphi 0, %s256
      %s271 = sphi 0, %s257
      %s275 = sphi 0, %s275
      %s277 = sphi 0, %s275
      %s278 = sphi 0, %s277
      %s292 = sphi 0, %s278
      %s300 = sphi 0, %s302
      %s303 = sphi 0, %s300
      %s304 = sphi 0, %s303
      %s320 = sphi 0, %s304
    $region4: #{tpu_custom_call.1} parent=1 // loop_header_branch
      %31 = sbr.rel (%p29) target = $region8
    $region5: #{tpu_custom_call.1} parent=1 // loop_body
      %s33 = ssub.s32 %s28, 1
      %s34 = ssub.s32 %s28, 2
      %s41 = sadd.s32 1, %s36
      %p42 = scmp.ge.s32.totalorder %s41, 1
      %s43 = scalar_select %p42, 0, %s41
      %s44 = sadd.s32 1, %s35
      %s45 = scalar_select %p42, %s44, %s35
      %p46 = scmp.ge.s32.totalorder %s45, 2
      %s47 = scalar_select %p46, 0, %s45
      %s48 = ssub.s32 %s35, %s47
      %s49 = ssub.s32 %s36, %s43
      %s50 = sor.u32 %s48, %s49
      %p51 = scmp.eq.s32.totalorder %s50, 0
      %s53 = sadd.s32 %s52, 1
      %s54 = scalar_select %p51, %s52, %s53
      %p57 = pneg %p51
      %p58 = scmp.eq.s32.totalorder %s28, 1
      %p59 = por %p57, %p58
      %p60 = scmp.ne.s32.totalorder %s52, %s55
      %p61 = scmp.eq.s32.totalorder %s28, 0
      %p62 = por %p60, %p61
      %p63 = scmp.ne.s32.totalorder %s52, %s55
      %p64 = scmp.eq.s32.totalorder %s33, 1
      %p65 = por %p63, %p64
      %p66 = scmp.ne.s32.totalorder %s55, %s56
      %p67 = scmp.eq.s32.totalorder %s33, 0
      %p68 = por %p66, %p67
      %p69 = scmp.ne.s32.totalorder %s55, %s56
      %p70 = scmp.eq.s32.totalorder %s34, 1
      %p71 = por %p69, %p70
      %p73 = scmp.ne.s32.totalorder %s56, %s72
      %p74 = scmp.eq.s32.totalorder %s34, 0
      %p75 = por %p73, %p74
      %s76 = ssub.s32 %s35, %s47
      %p77 = scmp.eq.s32.totalorder %s76, 0
      %s79 = sadd.s32 %s78, 1
      %s80 = scalar_select %p77, %s78, %s79
      %p83 = pneg %p77
      %p84 = scmp.eq.s32.totalorder %s28, 1
      %p85 = por %p83, %p84
      %p86 = scmp.ne.s32.totalorder %s78, %s81
      %p87 = scmp.eq.s32.totalorder %s28, 0
      %p88 = por %p86, %p87
      %p89 = scmp.ne.s32.totalorder %s78, %s81
      %p90 = scmp.eq.s32.totalorder %s33, 1
      %p91 = por %p89, %p90
      %p92 = scmp.ne.s32.totalorder %s81, %s82
      %p93 = scmp.eq.s32.totalorder %s33, 0
      %p94 = por %p92, %p93
      %p95 = scmp.ne.s32.totalorder %s81, %s82
      %p96 = scmp.eq.s32.totalorder %s34, 1
      %p97 = por %p95, %p96
      %p99 = scmp.ne.s32.totalorder %s82, %s98
      %p100 = scmp.eq.s32.totalorder %s34, 0
      %p101 = por %p99, %p100
      %s102 = ssub.s32 %s35, %s47
      %p103 = scmp.eq.s32.totalorder %s102, 0
      %s105 = sadd.s32 %s104, 1
      %s106 = scalar_select %p103, %s104, %s105
      %p109 = pneg %p103
      %p110 = scmp.eq.s32.totalorder %s28, 1
      %p111 = por %p109, %p110
      %p112 = scmp.ne.s32.totalorder %s104, %s107
      %p113 = scmp.eq.s32.totalorder %s28, 0
      %p114 = por %p112, %p113
      %p115 = scmp.ne.s32.totalorder %s104, %s107
      %p116 = scmp.eq.s32.totalorder %s33, 1
      %p117 = por %p115, %p116
      %p118 = scmp.ne.s32.totalorder %s107, %s108
      %p119 = scmp.eq.s32.totalorder %s33, 0
      %p120 = por %p118, %p119
      %p121 = scmp.ne.s32.totalorder %s107, %s108
      %p122 = scmp.eq.s32.totalorder %s34, 1
      %p123 = por %p121, %p122
      %p125 = scmp.ne.s32.totalorder %s108, %s124
      %p126 = scmp.eq.s32.totalorder %s34, 0
      %p127 = por %p125, %p126
      %s129 = sadd.s32 %s128, 1
      %p132 = scmp.eq.s32.totalorder %s28, 1
      %p133 = scmp.ne.s32.totalorder %s128, %s130
      %p134 = scmp.eq.s32.totalorder %s28, 0
      %p135 = por %p133, %p134
      %p136 = scmp.ne.s32.totalorder %s128, %s130
      %p137 = scmp.eq.s32.totalorder %s33, 1
      %p138 = por %p136, %p137
      %p139 = scmp.ne.s32.totalorder %s130, %s131
      %p140 = scmp.eq.s32.totalorder %s33, 0
      %p141 = por %p139, %p140
      %p142 = scmp.ne.s32.totalorder %s130, %s131
      %p143 = scmp.eq.s32.totalorder %s34, 1
      %p144 = por %p142, %p143
      %p146 = scmp.ne.s32.totalorder %s131, %s145
      %p147 = scmp.eq.s32.totalorder %s34, 0
      %p148 = por %p146, %p147
      %s150 = sadd.s32 %s149, 1
      %p153 = scmp.eq.s32.totalorder %s28, 1
      %p154 = scmp.ne.s32.totalorder %s149, %s151
      %p155 = scmp.eq.s32.totalorder %s28, 0
      %p156 = por %p154, %p155
      %p157 = scmp.ne.s32.totalorder %s149, %s151
      %p158 = scmp.eq.s32.totalorder %s33, 1
      %p159 = por %p157, %p158
      %p160 = scmp.ne.s32.totalorder %s151, %s152
      %p161 = scmp.eq.s32.totalorder %s33, 0
      %p162 = por %p160, %p161
      %p163 = scmp.ne.s32.totalorder %s151, %s152
      %p164 = scmp.eq.s32.totalorder %s34, 1
      %p165 = por %p163, %p164
      %p167 = scmp.ne.s32.totalorder %s152, %s166
      %p168 = scmp.eq.s32.totalorder %s34, 0
      %p169 = por %p167, %p168
      %s171 = sadd.s32 %s170, 1
      %p174 = scmp.eq.s32.totalorder %s28, 1
      %p175 = scmp.ne.s32.totalorder %s170, %s172
      %p176 = scmp.eq.s32.totalorder %s28, 0
      %p177 = por %p175, %p176
      %p178 = scmp.ne.s32.totalorder %s170, %s172
      %p179 = scmp.eq.s32.totalorder %s33, 1
      %p180 = por %p178, %p179
      %p181 = scmp.ne.s32.totalorder %s172, %s173
      %p182 = scmp.eq.s32.totalorder %s33, 0
      %p183 = por %p181, %p182
      %p184 = scmp.ne.s32.totalorder %s172, %s173
      %p185 = scmp.eq.s32.totalorder %s34, 1
      %p186 = por %p184, %p185
      %p188 = scmp.ne.s32.totalorder %s173, %s187
      %p189 = scmp.eq.s32.totalorder %s34, 0
      %p190 = por %p188, %p189
      %s192 = sadd.s32 %s191, 1
      %p195 = scmp.eq.s32.totalorder %s28, 1
      %p196 = scmp.ne.s32.totalorder %s191, %s193
      %p197 = scmp.eq.s32.totalorder %s28, 0
      %p198 = por %p196, %p197
      %p199 = scmp.ne.s32.totalorder %s191, %s193
      %p200 = scmp.eq.s32.totalorder %s33, 1
      %p201 = por %p199, %p200
      %p202 = scmp.ne.s32.totalorder %s193, %s194
      %p203 = scmp.eq.s32.totalorder %s33, 0
      %p204 = por %p202, %p203
      %p205 = scmp.ne.s32.totalorder %s193, %s194
      %p206 = scmp.eq.s32.totalorder %s34, 1
      %p207 = por %p205, %p206
      %p209 = scmp.ne.s32.totalorder %s194, %s208
      %p210 = scmp.eq.s32.totalorder %s34, 0
      %p211 = por %p209, %p210
      %s213 = sadd.s32 %s212, 1
      %p216 = scmp.eq.s32.totalorder %s28, 1
      %p217 = scmp.ne.s32.totalorder %s212, %s214
      %p218 = scmp.eq.s32.totalorder %s28, 0
      %p219 = por %p217, %p218
      %p220 = scmp.ne.s32.totalorder %s212, %s214
      %p221 = scmp.eq.s32.totalorder %s33, 1
      %p222 = por %p220, %p221
      %p223 = scmp.ne.s32.totalorder %s214, %s215
      %p224 = scmp.eq.s32.totalorder %s33, 0
      %p225 = por %p223, %p224
      %p226 = scmp.ne.s32.totalorder %s214, %s215
      %p227 = scmp.eq.s32.totalorder %s34, 1
      %p228 = por %p226, %p227
      %p230 = scmp.ne.s32.totalorder %s215, %s229
      %p231 = scmp.eq.s32.totalorder %s34, 0
      %p232 = por %p230, %p231
      %s234 = sadd.s32 %s233, 1
      %p237 = scmp.eq.s32.totalorder %s28, 1
      %p238 = scmp.ne.s32.totalorder %s233, %s235
      %p239 = scmp.eq.s32.totalorder %s28, 0
      %p240 = por %p238, %p239
      %p241 = scmp.ne.s32.totalorder %s233, %s235
      %p242 = scmp.eq.s32.totalorder %s33, 1
      %p243 = por %p241, %p242
      %p244 = scmp.ne.s32.totalorder %s235, %s236
      %p245 = scmp.eq.s32.totalorder %s33, 0
      %p246 = por %p244, %p245
      %p247 = scmp.ne.s32.totalorder %s235, %s236
      %p248 = scmp.eq.s32.totalorder %s34, 1
      %p249 = por %p247, %p248
      %p251 = scmp.ne.s32.totalorder %s236, %s250
      %p252 = scmp.eq.s32.totalorder %s34, 0
      %p253 = por %p251, %p252
      %s255 = sadd.s32 %s254, 1
      %p258 = scmp.eq.s32.totalorder %s28, 1
      %p259 = scmp.ne.s32.totalorder %s254, %s256
      %p260 = scmp.eq.s32.totalorder %s28, 0
      %p261 = por %p259, %p260
      %p262 = scmp.ne.s32.totalorder %s254, %s256
      %p263 = scmp.eq.s32.totalorder %s33, 1
      %p264 = por %p262, %p263
      %p265 = scmp.ne.s32.totalorder %s256, %s257
      %p266 = scmp.eq.s32.totalorder %s33, 0
      %p267 = por %p265, %p266
      %p268 = scmp.ne.s32.totalorder %s256, %s257
      %p269 = scmp.eq.s32.totalorder %s34, 1
      %p270 = por %p268, %p269
      %p272 = scmp.ne.s32.totalorder %s257, %s271
      %p273 = scmp.eq.s32.totalorder %s34, 0
      %p274 = por %p272, %p273
      %s276 = sadd.s32 %s275, 1
      %p279 = scmp.eq.s32.totalorder %s28, 1
      %p280 = scmp.ne.s32.totalorder %s275, %s277
      %p281 = scmp.eq.s32.totalorder %s28, 0
      %p282 = por %p280, %p281
      %p283 = scmp.ne.s32.totalorder %s275, %s277
      %p284 = scmp.eq.s32.totalorder %s33, 1
      %p285 = por %p283, %p284
      %p286 = scmp.ne.s32.totalorder %s277, %s278
      %p287 = scmp.eq.s32.totalorder %s33, 0
      %p288 = por %p286, %p287
      %p289 = scmp.ne.s32.totalorder %s277, %s278
      %p290 = scmp.eq.s32.totalorder %s34, 1
      %p291 = por %p289, %p290
      %p293 = scmp.ne.s32.totalorder %s278, %s292
      %p294 = scmp.eq.s32.totalorder %s34, 0
      %p295 = por %p293, %p294
      %s296 = ssub.s32 %s35, %s47
      %s297 = ssub.s32 %s36, %s43
      %s298 = sor.u32 %s296, %s297
      %p299 = scmp.eq.s32.totalorder %s298, 0
      %s301 = sadd.s32 %s300, 1
      %s302 = scalar_select %p299, %s300, %s301
      %p305 = pneg %p299
      %p306 = scmp.eq.s32.totalorder %s28, 1
      %p307 = por %p305, %p306
      %p308 = scmp.ne.s32.totalorder %s300, %s303
      %p309 = scmp.eq.s32.totalorder %s28, 0
      %p310 = por %p308, %p309
      %p311 = scmp.ne.s32.totalorder %s300, %s303
      %p312 = scmp.eq.s32.totalorder %s33, 1
      %p313 = por %p311, %p312
      %p314 = scmp.ne.s32.totalorder %s303, %s304
      %p315 = scmp.eq.s32.totalorder %s33, 0
      %p316 = por %p314, %p315
      %p317 = scmp.ne.s32.totalorder %s303, %s304
      %p318 = scmp.eq.s32.totalorder %s34, 1
      %p319 = por %p317, %p318
      %p321 = scmp.ne.s32.totalorder %s304, %s320
      %p322 = scmp.eq.s32.totalorder %s34, 0
      %p323 = por %p321, %p322
      %p324 = scmp.le.s32.totalorder 1, %s28
      %p325 = scmp.lt.s32.totalorder %s28, 3
      %p326 = pnand %p324, %p325
      %p327 = pneg %p326
      // Predicated region
      $region9: #{tpu_custom_call.1} parent=5 // pred_check
        _
      $region10: #{tpu_custom_call.1} parent=5 // pred_check_branch
        %329 = sbr.rel (%p326) target = $region12
      $region11: #{tpu_custom_call.1} parent=5 // pred_region
        %s330 = ssub.s32 %s28, 1
        // Predicated region
        $region13: #{tpu_custom_call.1} parent=11 // pred_check
          %p331 = pneg %p141
        $region14: #{tpu_custom_call.1} parent=11 // pred_check_branch
          %333 = sbr.rel (%p331) target = $region16
        $region15: #{tpu_custom_call.1} parent=11 // pred_region
          %s335 = ssub.s32 512, 512
          %336 = vsyncadd [#allocation12], %s335
          %s337 = sshll.u32 [#allocation11], 4
          %s338 = int_to_ptr.vmem [resolvable:$true] %s337
          %343 = dma.hbm_to_vmem [thread:$0]  %s3, 512, %s338, [#allocation12], 128, 128, 8
        $region16: #{tpu_custom_call.1} parent=11 // pred_fallthru
          _
        // Predicated region
        $region17: #{tpu_custom_call.1} parent=11 // pred_check
          %p344 = pneg %p162
        $region18: #{tpu_custom_call.1} parent=11 // pred_check_branch
          %346 = sbr.rel (%p344) target = $region20
        $region19: #{tpu_custom_call.1} parent=11 // pred_region
          _
        $region20: #{tpu_custom_call.1} parent=11 // pred_fallthru
          _
        // Predicated region
        $region21: #{tpu_custom_call.1} parent=11 // pred_check
          %p347 = pneg %p183
        $region22: #{tpu_custom_call.1} parent=11 // pred_check_branch
          %349 = sbr.rel (%p347) target = $region24
        $region23: #{tpu_custom_call.1} parent=11 // pred_region
          %s351 = ssub.s32 512, 512
          %352 = vsyncadd [#allocation12], %s351
          %s353 = sshll.u32 [#allocation13], 4
          %s354 = int_to_ptr.vmem [resolvable:$true] %s353
          %359 = dma.hbm_to_vmem [thread:$0]  %s5, 512, %s354, [#allocation12], 128, 128, 8
        $region24: #{tpu_custom_call.1} parent=11 // pred_fallthru
          _
        // Predicated region
        $region25: #{tpu_custom_call.1} parent=11 // pred_check
          %p360 = pneg %p204
        $region26: #{tpu_custom_call.1} parent=11 // pred_check_branch
          %362 = sbr.rel (%p360) target = $region28
        $region27: #{tpu_custom_call.1} parent=11 // pred_region
          _
        $region28: #{tpu_custom_call.1} parent=11 // pred_fallthru
          _
        // Predicated region
        $region29: #{tpu_custom_call.1} parent=11 // pred_check
          %p363 = pneg %p225
        $region30: #{tpu_custom_call.1} parent=11 // pred_check_branch
          %365 = sbr.rel (%p363) target = $region32
        $region31: #{tpu_custom_call.1} parent=11 // pred_region
          %s367 = ssub.s32 512, 512
          %368 = vsyncadd [#allocation15], %s367
          %s369 = sshll.u32 [#allocation14], 4
          %s370 = int_to_ptr.vmem [resolvable:$true] %s369
          %375 = dma.hbm_to_vmem [thread:$0]  %s7, 512, %s370, [#allocation15], 128, 128, 8
        $region32: #{tpu_custom_call.1} parent=11 // pred_fallthru
          _
        // Predicated region
        $region33: #{tpu_custom_call.1} parent=11 // pred_check
          %p376 = pneg %p246
        $region34: #{tpu_custom_call.1} parent=11 // pred_check_branch
          %378 = sbr.rel (%p376) target = $region36
        $region35: #{tpu_custom_call.1} parent=11 // pred_region
          _
        $region36: #{tpu_custom_call.1} parent=11 // pred_fallthru
          _
        // Predicated region
        $region37: #{tpu_custom_call.1} parent=11 // pred_check
          %p379 = pneg %p267
        $region38: #{tpu_custom_call.1} parent=11 // pred_check_branch
          %381 = sbr.rel (%p379) target = $region40
        $region39: #{tpu_custom_call.1} parent=11 // pred_region
          %s383 = ssub.s32 512, 512
          %384 = vsyncadd [#allocation15], %s383
          %s385 = sshll.u32 [#allocation16], 4
          %s386 = int_to_ptr.vmem [resolvable:$true] %s385
          %391 = dma.hbm_to_vmem [thread:$0]  %s9, 512, %s386, [#allocation15], 128, 128, 8
        $region40: #{tpu_custom_call.1} parent=11 // pred_fallthru
          _
        // Predicated region
        $region41: #{tpu_custom_call.1} parent=11 // pred_check
          %p392 = pneg %p288
        $region42: #{tpu_custom_call.1} parent=11 // pred_check_branch
          %394 = sbr.rel (%p392) target = $region44
        $region43: #{tpu_custom_call.1} parent=11 // pred_region
          _
        $region44: #{tpu_custom_call.1} parent=11 // pred_fallthru
          _
      $region12: #{tpu_custom_call.1} parent=5 // pred_fallthru
        _
      %p395 = scmp.lt.s32.totalorder %s28, 2
      // Predicated region
      $region45: #{tpu_custom_call.1} parent=5 // pred_check
        %p396 = pneg %p395
      $region46: #{tpu_custom_call.1} parent=5 // pred_check_branch
        %398 = sbr.rel (%p396) target = $region48
      $region47: #{tpu_custom_call.1} parent=5 // pred_region
        // Predicated region
        $region49: #{tpu_custom_call.1} parent=47 // pred_check
          %p399 = pneg %p62
        $region50: #{tpu_custom_call.1} parent=47 // pred_check_branch
          %401 = sbr.rel (%p399) target = $region52
        $region51: #{tpu_custom_call.1} parent=47 // pred_region
          %s402 = sand.u32 %s52, 1
          %s403 = scalar_lea.sflag [#allocation6], %s402
          %s404 = sand.u32 %s52, 1
          %s405 = smul.addr %s404, 8
          %s406 = scalar_lea.vmem [#allocation5], %s405
          %s408 = ssub.s32 128, 128
          %409 = vsyncadd %s403, %s408
          %s410 = sadd.s32 %s36, %s35
          %s411 = smul.addr %s410, 128
          %s412 = scalar_lea.hbm %s0, %s411
          %s414 = sshll.u32 %s406, 4
          %s415 = int_to_ptr.vmem [resolvable:$true] %s414
          %417 = dma.hbm_to_vmem [thread:$0]  %s412, 128, %s415, %s403
        $region52: #{tpu_custom_call.1} parent=47 // pred_fallthru
          _
        // Predicated region
        $region53: #{tpu_custom_call.1} parent=47 // pred_check
          %p418 = pneg %p88
        $region54: #{tpu_custom_call.1} parent=47 // pred_check_branch
          %420 = sbr.rel (%p418) target = $region56
        $region55: #{tpu_custom_call.1} parent=47 // pred_region
          %s421 = sand.u32 %s28, 1
          %s422 = scalar_lea.sflag [#allocation9], %s421
          %s423 = sand.u32 %s78, 1
          %s424 = smul.addr %s423, 8
          %s425 = scalar_lea.vmem [#allocation8], %s424
          %s427 = ssub.s32 128, 128
          %428 = vsyncadd %s422, %s427
          %s429 = smul.addr %s35, 128
          %s430 = scalar_lea.hbm %s1, %s429
          %s432 = sshll.u32 %s425, 4
          %s433 = int_to_ptr.vmem [resolvable:$true] %s432
          %435 = dma.hbm_to_vmem [thread:$0]  %s430, 128, %s433, %s422
        $region56: #{tpu_custom_call.1} parent=47 // pred_fallthru
          _
        // Predicated region
        $region57: #{tpu_custom_call.1} parent=47 // pred_check
          %p436 = pneg %p114
        $region58: #{tpu_custom_call.1} parent=47 // pred_check_branch
          %438 = sbr.rel (%p436) target = $region60
        $region59: #{tpu_custom_call.1} parent=47 // pred_region
          %s439 = sand.u32 %s28, 1
          %s440 = scalar_lea.sflag [#allocation9], %s439
          %s441 = sand.u32 %s104, 1
          %s442 = smul.addr %s441, 8
          %s443 = scalar_lea.vmem [#allocation10], %s442
          %s445 = ssub.s32 128, 128
          %446 = vsyncadd %s440, %s445
          %s447 = smul.addr %s35, 128
          %s448 = scalar_lea.hbm %s2, %s447
          %s450 = sshll.u32 %s443, 4
          %s451 = int_to_ptr.vmem [resolvable:$true] %s450
          %453 = dma.hbm_to_vmem [thread:$0]  %s448, 128, %s451, %s440
        $region60: #{tpu_custom_call.1} parent=47 // pred_fallthru
          _
      $region48: #{tpu_custom_call.1} parent=5 // pred_fallthru
        _
      %p454 = scmp.le.s32.totalorder 1, %s28
      %p455 = scmp.lt.s32.totalorder %s28, 3
      %p456 = pnand %p454, %p455
      %p457 = pneg %p456
      // Predicated region
      $region61: #{tpu_custom_call.1} parent=5 // pred_check
        _
      $region62: #{tpu_custom_call.1} parent=5 // pred_check_branch
        %459 = sbr.rel (%p456) target = $region64
      $region63: #{tpu_custom_call.1} parent=5 // pred_region
        %s460 = ssub.s32 %s28, 1
        %s461 = sand.u32 %s55, 1
        %s462 = scalar_lea.sflag [#allocation6], %s461
        %s463 = sand.u32 %s55, 1
        %s464 = smul.addr %s463, 8
        %s465 = scalar_lea.vmem [#allocation5], %s464
        // Predicated region
        $region65: #{tpu_custom_call.1} parent=63 // pred_check
          %p466 = pneg %p68
        $region66: #{tpu_custom_call.1} parent=63 // pred_check_branch
          %468 = sbr.rel (%p466) target = $region68
        $region67: #{tpu_custom_call.1} parent=63 // pred_region
          %469 = dma.done %s462, 128
        $region68: #{tpu_custom_call.1} parent=63 // pred_fallthru
          _
        %s470 = sand.u32 %s33, 1
        %s471 = scalar_lea.sflag [#allocation9], %s470
        %s472 = sand.u32 %s81, 1
        %s473 = smul.addr %s472, 8
        %s474 = scalar_lea.vmem [#allocation8], %s473
        // Predicated region
        $region69: #{tpu_custom_call.1} parent=63 // pred_check
          %p475 = pneg %p94
        $region70: #{tpu_custom_call.1} parent=63 // pred_check_branch
          %477 = sbr.rel (%p475) target = $region72
        $region71: #{tpu_custom_call.1} parent=63 // pred_region
          %478 = dma.done %s471, 128
        $region72: #{tpu_custom_call.1} parent=63 // pred_fallthru
          _
        %s479 = sand.u32 %s33, 1
        %s480 = scalar_lea.sflag [#allocation9], %s479
        %s481 = sand.u32 %s107, 1
        %s482 = smul.addr %s481, 8
        %s483 = scalar_lea.vmem [#allocation10], %s482
        // Predicated region
        $region73: #{tpu_custom_call.1} parent=63 // pred_check
          %p484 = pneg %p120
        $region74: #{tpu_custom_call.1} parent=63 // pred_check_branch
          %486 = sbr.rel (%p484) target = $region76
        $region75: #{tpu_custom_call.1} parent=63 // pred_region
          %487 = dma.done %s480, 128
        $region76: #{tpu_custom_call.1} parent=63 // pred_fallthru
          _
        // Predicated region
        $region77: #{tpu_custom_call.1} parent=63 // pred_check
          %p488 = pneg %p141
        $region78: #{tpu_custom_call.1} parent=63 // pred_check_branch
          %490 = sbr.rel (%p488) target = $region80
        $region79: #{tpu_custom_call.1} parent=63 // pred_region
          %491 = dma.done [#allocation12], 512
        $region80: #{tpu_custom_call.1} parent=63 // pred_fallthru
          _
        // Predicated region
        $region81: #{tpu_custom_call.1} parent=63 // pred_check
          %p492 = pneg %p183
        $region82: #{tpu_custom_call.1} parent=63 // pred_check_branch
          %494 = sbr.rel (%p492) target = $region84
        $region83: #{tpu_custom_call.1} parent=63 // pred_region
          %495 = dma.done [#allocation12], 512
        $region84: #{tpu_custom_call.1} parent=63 // pred_fallthru
          _
        // Predicated region
        $region85: #{tpu_custom_call.1} parent=63 // pred_check
          %p496 = pneg %p225
        $region86: #{tpu_custom_call.1} parent=63 // pred_check_branch
          %498 = sbr.rel (%p496) target = $region88
        $region87: #{tpu_custom_call.1} parent=63 // pred_region
          %499 = dma.done [#allocation15], 512
        $region88: #{tpu_custom_call.1} parent=63 // pred_fallthru
          _
        // Predicated region
        $region89: #{tpu_custom_call.1} parent=63 // pred_check
          %p500 = pneg %p267
        $region90: #{tpu_custom_call.1} parent=63 // pred_check_branch
          %502 = sbr.rel (%p500) target = $region92
        $region91: #{tpu_custom_call.1} parent=63 // pred_region
          %503 = dma.done [#allocation15], 512
        $region92: #{tpu_custom_call.1} parent=63 // pred_fallthru
          _
        %s504 = sand.u32 %s55, 1
        %s505 = scalar_lea.sflag [#allocation6], %s504
        %s506 = sand.u32 %s55, 1
        %s507 = smul.addr %s506, 8
        %s508 = scalar_lea.vmem [#allocation5], %s507
        %p509 = pneg %p68
        %p510 = pneg %p65
        %s511 = sand.u32 %s33, 1
        %s512 = scalar_lea.sflag [#allocation9], %s511
        %s513 = sand.u32 %s81, 1
        %s514 = smul.addr %s513, 8
        %s515 = scalar_lea.vmem [#allocation8], %s514
        %p516 = pneg %p94
        %p517 = pneg %p91
        %s518 = sand.u32 %s33, 1
        %s519 = scalar_lea.sflag [#allocation9], %s518
        %s520 = sand.u32 %s107, 1
        %s521 = smul.addr %s520, 8
        %s522 = scalar_lea.vmem [#allocation10], %s521
        %p523 = pneg %p120
        %p524 = pneg %p117
        %p525 = pneg %p141
        %p526 = pneg %p138
        %p527 = pneg %p162
        %p528 = pneg %p159
        %p529 = pneg %p183
        %p530 = pneg %p180
        %p531 = pneg %p204
        %p532 = pneg %p201
        %p533 = pneg %p225
        %p534 = pneg %p222
        %p535 = pneg %p246
        %p536 = pneg %p243
        %p537 = pneg %p267
        %p538 = pneg %p264
        %p539 = pneg %p288
        %p540 = pneg %p285
        %p541 = pneg %p316
        %p542 = pneg %p313
        %s543 = sand.u32 %s303, 1
        %s544 = scalar_lea.sflag [#allocation7], %s543
        %s545 = sand.u32 %s303, 1
        %s546 = smul.addr %s545, 8
        %s547 = scalar_lea.vmem [#allocation17], %s546
        %p548 = scmp.eq.s32.totalorder %s38, 0
        // Predicated region
        $region93: #{tpu_custom_call.1} parent=63 // pred_check
          %p549 = pneg %p548
        $region94: #{tpu_custom_call.1} parent=63 // pred_check_branch
          %551 = sbr.rel (%p549) target = $region96
        $region95: #{tpu_custom_call.1} parent=63 // pred_region
          %v552 = vld [vmem:[%s474] sm:$0xff]
          %v553 = vld [vmem:[#allocation13] sm:$0xff]
          %v554 = vld [vmem:[#allocation13 + $0x8] sm:$0xff]
          %v555 = vld [vmem:[#allocation13 + $0x10] sm:$0xff]
          %v556 = vld [vmem:[#allocation13 + $0x18] sm:$0xff]
          %v557 = vld [vmem:[%s6] sm:$0x1]
          %v559 = vlaneseq
          %v560 = vshrl.u32 %v559, 7
          %v561 = vsub.s32 0, %v560
          %v562 = vrot.slane %v557, %v561
          %vm564 = vcmask 261120
          %v566 = vsel %vm564, %v552, 0
          %568 = vmatprep.subr.mxu0 0.0
          %569 = vmatpush1.msra.mxu0 0.0
          %570 = vmatprep.subr.mxu0 0.0
          %571 = vmatpush1.msra.mxu0 0.0
          %572 = vmatprep.subr.mxu0 0.0
          %573 = vmatpush1.msra.mxu0 0.0
          %574 = vmatprep.subr.mxu0 0.0
          %575 = vmatpush1.msra.mxu0 0.0
          %576 = vmatprep.subr.mxu0 0.0
          %577 = vmatpush1.msra.mxu0 0.0
          %578 = vmatprep.subr.mxu0 0.0
          %579 = vmatpush1.msra.mxu0 0.0
          %580 = vmatprep.subr.mxu0 0.0
          %581 = vmatpush1.msra.mxu0 0.0
          %582 = vmatprep.subr.mxu0 0.0
          %583 = vmatpush1.msra.mxu0 0.0
          %584 = vmatprep.subr.mxu0 0.0
          %585 = vmatpush1.msra.mxu0 0.0
          %586 = vmatprep.subr.mxu0 0.0
          %587 = vmatpush1.msra.mxu0 0.0
          %588 = vmatprep.subr.mxu0 0.0
          %589 = vmatpush1.msra.mxu0 0.0
          %590 = vmatprep.subr.mxu0 0.0
          %591 = vmatpush1.msra.mxu0 0.0
          %592 = vmatprep.subr.mxu0 0.0
          %593 = vmatpush1.msra.mxu0 %v556
          %594 = vmatprep.subr.mxu0 0.0
          %595 = vmatpush1.msra.mxu0 %v555
          %596 = vmatprep.subr.mxu0 0.0
          %597 = vmatpush1.msra.mxu0 %v554
          %598 = vmatprep.subr.mxu0 0.0
          %599 = vmatpush1.msra.mxu0 %v553
          %600 = vmatprep.subr.mxu0 0.0
          %601 = vmatpush2.msra.mxu0 0.0
          %602 = vmatprep.subr.mxu0 0.0
          %603 = vmatpush2.msra.mxu0 0.0
          %604 = vmatprep.subr.mxu0 0.0
          %605 = vmatpush2.msra.mxu0 0.0
          %606 = vmatprep.subr.mxu0 0.0
          %607 = vmatpush2.msra.mxu0 0.0
          %608 = vmatprep.subr.mxu0 0.0
          %609 = vmatpush2.msra.mxu0 0.0
          %610 = vmatprep.subr.mxu0 0.0
          %611 = vmatpush2.msra.mxu0 0.0
          %612 = vmatprep.subr.mxu0 0.0
          %613 = vmatpush2.msra.mxu0 0.0
          %614 = vmatprep.subr.mxu0 0.0
          %615 = vmatpush2.msra.mxu0 0.0
          %616 = vmatprep.subr.mxu0 0.0
          %617 = vmatpush2.msra.mxu0 0.0
          %618 = vmatprep.subr.mxu0 0.0
          %619 = vmatpush2.msra.mxu0 0.0
          %620 = vmatprep.subr.mxu0 0.0
          %621 = vmatpush2.msra.mxu0 0.0
          %622 = vmatprep.subr.mxu0 0.0
          %623 = vmatpush2.msra.mxu0 0.0
          %624 = vmatprep.subr.mxu0 0.0
          %625 = vmatpush2.msra.mxu0 0.0
          %626 = vmatprep.subr.mxu0 0.0
          %627 = vmatpush2.msra.mxu0 0.0
          %628 = vmatprep.subr.mxu0 0.0
          %629 = vmatpush2.msra.mxu0 0.0
          %630 = vmatprep.subr.mxu0 0.0
          %631 = vmatpush2.msra.mxu0 0.0
          %632 = vmatprep.mubr.f32.mxu0 0.0
          %633 = vmatmul.mubr.f32.gmra.mxu0 %v566
          %v634 = vpop.f32.mrf.mxu0
          %v635 = vadd.f32 %v562, %v634
          %v636 = vpop.f32.mrf.mxu0
          %637 = vdwg.mxu0
          %638 = vst.msk [vmem:[#allocation2] sm:$0xff] %vm564, %v635
          %v639 = vld [vmem:[%s483] sm:$0xff]
          %v640 = vld [vmem:[#allocation14] sm:$0xff]
          %v641 = vld [vmem:[#allocation14 + $0x8] sm:$0xff]
          %v642 = vld [vmem:[#allocation14 + $0x10] sm:$0xff]
          %v643 = vld [vmem:[#allocation14 + $0x18] sm:$0xff]
          %v644 = vld [vmem:[%s8] sm:$0x1]
          %v646 = vlaneseq
          %v647 = vshrl.u32 %v646, 7
          %v648 = vsub.s32 0, %v647
          %v649 = vrot.slane %v644, %v648
          %v652 = vsel %vm564, %v639, 0
          %654 = vmatprep.subr.mxu0 0.0
          %655 = vmatpush1.msra.mxu0 0.0
          %656 = vmatprep.subr.mxu0 0.0
          %657 = vmatpush1.msra.mxu0 0.0
          %658 = vmatprep.subr.mxu0 0.0
          %659 = vmatpush1.msra.mxu0 0.0
          %660 = vmatprep.subr.mxu0 0.0
          %661 = vmatpush1.msra.mxu0 0.0
          %662 = vmatprep.subr.mxu0 0.0
          %663 = vmatpush1.msra.mxu0 0.0
          %664 = vmatprep.subr.mxu0 0.0
          %665 = vmatpush1.msra.mxu0 0.0
          %666 = vmatprep.subr.mxu0 0.0
          %667 = vmatpush1.msra.mxu0 0.0
          %668 = vmatprep.subr.mxu0 0.0
          %669 = vmatpush1.msra.mxu0 0.0
          %670 = vmatprep.subr.mxu0 0.0
          %671 = vmatpush1.msra.mxu0 0.0
          %672 = vmatprep.subr.mxu0 0.0
          %673 = vmatpush1.msra.mxu0 0.0
          %674 = vmatprep.subr.mxu0 0.0
          %675 = vmatpush1.msra.mxu0 0.0
          %676 = vmatprep.subr.mxu0 0.0
          %677 = vmatpush1.msra.mxu0 0.0
          %678 = vmatprep.subr.mxu0 0.0
          %679 = vmatpush1.msra.mxu0 %v643
          %680 = vmatprep.subr.mxu0 0.0
          %681 = vmatpush1.msra.mxu0 %v642
          %682 = vmatprep.subr.mxu0 0.0
          %683 = vmatpush1.msra.mxu0 %v641
          %684 = vmatprep.subr.mxu0 0.0
          %685 = vmatpush1.msra.mxu0 %v640
          %686 = vmatprep.subr.mxu0 0.0
          %687 = vmatpush2.msra.mxu0 0.0
          %688 = vmatprep.subr.mxu0 0.0
          %689 = vmatpush2.msra.mxu0 0.0
          %690 = vmatprep.subr.mxu0 0.0
          %691 = vmatpush2.msra.mxu0 0.0
          %692 = vmatprep.subr.mxu0 0.0
          %693 = vmatpush2.msra.mxu0 0.0
          %694 = vmatprep.subr.mxu0 0.0
          %695 = vmatpush2.msra.mxu0 0.0
          %696 = vmatprep.subr.mxu0 0.0
          %697 = vmatpush2.msra.mxu0 0.0
          %698 = vmatprep.subr.mxu0 0.0
          %699 = vmatpush2.msra.mxu0 0.0
          %700 = vmatprep.subr.mxu0 0.0
          %701 = vmatpush2.msra.mxu0 0.0
          %702 = vmatprep.subr.mxu0 0.0
          %703 = vmatpush2.msra.mxu0 0.0
          %704 = vmatprep.subr.mxu0 0.0
          %705 = vmatpush2.msra.mxu0 0.0
          %706 = vmatprep.subr.mxu0 0.0
          %707 = vmatpush2.msra.mxu0 0.0
          %708 = vmatprep.subr.mxu0 0.0
          %709 = vmatpush2.msra.mxu0 0.0
          %710 = vmatprep.subr.mxu0 0.0
          %711 = vmatpush2.msra.mxu0 0.0
          %712 = vmatprep.subr.mxu0 0.0
          %713 = vmatpush2.msra.mxu0 0.0
          %714 = vmatprep.subr.mxu0 0.0
          %715 = vmatpush2.msra.mxu0 0.0
          %716 = vmatprep.subr.mxu0 0.0
          %717 = vmatpush2.msra.mxu0 0.0
          %718 = vmatprep.mubr.f32.mxu0 0.0
          %719 = vmatmul.mubr.f32.gmra.mxu0 %v652
          %v720 = vpop.f32.mrf.mxu0
          %v721 = vadd.f32 %v649, %v720
          %v722 = vpop.f32.mrf.mxu0
          %723 = vdwg.mxu0
          %724 = vst.msk [vmem:[#allocation3] sm:$0xff] %vm564, %v721
        $region96: #{tpu_custom_call.1} parent=63 // pred_fallthru
          _
        %vm725 = vcmask 261120
        %726 = vst.msk [vmem:[#allocation4] sm:$0xff] %vm725, 0.0
        %v727 = vld [vmem:[%s465] sm:$0xff]
        %v728 = vld [vmem:[#allocation11] sm:$0xff]
        %v729 = vld [vmem:[#allocation11 + $0x8] sm:$0xff]
        %v730 = vld [vmem:[#allocation11 + $0x10] sm:$0xff]
        %v731 = vld [vmem:[#allocation11 + $0x18] sm:$0xff]
        %v732 = vld [vmem:[%s4] sm:$0x1]
        %v734 = vlaneseq
        %v735 = vshrl.u32 %v734, 7
        %v736 = vsub.s32 0, %v735
        %v737 = vrot.slane %v732, %v736
        %v740 = vsel %vm725, %v727, 0
        %742 = vmatprep.subr.mxu0 0.0
        %743 = vmatpush1.msra.mxu0 0.0
        %744 = vmatprep.subr.mxu0 0.0
        %745 = vmatpush1.msra.mxu0 0.0
        %746 = vmatprep.subr.mxu0 0.0
        %747 = vmatpush1.msra.mxu0 0.0
        %748 = vmatprep.subr.mxu0 0.0
        %749 = vmatpush1.msra.mxu0 0.0
        %750 = vmatprep.subr.mxu0 0.0
        %751 = vmatpush1.msra.mxu0 0.0
        %752 = vmatprep.subr.mxu0 0.0
        %753 = vmatpush1.msra.mxu0 0.0
        %754 = vmatprep.subr.mxu0 0.0
        %755 = vmatpush1.msra.mxu0 0.0
        %756 = vmatprep.subr.mxu0 0.0
        %757 = vmatpush1.msra.mxu0 0.0
        %758 = vmatprep.subr.mxu0 0.0
        %759 = vmatpush1.msra.mxu0 0.0
        %760 = vmatprep.subr.mxu0 0.0
        %761 = vmatpush1.msra.mxu0 0.0
        %762 = vmatprep.subr.mxu0 0.0
        %763 = vmatpush1.msra.mxu0 0.0
        %764 = vmatprep.subr.mxu0 0.0
        %765 = vmatpush1.msra.mxu0 0.0
        %766 = vmatprep.subr.mxu0 0.0
        %767 = vmatpush1.msra.mxu0 %v731
        %768 = vmatprep.subr.mxu0 0.0
        %769 = vmatpush1.msra.mxu0 %v730
        %770 = vmatprep.subr.mxu0 0.0
        %771 = vmatpush1.msra.mxu0 %v729
        %772 = vmatprep.subr.mxu0 0.0
        %773 = vmatpush1.msra.mxu0 %v728
        %774 = vmatprep.subr.mxu0 0.0
        %775 = vmatpush2.msra.mxu0 0.0
        %776 = vmatprep.subr.mxu0 0.0
        %777 = vmatpush2.msra.mxu0 0.0
        %778 = vmatprep.subr.mxu0 0.0
        %779 = vmatpush2.msra.mxu0 0.0
        %780 = vmatprep.subr.mxu0 0.0
        %781 = vmatpush2.msra.mxu0 0.0
        %782 = vmatprep.subr.mxu0 0.0
        %783 = vmatpush2.msra.mxu0 0.0
        %784 = vmatprep.subr.mxu0 0.0
        %785 = vmatpush2.msra.mxu0 0.0
        %786 = vmatprep.subr.mxu0 0.0
        %787 = vmatpush2.msra.mxu0 0.0
        %788 = vmatprep.subr.mxu0 0.0
        %789 = vmatpush2.msra.mxu0 0.0
        %790 = vmatprep.subr.mxu0 0.0
        %791 = vmatpush2.msra.mxu0 0.0
        %792 = vmatprep.subr.mxu0 0.0
        %793 = vmatpush2.msra.mxu0 0.0
        %794 = vmatprep.subr.mxu0 0.0
        %795 = vmatpush2.msra.mxu0 0.0
        %796 = vmatprep.subr.mxu0 0.0
        %797 = vmatpush2.msra.mxu0 0.0
        %798 = vmatprep.subr.mxu0 0.0
        %799 = vmatpush2.msra.mxu0 0.0
        %800 = vmatprep.subr.mxu0 0.0
        %801 = vmatpush2.msra.mxu0 0.0
        %802 = vmatprep.subr.mxu0 0.0
        %803 = vmatpush2.msra.mxu0 0.0
        %804 = vmatprep.subr.mxu0 0.0
        %805 = vmatpush2.msra.mxu0 0.0
        %806 = vmatprep.mubr.f32.mxu0 0.0
        %807 = vmatmul.mubr.f32.gmra.mxu0 %v740
        %v808 = vpop.f32.mrf.mxu0
        %v809 = vadd.f32 %v737, %v808
        %v810 = vpop.f32.mrf.mxu0
        %811 = vdwg.mxu0
        %v812 = vld [vmem:[#allocation2] sm:$0xff]
        %vm813 = vcmask 64512
        %v815 = vsel %vm813, %v809, 0
        %v818 = vsel %vm813, %v812, 0
        %820 = vmatprep.subr.mxu0 0.0
        %821 = vmatpush1.xpose.msra.mxu0 0.0
        %822 = vmatprep.subr.mxu0 0.0
        %823 = vmatpush1.xpose.msra.mxu0 0.0
        %824 = vmatprep.subr.mxu0 0.0
        %825 = vmatpush1.xpose.msra.mxu0 0.0
        %826 = vmatprep.subr.mxu0 0.0
        %827 = vmatpush1.xpose.msra.mxu0 0.0
        %828 = vmatprep.subr.mxu0 0.0
        %829 = vmatpush1.xpose.msra.mxu0 0.0
        %830 = vmatprep.subr.mxu0 0.0
        %831 = vmatpush1.xpose.msra.mxu0 0.0
        %832 = vmatprep.subr.mxu0 0.0
        %833 = vmatpush1.xpose.msra.mxu0 0.0
        %834 = vmatprep.subr.mxu0 0.0
        %835 = vmatpush1.xpose.msra.mxu0 0.0
        %836 = vmatprep.subr.mxu0 0.0
        %837 = vmatpush1.xpose.msra.mxu0 0.0
        %838 = vmatprep.subr.mxu0 0.0
        %839 = vmatpush1.xpose.msra.mxu0 0.0
        %840 = vmatprep.subr.mxu0 0.0
        %841 = vmatpush1.xpose.msra.mxu0 0.0
        %842 = vmatprep.subr.mxu0 0.0
        %843 = vmatpush1.xpose.msra.mxu0 0.0
        %844 = vmatprep.subr.mxu0 0.0
        %845 = vmatpush1.xpose.msra.mxu0 0.0
        %846 = vmatprep.subr.mxu0 0.0
        %847 = vmatpush1.xpose.msra.mxu0 0.0
        %848 = vmatprep.subr.mxu0 0.0
        %849 = vmatpush1.xpose.msra.mxu0 0.0
        %850 = vmatprep.subr.mxu0 0.0
        %851 = vmatpush1.xpose.msra.mxu0 %v818
        %852 = vmatprep.subr.mxu0 0.0
        %853 = vmatpush2.xpose.msra.mxu0 0.0
        %854 = vmatprep.subr.mxu0 0.0
        %855 = vmatpush2.xpose.msra.mxu0 0.0
        %856 = vmatprep.subr.mxu0 0.0
        %857 = vmatpush2.xpose.msra.mxu0 0.0
        %858 = vmatprep.subr.mxu0 0.0
        %859 = vmatpush2.xpose.msra.mxu0 0.0
        %860 = vmatprep.subr.mxu0 0.0
        %861 = vmatpush2.xpose.msra.mxu0 0.0
        %862 = vmatprep.subr.mxu0 0.0
        %863 = vmatpush2.xpose.msra.mxu0 0.0
        %864 = vmatprep.subr.mxu0 0.0
        %865 = vmatpush2.xpose.msra.mxu0 0.0
        %866 = vmatprep.subr.mxu0 0.0
        %867 = vmatpush2.xpose.msra.mxu0 0.0
        %868 = vmatprep.subr.mxu0 0.0
        %869 = vmatpush2.xpose.msra.mxu0 0.0
        %870 = vmatprep.subr.mxu0 0.0
        %871 = vmatpush2.xpose.msra.mxu0 0.0
        %872 = vmatprep.subr.mxu0 0.0
        %873 = vmatpush2.xpose.msra.mxu0 0.0
        %874 = vmatprep.subr.mxu0 0.0
        %875 = vmatpush2.xpose.msra.mxu0 0.0
        %876 = vmatprep.subr.mxu0 0.0
        %877 = vmatpush2.xpose.msra.mxu0 0.0
        %878 = vmatprep.subr.mxu0 0.0
        %879 = vmatpush2.xpose.msra.mxu0 0.0
        %880 = vmatprep.subr.mxu0 0.0
        %881 = vmatpush2.xpose.msra.mxu0 0.0
        %882 = vmatprep.subr.mxu0 0.0
        %883 = vmatpush2.xpose.msra.mxu0 0.0
        %884 = vmatprep.mubr.f32.mxu0 0.0
        %885 = vmatmul.mubr.f32.gmra.mxu0 %v815
        %v886 = vpop.f32.mrf.mxu0
        %v887 = vadd.f32 0.0, %v886
        %v888 = vpop.f32.mrf.mxu0
        %889 = vdwg.mxu0
        %v890 = vsel %vm813, %v887, -inf
        %891 = vmax.xlane.f32.xlu0 %v890
        %v892 = vpop.xlane.xlu0 %891
        %v893 = vsub.f32 %v887, %v892
        %v894 = vmul.f32 %v893, 1.442695
        %v895 = vpow.pop %v894
        %v896 = vsel %vm813, %v895, 0.0
        %897 = vadd.xlane.f32.xlu0 %v896
        %v898 = vpop.xlane.xlu0 %897
        %v899 = vrcp.pop %v898
        %v900 = vld [vmem:[#allocation3] sm:$0xff]
        %v902 = vsel %vm813, %v895, 0
        %904 = vmatprep.subr.mxu0 0.0
        %905 = vmatpush1.msra.mxu0 0.0
        %906 = vmatprep.subr.mxu0 0.0
        %907 = vmatpush1.msra.mxu0 0.0
        %908 = vmatprep.subr.mxu0 0.0
        %909 = vmatpush1.msra.mxu0 0.0
        %910 = vmatprep.subr.mxu0 0.0
        %911 = vmatpush1.msra.mxu0 0.0
        %912 = vmatprep.subr.mxu0 0.0
        %913 = vmatpush1.msra.mxu0 0.0
        %914 = vmatprep.subr.mxu0 0.0
        %915 = vmatpush1.msra.mxu0 0.0
        %916 = vmatprep.subr.mxu0 0.0
        %917 = vmatpush1.msra.mxu0 0.0
        %918 = vmatprep.subr.mxu0 0.0
        %919 = vmatpush1.msra.mxu0 0.0
        %920 = vmatprep.subr.mxu0 0.0
        %921 = vmatpush1.msra.mxu0 0.0
        %922 = vmatprep.subr.mxu0 0.0
        %923 = vmatpush1.msra.mxu0 0.0
        %924 = vmatprep.subr.mxu0 0.0
        %925 = vmatpush1.msra.mxu0 0.0
        %926 = vmatprep.subr.mxu0 0.0
        %927 = vmatpush1.msra.mxu0 0.0
        %928 = vmatprep.subr.mxu0 0.0
        %929 = vmatpush1.msra.mxu0 0.0
        %930 = vmatprep.subr.mxu0 0.0
        %931 = vmatpush1.msra.mxu0 0.0
        %932 = vmatprep.subr.mxu0 0.0
        %933 = vmatpush1.msra.mxu0 0.0
        %934 = vmatprep.subr.mxu0 0.0
        %935 = vmatpush1.msra.mxu0 %v900
        %936 = vmatprep.subr.mxu0 0.0
        %937 = vmatpush2.msra.mxu0 0.0
        %938 = vmatprep.subr.mxu0 0.0
        %939 = vmatpush2.msra.mxu0 0.0
        %940 = vmatprep.subr.mxu0 0.0
        %941 = vmatpush2.msra.mxu0 0.0
        %942 = vmatprep.subr.mxu0 0.0
        %943 = vmatpush2.msra.mxu0 0.0
        %944 = vmatprep.subr.mxu0 0.0
        %945 = vmatpush2.msra.mxu0 0.0
        %946 = vmatprep.subr.mxu0 0.0
        %947 = vmatpush2.msra.mxu0 0.0
        %948 = vmatprep.subr.mxu0 0.0
        %949 = vmatpush2.msra.mxu0 0.0
        %950 = vmatprep.subr.mxu0 0.0
        %951 = vmatpush2.msra.mxu0 0.0
        %952 = vmatprep.subr.mxu0 0.0
        %953 = vmatpush2.msra.mxu0 0.0
        %954 = vmatprep.subr.mxu0 0.0
        %955 = vmatpush2.msra.mxu0 0.0
        %956 = vmatprep.subr.mxu0 0.0
        %957 = vmatpush2.msra.mxu0 0.0
        %958 = vmatprep.subr.mxu0 0.0
        %959 = vmatpush2.msra.mxu0 0.0
        %960 = vmatprep.subr.mxu0 0.0
        %961 = vmatpush2.msra.mxu0 0.0
        %962 = vmatprep.subr.mxu0 0.0
        %963 = vmatpush2.msra.mxu0 0.0
        %964 = vmatprep.subr.mxu0 0.0
        %965 = vmatpush2.msra.mxu0 0.0
        %966 = vmatprep.subr.mxu0 0.0
        %967 = vmatpush2.msra.mxu0 0.0
        %968 = vmatprep.mubr.f32.mxu0 0.0
        %969 = vmatmul.mubr.f32.gmra.mxu0 %v902
        %v970 = vpop.f32.mrf.mxu0
        %v971 = vadd.f32 0.0, %v970
        %v972 = vpop.f32.mrf.mxu0
        %973 = vdwg.mxu0
        %v974 = vmul.f32 %v971, %v899
        %975 = vrot.lane.b32.xlu0 %v809, 120
        %v976 = vpop.permute.xlu0 %975
        %977 = vrot.lane.b32.xlu0 %v812, 120
        %v978 = vpop.permute.xlu0 %977
        %v979 = vsel %vm813, %v976, 0
        %v981 = vsel %vm813, %v978, 0
        %983 = vmatprep.subr.mxu0 0.0
        %984 = vmatpush1.xpose.msra.mxu0 0.0
        %985 = vmatprep.subr.mxu0 0.0
        %986 = vmatpush1.xpose.msra.mxu0 0.0
        %987 = vmatprep.subr.mxu0 0.0
        %988 = vmatpush1.xpose.msra.mxu0 0.0
        %989 = vmatprep.subr.mxu0 0.0
        %990 = vmatpush1.xpose.msra.mxu0 0.0
        %991 = vmatprep.subr.mxu0 0.0
        %992 = vmatpush1.xpose.msra.mxu0 0.0
        %993 = vmatprep.subr.mxu0 0.0
        %994 = vmatpush1.xpose.msra.mxu0 0.0
        %995 = vmatprep.subr.mxu0 0.0
        %996 = vmatpush1.xpose.msra.mxu0 0.0
        %997 = vmatprep.subr.mxu0 0.0
        %998 = vmatpush1.xpose.msra.mxu0 0.0
        %999 = vmatprep.subr.mxu0 0.0
        %1000 = vmatpush1.xpose.msra.mxu0 0.0
        %1001 = vmatprep.subr.mxu0 0.0
        %1002 = vmatpush1.xpose.msra.mxu0 0.0
        %1003 = vmatprep.subr.mxu0 0.0
        %1004 = vmatpush1.xpose.msra.mxu0 0.0
        %1005 = vmatprep.subr.mxu0 0.0
        %1006 = vmatpush1.xpose.msra.mxu0 0.0
        %1007 = vmatprep.subr.mxu0 0.0
        %1008 = vmatpush1.xpose.msra.mxu0 0.0
        %1009 = vmatprep.subr.mxu0 0.0
        %1010 = vmatpush1.xpose.msra.mxu0 0.0
        %1011 = vmatprep.subr.mxu0 0.0
        %1012 = vmatpush1.xpose.msra.mxu0 0.0
        %1013 = vmatprep.subr.mxu0 0.0
        %1014 = vmatpush1.xpose.msra.mxu0 %v981
        %1015 = vmatprep.subr.mxu0 0.0
        %1016 = vmatpush2.xpose.msra.mxu0 0.0
        %1017 = vmatprep.subr.mxu0 0.0
        %1018 = vmatpush2.xpose.msra.mxu0 0.0
        %1019 = vmatprep.subr.mxu0 0.0
        %1020 = vmatpush2.xpose.msra.mxu0 0.0
        %1021 = vmatprep.subr.mxu0 0.0
        %1022 = vmatpush2.xpose.msra.mxu0 0.0
        %1023 = vmatprep.subr.mxu0 0.0
        %1024 = vmatpush2.xpose.msra.mxu0 0.0
        %1025 = vmatprep.subr.mxu0 0.0
        %1026 = vmatpush2.xpose.msra.mxu0 0.0
        %1027 = vmatprep.subr.mxu0 0.0
        %1028 = vmatpush2.xpose.msra.mxu0 0.0
        %1029 = vmatprep.subr.mxu0 0.0
        %1030 = vmatpush2.xpose.msra.mxu0 0.0
        %1031 = vmatprep.subr.mxu0 0.0
        %1032 = vmatpush2.xpose.msra.mxu0 0.0
        %1033 = vmatprep.subr.mxu0 0.0
        %1034 = vmatpush2.xpose.msra.mxu0 0.0
        %1035 = vmatprep.subr.mxu0 0.0
        %1036 = vmatpush2.xpose.msra.mxu0 0.0
        %1037 = vmatprep.subr.mxu0 0.0
        %1038 = vmatpush2.xpose.msra.mxu0 0.0
        %1039 = vmatprep.subr.mxu0 0.0
        %1040 = vmatpush2.xpose.msra.mxu0 0.0
        %1041 = vmatprep.subr.mxu0 0.0
        %1042 = vmatpush2.xpose.msra.mxu0 0.0
        %1043 = vmatprep.subr.mxu0 0.0
        %1044 = vmatpush2.xpose.msra.mxu0 0.0
        %1045 = vmatprep.subr.mxu0 0.0
        %1046 = vmatpush2.xpose.msra.mxu0 0.0
        %1047 = vmatprep.mubr.f32.mxu0 0.0
        %1048 = vmatmul.mubr.f32.gmra.mxu0 %v979
        %v1049 = vpop.f32.mrf.mxu0
        %v1050 = vadd.f32 0.0, %v1049
        %v1051 = vpop.f32.mrf.mxu0
        %1052 = vdwg.mxu0
        %v1053 = vsel %vm813, %v1050, -inf
        %1054 = vmax.xlane.f32.xlu0 %v1053
        %v1055 = vpop.xlane.xlu0 %1054
        %v1056 = vsub.f32 %v1050, %v1055
        %v1057 = vmul.f32 %v1056, 1.442695
        %v1058 = vpow.pop %v1057
        %v1059 = vsel %vm813, %v1058, 0.0
        %1060 = vadd.xlane.f32.xlu0 %v1059
        %v1061 = vpop.xlane.xlu0 %1060
        %v1062 = vrcp.pop %v1061
        %1064 = vrot.lane.b32.xlu0 %v900, 120
        %v1065 = vpop.permute.xlu0 %1064
        %v1068 = vsel %vm813, %v1058, 0
        %1070 = vmatprep.subr.mxu0 0.0
        %1071 = vmatpush1.msra.mxu0 0.0
        %1072 = vmatprep.subr.mxu0 0.0
        %1073 = vmatpush1.msra.mxu0 0.0
        %1074 = vmatprep.subr.mxu0 0.0
        %1075 = vmatpush1.msra.mxu0 0.0
        %1076 = vmatprep.subr.mxu0 0.0
        %1077 = vmatpush1.msra.mxu0 0.0
        %1078 = vmatprep.subr.mxu0 0.0
        %1079 = vmatpush1.msra.mxu0 0.0
        %1080 = vmatprep.subr.mxu0 0.0
        %1081 = vmatpush1.msra.mxu0 0.0
        %1082 = vmatprep.subr.mxu0 0.0
        %1083 = vmatpush1.msra.mxu0 0.0
        %1084 = vmatprep.subr.mxu0 0.0
        %1085 = vmatpush1.msra.mxu0 0.0
        %1086 = vmatprep.subr.mxu0 0.0
        %1087 = vmatpush1.msra.mxu0 0.0
        %1088 = vmatprep.subr.mxu0 0.0
        %1089 = vmatpush1.msra.mxu0 0.0
        %1090 = vmatprep.subr.mxu0 0.0
        %1091 = vmatpush1.msra.mxu0 0.0
        %1092 = vmatprep.subr.mxu0 0.0
        %1093 = vmatpush1.msra.mxu0 0.0
        %1094 = vmatprep.subr.mxu0 0.0
        %1095 = vmatpush1.msra.mxu0 0.0
        %1096 = vmatprep.subr.mxu0 0.0
        %1097 = vmatpush1.msra.mxu0 0.0
        %1098 = vmatprep.subr.mxu0 0.0
        %1099 = vmatpush1.msra.mxu0 0.0
        %1100 = vmatprep.subr.mxu0 0.0
        %1101 = vmatpush1.msra.mxu0 %v1065
        %1102 = vmatprep.subr.mxu0 0.0
        %1103 = vmatpush2.msra.mxu0 0.0
        %1104 = vmatprep.subr.mxu0 0.0
        %1105 = vmatpush2.msra.mxu0 0.0
        %1106 = vmatprep.subr.mxu0 0.0
        %1107 = vmatpush2.msra.mxu0 0.0
        %1108 = vmatprep.subr.mxu0 0.0
        %1109 = vmatpush2.msra.mxu0 0.0
        %1110 = vmatprep.subr.mxu0 0.0
        %1111 = vmatpush2.msra.mxu0 0.0
        %1112 = vmatprep.subr.mxu0 0.0
        %1113 = vmatpush2.msra.mxu0 0.0
        %1114 = vmatprep.subr.mxu0 0.0
        %1115 = vmatpush2.msra.mxu0 0.0
        %1116 = vmatprep.subr.mxu0 0.0
        %1117 = vmatpush2.msra.mxu0 0.0
        %1118 = vmatprep.subr.mxu0 0.0
        %1119 = vmatpush2.msra.mxu0 0.0
        %1120 = vmatprep.subr.mxu0 0.0
        %1121 = vmatpush2.msra.mxu0 0.0
        %1122 = vmatprep.subr.mxu0 0.0
        %1123 = vmatpush2.msra.mxu0 0.0
        %1124 = vmatprep.subr.mxu0 0.0
        %1125 = vmatpush2.msra.mxu0 0.0
        %1126 = vmatprep.subr.mxu0 0.0
        %1127 = vmatpush2.msra.mxu0 0.0
        %1128 = vmatprep.subr.mxu0 0.0
        %1129 = vmatpush2.msra.mxu0 0.0
        %1130 = vmatprep.subr.mxu0 0.0
        %1131 = vmatpush2.msra.mxu0 0.0
        %1132 = vmatprep.subr.mxu0 0.0
        %1133 = vmatpush2.msra.mxu0 0.0
        %1134 = vmatprep.mubr.f32.mxu0 0.0
        %1135 = vmatmul.mubr.f32.gmra.mxu0 %v1068
        %v1136 = vpop.f32.mrf.mxu0
        %v1137 = vadd.f32 0.0, %v1136
        %v1138 = vpop.f32.mrf.mxu0
        %1139 = vdwg.mxu0
        %v1140 = vmul.f32 %v1137, %v1062
        %1141 = vrot.lane.b32.xlu0 %v809, 112
        %v1142 = vpop.permute.xlu0 %1141
        %1143 = vrot.lane.b32.xlu0 %v812, 112
        %v1144 = vpop.permute.xlu0 %1143
        %v1145 = vsel %vm813, %v1142, 0
        %v1147 = vsel %vm813, %v1144, 0
        %1149 = vmatprep.subr.mxu0 0.0
        %1150 = vmatpush1.xpose.msra.mxu0 0.0
        %1151 = vmatprep.subr.mxu0 0.0
        %1152 = vmatpush1.xpose.msra.mxu0 0.0
        %1153 = vmatprep.subr.mxu0 0.0
        %1154 = vmatpush1.xpose.msra.mxu0 0.0
        %1155 = vmatprep.subr.mxu0 0.0
        %1156 = vmatpush1.xpose.msra.mxu0 0.0
        %1157 = vmatprep.subr.mxu0 0.0
        %1158 = vmatpush1.xpose.msra.mxu0 0.0
        %1159 = vmatprep.subr.mxu0 0.0
        %1160 = vmatpush1.xpose.msra.mxu0 0.0
        %1161 = vmatprep.subr.mxu0 0.0
        %1162 = vmatpush1.xpose.msra.mxu0 0.0
        %1163 = vmatprep.subr.mxu0 0.0
        %1164 = vmatpush1.xpose.msra.mxu0 0.0
        %1165 = vmatprep.subr.mxu0 0.0
        %1166 = vmatpush1.xpose.msra.mxu0 0.0
        %1167 = vmatprep.subr.mxu0 0.0
        %1168 = vmatpush1.xpose.msra.mxu0 0.0
        %1169 = vmatprep.subr.mxu0 0.0
        %1170 = vmatpush1.xpose.msra.mxu0 0.0
        %1171 = vmatprep.subr.mxu0 0.0
        %1172 = vmatpush1.xpose.msra.mxu0 0.0
        %1173 = vmatprep.subr.mxu0 0.0
        %1174 = vmatpush1.xpose.msra.mxu0 0.0
        %1175 = vmatprep.subr.mxu0 0.0
        %1176 = vmatpush1.xpose.msra.mxu0 0.0
        %1177 = vmatprep.subr.mxu0 0.0
        %1178 = vmatpush1.xpose.msra.mxu0 0.0
        %1179 = vmatprep.subr.mxu0 0.0
        %1180 = vmatpush1.xpose.msra.mxu0 %v1147
        %1181 = vmatprep.subr.mxu0 0.0
        %1182 = vmatpush2.xpose.msra.mxu0 0.0
        %1183 = vmatprep.subr.mxu0 0.0
        %1184 = vmatpush2.xpose.msra.mxu0 0.0
        %1185 = vmatprep.subr.mxu0 0.0
        %1186 = vmatpush2.xpose.msra.mxu0 0.0
        %1187 = vmatprep.subr.mxu0 0.0
        %1188 = vmatpush2.xpose.msra.mxu0 0.0
        %1189 = vmatprep.subr.mxu0 0.0
        %1190 = vmatpush2.xpose.msra.mxu0 0.0
        %1191 = vmatprep.subr.mxu0 0.0
        %1192 = vmatpush2.xpose.msra.mxu0 0.0
        %1193 = vmatprep.subr.mxu0 0.0
        %1194 = vmatpush2.xpose.msra.mxu0 0.0
        %1195 = vmatprep.subr.mxu0 0.0
        %1196 = vmatpush2.xpose.msra.mxu0 0.0
        %1197 = vmatprep.subr.mxu0 0.0
        %1198 = vmatpush2.xpose.msra.mxu0 0.0
        %1199 = vmatprep.subr.mxu0 0.0
        %1200 = vmatpush2.xpose.msra.mxu0 0.0
        %1201 = vmatprep.subr.mxu0 0.0
        %1202 = vmatpush2.xpose.msra.mxu0 0.0
        %1203 = vmatprep.subr.mxu0 0.0
        %1204 = vmatpush2.xpose.msra.mxu0 0.0
        %1205 = vmatprep.subr.mxu0 0.0
        %1206 = vmatpush2.xpose.msra.mxu0 0.0
        %1207 = vmatprep.subr.mxu0 0.0
        %1208 = vmatpush2.xpose.msra.mxu0 0.0
        %1209 = vmatprep.subr.mxu0 0.0
        %1210 = vmatpush2.xpose.msra.mxu0 0.0
        %1211 = vmatprep.subr.mxu0 0.0
        %1212 = vmatpush2.xpose.msra.mxu0 0.0
        %1213 = vmatprep.mubr.f32.mxu0 0.0
        %1214 = vmatmul.mubr.f32.gmra.mxu0 %v1145
        %v1215 = vpop.f32.mrf.mxu0
        %v1216 = vadd.f32 0.0, %v1215
        %v1217 = vpop.f32.mrf.mxu0
        %1218 = vdwg.mxu0
        %v1219 = vsel %vm813, %v1216, -inf
        %1220 = vmax.xlane.f32.xlu0 %v1219
        %v1221 = vpop.xlane.xlu0 %1220
        %v1222 = vsub.f32 %v1216, %v1221
        %v1223 = vmul.f32 %v1222, 1.442695
        %v1224 = vpow.pop %v1223
        %v1225 = vsel %vm813, %v1224, 0.0
        %1226 = vadd.xlane.f32.xlu0 %v1225
        %v1227 = vpop.xlane.xlu0 %1226
        %v1228 = vrcp.pop %v1227
        %1229 = vrot.lane.b32.xlu0 %v900, 112
        %v1230 = vpop.permute.xlu0 %1229
        %v1233 = vsel %vm813, %v1224, 0
        %1235 = vmatprep.subr.mxu0 0.0
        %1236 = vmatpush1.msra.mxu0 0.0
        %1237 = vmatprep.subr.mxu0 0.0
        %1238 = vmatpush1.msra.mxu0 0.0
        %1239 = vmatprep.subr.mxu0 0.0
        %1240 = vmatpush1.msra.mxu0 0.0
        %1241 = vmatprep.subr.mxu0 0.0
        %1242 = vmatpush1.msra.mxu0 0.0
        %1243 = vmatprep.subr.mxu0 0.0
        %1244 = vmatpush1.msra.mxu0 0.0
        %1245 = vmatprep.subr.mxu0 0.0
        %1246 = vmatpush1.msra.mxu0 0.0
        %1247 = vmatprep.subr.mxu0 0.0
        %1248 = vmatpush1.msra.mxu0 0.0
        %1249 = vmatprep.subr.mxu0 0.0
        %1250 = vmatpush1.msra.mxu0 0.0
        %1251 = vmatprep.subr.mxu0 0.0
        %1252 = vmatpush1.msra.mxu0 0.0
        %1253 = vmatprep.subr.mxu0 0.0
        %1254 = vmatpush1.msra.mxu0 0.0
        %1255 = vmatprep.subr.mxu0 0.0
        %1256 = vmatpush1.msra.mxu0 0.0
        %1257 = vmatprep.subr.mxu0 0.0
        %1258 = vmatpush1.msra.mxu0 0.0
        %1259 = vmatprep.subr.mxu0 0.0
        %1260 = vmatpush1.msra.mxu0 0.0
        %1261 = vmatprep.subr.mxu0 0.0
        %1262 = vmatpush1.msra.mxu0 0.0
        %1263 = vmatprep.subr.mxu0 0.0
        %1264 = vmatpush1.msra.mxu0 0.0
        %1265 = vmatprep.subr.mxu0 0.0
        %1266 = vmatpush1.msra.mxu0 %v1230
        %1267 = vmatprep.subr.mxu0 0.0
        %1268 = vmatpush2.msra.mxu0 0.0
        %1269 = vmatprep.subr.mxu0 0.0
        %1270 = vmatpush2.msra.mxu0 0.0
        %1271 = vmatprep.subr.mxu0 0.0
        %1272 = vmatpush2.msra.mxu0 0.0
        %1273 = vmatprep.subr.mxu0 0.0
        %1274 = vmatpush2.msra.mxu0 0.0
        %1275 = vmatprep.subr.mxu0 0.0
        %1276 = vmatpush2.msra.mxu0 0.0
        %1277 = vmatprep.subr.mxu0 0.0
        %1278 = vmatpush2.msra.mxu0 0.0
        %1279 = vmatprep.subr.mxu0 0.0
        %1280 = vmatpush2.msra.mxu0 0.0
        %1281 = vmatprep.subr.mxu0 0.0
        %1282 = vmatpush2.msra.mxu0 0.0
        %1283 = vmatprep.subr.mxu0 0.0
        %1284 = vmatpush2.msra.mxu0 0.0
        %1285 = vmatprep.subr.mxu0 0.0
        %1286 = vmatpush2.msra.mxu0 0.0
        %1287 = vmatprep.subr.mxu0 0.0
        %1288 = vmatpush2.msra.mxu0 0.0
        %1289 = vmatprep.subr.mxu0 0.0
        %1290 = vmatpush2.msra.mxu0 0.0
        %1291 = vmatprep.subr.mxu0 0.0
        %1292 = vmatpush2.msra.mxu0 0.0
        %1293 = vmatprep.subr.mxu0 0.0
        %1294 = vmatpush2.msra.mxu0 0.0
        %1295 = vmatprep.subr.mxu0 0.0
        %1296 = vmatpush2.msra.mxu0 0.0
        %1297 = vmatprep.subr.mxu0 0.0
        %1298 = vmatpush2.msra.mxu0 0.0
        %1299 = vmatprep.mubr.f32.mxu0 0.0
        %1300 = vmatmul.mubr.f32.gmra.mxu0 %v1233
        %v1301 = vpop.f32.mrf.mxu0
        %v1302 = vadd.f32 0.0, %v1301
        %v1303 = vpop.f32.mrf.mxu0
        %1304 = vdwg.mxu0
        %v1305 = vmul.f32 %v1302, %v1228
        %1306 = vrot.lane.b32.xlu0 %v809, 104
        %v1307 = vpop.permute.xlu0 %1306
        %1308 = vrot.lane.b32.xlu0 %v812, 104
        %v1309 = vpop.permute.xlu0 %1308
        %v1310 = vsel %vm813, %v1307, 0
        %v1312 = vsel %vm813, %v1309, 0
        %1314 = vmatprep.subr.mxu0 0.0
        %1315 = vmatpush1.xpose.msra.mxu0 0.0
        %1316 = vmatprep.subr.mxu0 0.0
        %1317 = vmatpush1.xpose.msra.mxu0 0.0
        %1318 = vmatprep.subr.mxu0 0.0
        %1319 = vmatpush1.xpose.msra.mxu0 0.0
        %1320 = vmatprep.subr.mxu0 0.0
        %1321 = vmatpush1.xpose.msra.mxu0 0.0
        %1322 = vmatprep.subr.mxu0 0.0
        %1323 = vmatpush1.xpose.msra.mxu0 0.0
        %1324 = vmatprep.subr.mxu0 0.0
        %1325 = vmatpush1.xpose.msra.mxu0 0.0
        %1326 = vmatprep.subr.mxu0 0.0
        %1327 = vmatpush1.xpose.msra.mxu0 0.0
        %1328 = vmatprep.subr.mxu0 0.0
        %1329 = vmatpush1.xpose.msra.mxu0 0.0
        %1330 = vmatprep.subr.mxu0 0.0
        %1331 = vmatpush1.xpose.msra.mxu0 0.0
        %1332 = vmatprep.subr.mxu0 0.0
        %1333 = vmatpush1.xpose.msra.mxu0 0.0
        %1334 = vmatprep.subr.mxu0 0.0
        %1335 = vmatpush1.xpose.msra.mxu0 0.0
        %1336 = vmatprep.subr.mxu0 0.0
        %1337 = vmatpush1.xpose.msra.mxu0 0.0
        %1338 = vmatprep.subr.mxu0 0.0
        %1339 = vmatpush1.xpose.msra.mxu0 0.0
        %1340 = vmatprep.subr.mxu0 0.0
        %1341 = vmatpush1.xpose.msra.mxu0 0.0
        %1342 = vmatprep.subr.mxu0 0.0
        %1343 = vmatpush1.xpose.msra.mxu0 0.0
        %1344 = vmatprep.subr.mxu0 0.0
        %1345 = vmatpush1.xpose.msra.mxu0 %v1312
        %1346 = vmatprep.subr.mxu0 0.0
        %1347 = vmatpush2.xpose.msra.mxu0 0.0
        %1348 = vmatprep.subr.mxu0 0.0
        %1349 = vmatpush2.xpose.msra.mxu0 0.0
        %1350 = vmatprep.subr.mxu0 0.0
        %1351 = vmatpush2.xpose.msra.mxu0 0.0
        %1352 = vmatprep.subr.mxu0 0.0
        %1353 = vmatpush2.xpose.msra.mxu0 0.0
        %1354 = vmatprep.subr.mxu0 0.0
        %1355 = vmatpush2.xpose.msra.mxu0 0.0
        %1356 = vmatprep.subr.mxu0 0.0
        %1357 = vmatpush2.xpose.msra.mxu0 0.0
        %1358 = vmatprep.subr.mxu0 0.0
        %1359 = vmatpush2.xpose.msra.mxu0 0.0
        %1360 = vmatprep.subr.mxu0 0.0
        %1361 = vmatpush2.xpose.msra.mxu0 0.0
        %1362 = vmatprep.subr.mxu0 0.0
        %1363 = vmatpush2.xpose.msra.mxu0 0.0
        %1364 = vmatprep.subr.mxu0 0.0
        %1365 = vmatpush2.xpose.msra.mxu0 0.0
        %1366 = vmatprep.subr.mxu0 0.0
        %1367 = vmatpush2.xpose.msra.mxu0 0.0
        %1368 = vmatprep.subr.mxu0 0.0
        %1369 = vmatpush2.xpose.msra.mxu0 0.0
        %1370 = vmatprep.subr.mxu0 0.0
        %1371 = vmatpush2.xpose.msra.mxu0 0.0
        %1372 = vmatprep.subr.mxu0 0.0
        %1373 = vmatpush2.xpose.msra.mxu0 0.0
        %1374 = vmatprep.subr.mxu0 0.0
        %1375 = vmatpush2.xpose.msra.mxu0 0.0
        %1376 = vmatprep.subr.mxu0 0.0
        %1377 = vmatpush2.xpose.msra.mxu0 0.0
        %1378 = vmatprep.mubr.f32.mxu0 0.0
        %1379 = vmatmul.mubr.f32.gmra.mxu0 %v1310
        %v1380 = vpop.f32.mrf.mxu0
        %v1381 = vadd.f32 0.0, %v1380
        %v1382 = vpop.f32.mrf.mxu0
        %1383 = vdwg.mxu0
        %v1384 = vsel %vm813, %v1381, -inf
        %1385 = vmax.xlane.f32.xlu0 %v1384
        %v1386 = vpop.xlane.xlu0 %1385
        %v1387 = vsub.f32 %v1381, %v1386
        %v1388 = vmul.f32 %v1387, 1.442695
        %v1389 = vpow.pop %v1388
        %v1390 = vsel %vm813, %v1389, 0.0
        %1391 = vadd.xlane.f32.xlu0 %v1390
        %v1392 = vpop.xlane.xlu0 %1391
        %v1393 = vrcp.pop %v1392
        %1394 = vrot.lane.b32.xlu0 %v900, 104
        %v1395 = vpop.permute.xlu0 %1394
        %v1398 = vsel %vm813, %v1389, 0
        %1400 = vmatprep.subr.mxu0 0.0
        %1401 = vmatpush1.msra.mxu0 0.0
        %1402 = vmatprep.subr.mxu0 0.0
        %1403 = vmatpush1.msra.mxu0 0.0
        %1404 = vmatprep.subr.mxu0 0.0
        %1405 = vmatpush1.msra.mxu0 0.0
        %1406 = vmatprep.subr.mxu0 0.0
        %1407 = vmatpush1.msra.mxu0 0.0
        %1408 = vmatprep.subr.mxu0 0.0
        %1409 = vmatpush1.msra.mxu0 0.0
        %1410 = vmatprep.subr.mxu0 0.0
        %1411 = vmatpush1.msra.mxu0 0.0
        %1412 = vmatprep.subr.mxu0 0.0
        %1413 = vmatpush1.msra.mxu0 0.0
        %1414 = vmatprep.subr.mxu0 0.0
        %1415 = vmatpush1.msra.mxu0 0.0
        %1416 = vmatprep.subr.mxu0 0.0
        %1417 = vmatpush1.msra.mxu0 0.0
        %1418 = vmatprep.subr.mxu0 0.0
        %1419 = vmatpush1.msra.mxu0 0.0
        %1420 = vmatprep.subr.mxu0 0.0
        %1421 = vmatpush1.msra.mxu0 0.0
        %1422 = vmatprep.subr.mxu0 0.0
        %1423 = vmatpush1.msra.mxu0 0.0
        %1424 = vmatprep.subr.mxu0 0.0
        %1425 = vmatpush1.msra.mxu0 0.0
        %1426 = vmatprep.subr.mxu0 0.0
        %1427 = vmatpush1.msra.mxu0 0.0
        %1428 = vmatprep.subr.mxu0 0.0
        %1429 = vmatpush1.msra.mxu0 0.0
        %1430 = vmatprep.subr.mxu0 0.0
        %1431 = vmatpush1.msra.mxu0 %v1395
        %1432 = vmatprep.subr.mxu0 0.0
        %1433 = vmatpush2.msra.mxu0 0.0
        %1434 = vmatprep.subr.mxu0 0.0
        %1435 = vmatpush2.msra.mxu0 0.0
        %1436 = vmatprep.subr.mxu0 0.0
        %1437 = vmatpush2.msra.mxu0 0.0
        %1438 = vmatprep.subr.mxu0 0.0
        %1439 = vmatpush2.msra.mxu0 0.0
        %1440 = vmatprep.subr.mxu0 0.0
        %1441 = vmatpush2.msra.mxu0 0.0
        %1442 = vmatprep.subr.mxu0 0.0
        %1443 = vmatpush2.msra.mxu0 0.0
        %1444 = vmatprep.subr.mxu0 0.0
        %1445 = vmatpush2.msra.mxu0 0.0
        %1446 = vmatprep.subr.mxu0 0.0
        %1447 = vmatpush2.msra.mxu0 0.0
        %1448 = vmatprep.subr.mxu0 0.0
        %1449 = vmatpush2.msra.mxu0 0.0
        %1450 = vmatprep.subr.mxu0 0.0
        %1451 = vmatpush2.msra.mxu0 0.0
        %1452 = vmatprep.subr.mxu0 0.0
        %1453 = vmatpush2.msra.mxu0 0.0
        %1454 = vmatprep.subr.mxu0 0.0
        %1455 = vmatpush2.msra.mxu0 0.0
        %1456 = vmatprep.subr.mxu0 0.0
        %1457 = vmatpush2.msra.mxu0 0.0
        %1458 = vmatprep.subr.mxu0 0.0
        %1459 = vmatpush2.msra.mxu0 0.0
        %1460 = vmatprep.subr.mxu0 0.0
        %1461 = vmatpush2.msra.mxu0 0.0
        %1462 = vmatprep.subr.mxu0 0.0
        %1463 = vmatpush2.msra.mxu0 0.0
        %1464 = vmatprep.mubr.f32.mxu0 0.0
        %1465 = vmatmul.mubr.f32.gmra.mxu0 %v1398
        %v1466 = vpop.f32.mrf.mxu0
        %v1467 = vadd.f32 0.0, %v1466
        %v1468 = vpop.f32.mrf.mxu0
        %1469 = vdwg.mxu0
        %v1470 = vmul.f32 %v1467, %v1393
        %1472 = vrot.lane.b32.xlu0 %v1140, 8
        %v1473 = vpop.permute.xlu0 %1472
        %1476 = vrot.lane.b32.xlu0 %v1305, 16
        %v1477 = vpop.permute.xlu0 %1476
        %1480 = vrot.lane.b32.xlu0 %v1470, 24
        %v1481 = vpop.permute.xlu0 %1480
        %v1483 = vsel %vm813, %v974, %v1473
        %vm1484 = vcmask 130048
        %v1485 = vsel %vm1484, %v1483, %v1477
        %vm1486 = vcmask 195584
        %v1487 = vsel %vm1486, %v1485, %v1481
        %v1488 = vld [vmem:[#allocation4] sm:$0xff]
        %v1489 = vld [vmem:[#allocation16] sm:$0xff]
        %v1490 = vld [vmem:[#allocation16 + $0x8] sm:$0xff]
        %v1491 = vld [vmem:[#allocation16 + $0x10] sm:$0xff]
        %v1492 = vld [vmem:[#allocation16 + $0x18] sm:$0xff]
        %v1494 = vsel %vm725, %v1487, 0
        %1496 = vmatprep.subr.mxu0 0.0
        %1497 = vmatpush1.msra.mxu0 0.0
        %1498 = vmatprep.subr.mxu0 0.0
        %1499 = vmatpush1.msra.mxu0 0.0
        %1500 = vmatprep.subr.mxu0 0.0
        %1501 = vmatpush1.msra.mxu0 0.0
        %1502 = vmatprep.subr.mxu0 0.0
        %1503 = vmatpush1.msra.mxu0 0.0
        %1504 = vmatprep.subr.mxu0 0.0
        %1505 = vmatpush1.msra.mxu0 0.0
        %1506 = vmatprep.subr.mxu0 0.0
        %1507 = vmatpush1.msra.mxu0 0.0
        %1508 = vmatprep.subr.mxu0 0.0
        %1509 = vmatpush1.msra.mxu0 0.0
        %1510 = vmatprep.subr.mxu0 0.0
        %1511 = vmatpush1.msra.mxu0 0.0
        %1512 = vmatprep.subr.mxu0 0.0
        %1513 = vmatpush1.msra.mxu0 0.0
        %1514 = vmatprep.subr.mxu0 0.0
        %1515 = vmatpush1.msra.mxu0 0.0
        %1516 = vmatprep.subr.mxu0 0.0
        %1517 = vmatpush1.msra.mxu0 0.0
        %1518 = vmatprep.subr.mxu0 0.0
        %1519 = vmatpush1.msra.mxu0 0.0
        %1520 = vmatprep.subr.mxu0 0.0
        %1521 = vmatpush1.msra.mxu0 %v1492
        %1522 = vmatprep.subr.mxu0 0.0
        %1523 = vmatpush1.msra.mxu0 %v1491
        %1524 = vmatprep.subr.mxu0 0.0
        %1525 = vmatpush1.msra.mxu0 %v1490
        %1526 = vmatprep.subr.mxu0 0.0
        %1527 = vmatpush1.msra.mxu0 %v1489
        %1528 = vmatprep.subr.mxu0 0.0
        %1529 = vmatpush2.msra.mxu0 0.0
        %1530 = vmatprep.subr.mxu0 0.0
        %1531 = vmatpush2.msra.mxu0 0.0
        %1532 = vmatprep.subr.mxu0 0.0
        %1533 = vmatpush2.msra.mxu0 0.0
        %1534 = vmatprep.subr.mxu0 0.0
        %1535 = vmatpush2.msra.mxu0 0.0
        %1536 = vmatprep.subr.mxu0 0.0
        %1537 = vmatpush2.msra.mxu0 0.0
        %1538 = vmatprep.subr.mxu0 0.0
        %1539 = vmatpush2.msra.mxu0 0.0
        %1540 = vmatprep.subr.mxu0 0.0
        %1541 = vmatpush2.msra.mxu0 0.0
        %1542 = vmatprep.subr.mxu0 0.0
        %1543 = vmatpush2.msra.mxu0 0.0
        %1544 = vmatprep.subr.mxu0 0.0
        %1545 = vmatpush2.msra.mxu0 0.0
        %1546 = vmatprep.subr.mxu0 0.0
        %1547 = vmatpush2.msra.mxu0 0.0
        %1548 = vmatprep.subr.mxu0 0.0
        %1549 = vmatpush2.msra.mxu0 0.0
        %1550 = vmatprep.subr.mxu0 0.0
        %1551 = vmatpush2.msra.mxu0 0.0
        %1552 = vmatprep.subr.mxu0 0.0
        %1553 = vmatpush2.msra.mxu0 0.0
        %1554 = vmatprep.subr.mxu0 0.0
        %1555 = vmatpush2.msra.mxu0 0.0
        %1556 = vmatprep.subr.mxu0 0.0
        %1557 = vmatpush2.msra.mxu0 0.0
        %1558 = vmatprep.subr.mxu0 0.0
        %1559 = vmatpush2.msra.mxu0 0.0
        %1560 = vmatprep.mubr.f32.mxu0 0.0
        %1561 = vmatmul.mubr.f32.gmra.mxu0 %v1494
        %v1562 = vpop.f32.mrf.mxu0
        %v1563 = vadd.f32 0.0, %v1562
        %v1564 = vpop.f32.mrf.mxu0
        %1565 = vdwg.mxu0
        %v1566 = vadd.f32 %v1488, %v1563
        %1567 = vst.msk [vmem:[#allocation4] sm:$0xff] %vm725, %v1566
        %v1568 = vld [vmem:[#allocation4] sm:$0xff]
        %v1569 = vld [vmem:[%s10] sm:$0x1]
        %v1571 = vlaneseq
        %v1572 = vshrl.u32 %v1571, 7
        %v1573 = vsub.s32 0, %v1572
        %v1574 = vrot.slane %v1569, %v1573
        %v1576 = vadd.f32 %v1568, %v1574
        %1577 = vst.msk [vmem:[%s547] sm:$0xff] %vm725, %v1576
        %s1578 = sand.u32 %s303, 1
        %s1579 = scalar_lea.sflag [#allocation7], %s1578
        %s1580 = sand.u32 %s303, 1
        %s1581 = smul.addr %s1580, 8
        %s1582 = scalar_lea.vmem [#allocation17], %s1581
        // Predicated region
        $region97: #{tpu_custom_call.1} parent=63 // pred_check
          %p1583 = pneg %p313
        $region98: #{tpu_custom_call.1} parent=63 // pred_check_branch
          %1585 = sbr.rel (%p1583) target = $region100
        $region99: #{tpu_custom_call.1} parent=63 // pred_region
          %s1587 = ssub.s32 128, 128
          %1588 = vsyncadd %s1579, %s1587
          %s1589 = sadd.s32 %s38, %s37
          %s1590 = smul.addr %s1589, 128
          %s1591 = scalar_lea.hbm %s11, %s1590
          %s1593 = sshll.u32 %s1582, 4
          %s1594 = int_to_ptr.vmem [resolvable:$true] %s1593
          %1596 = dma.vmem_to_hbm [thread:$0]  %s1594, 128, %s1591, %s1579
        $region100: #{tpu_custom_call.1} parent=63 // pred_fallthru
          _
      $region64: #{tpu_custom_call.1} parent=5 // pred_fallthru
        _
      %p1597 = scmp.le.s32.totalorder 2, %s28
      // Predicated region
      $region101: #{tpu_custom_call.1} parent=5 // pred_check
        %p1598 = pneg %p1597
      $region102: #{tpu_custom_call.1} parent=5 // pred_check_branch
        %1600 = sbr.rel (%p1598) target = $region104
      $region103: #{tpu_custom_call.1} parent=5 // pred_region
        %s1601 = ssub.s32 %s28, 2
        // Predicated region
        $region105: #{tpu_custom_call.1} parent=103 // pred_check
          %p1602 = pneg %p319
        $region106: #{tpu_custom_call.1} parent=103 // pred_check_branch
          %1604 = sbr.rel (%p1602) target = $region108
        $region107: #{tpu_custom_call.1} parent=103 // pred_region
          %s1605 = sand.u32 %s304, 1
          %s1606 = scalar_lea.sflag [#allocation7], %s1605
          %s1607 = sand.u32 %s304, 1
          %s1608 = smul.addr %s1607, 8
          %s1609 = scalar_lea.vmem [#allocation17], %s1608
          %1610 = dma.done %s1606, 128
        $region108: #{tpu_custom_call.1} parent=103 // pred_fallthru
          _
      $region104: #{tpu_custom_call.1} parent=5 // pred_fallthru
        _
    $region6: #{tpu_custom_call.1} parent=1 // loop_footer
      %s32 = sadd.s32 1, %s28
    $region7: #{tpu_custom_call.1} parent=1 // loop_footer_branch
      %27 = sbr.rel target = $region3
    $region8: #{tpu_custom_call.1} parent=1 // loop_exit
      _
    %1611 = vsyncpa [#allocation6], 1
    %s1612 = scalar_lea.sflag [#allocation6], 1
    %1613 = vsyncpa %s1612, 1
    %1614 = vsyncpa [#allocation9], 1
    %s1615 = scalar_lea.sflag [#allocation9], 1
    %1616 = vsyncpa %s1615, 1
    %1617 = vsyncpa [#allocation12], 1
    %1618 = vsyncpa [#allocation15], 1
    %1619 = vsyncpa [#allocation7], 1
    %s1620 = scalar_lea.sflag [#allocation7], 1
    %1621 = vsyncpa %s1620, 1

</llo_original>
